<compile_context>
chip_gen: v7x
topology: tpu7x:2x2x1
jax: 0.10.0
libtpu: 0.0.40
codegen_flags: <defaults>
</compile_context>

<pallas_src>
import jax
import jax.numpy as jnp
from jax.experimental import pallas as pl
from jax.experimental.pallas import tpu as pltpu

F_IN = 28 * 28  # 784
LAYER_DIMS = [(F_IN, 128), (128, 64), (64, 32),     # encoder
              (32, 64), (64, 128), (128, F_IN)]     # decoder


def autoencoder_kernel(
    x_ref,
    w1_ref, b1_ref, w2_ref, b2_ref, w3_ref, b3_ref,
    w4_ref, b4_ref, w5_ref, b5_ref, w6_ref, b6_ref,
    o_ref,
):
    """One batch tile (TM, 784): the whole encoder+decoder MLP on the MXU."""

    def dense(a_bf16, w_ref, b_ref):
        # bf16 operands -> MXU-native; f32 accumulate + f32 bias.
        return jnp.dot(a_bf16, w_ref[...],
                       preferred_element_type=jnp.float32) + b_ref[...]

    def relu_bf16(v_f32):
        # ReLU in f32, one cast so the next matmul's LHS is already bf16.
        return jnp.maximum(v_f32, 0.0).astype(jnp.bfloat16)

    x = x_ref[...].astype(jnp.bfloat16)                 # (TM, 784)
    # ---- encoder ----
    h = relu_bf16(dense(x, w1_ref, b1_ref))             # (TM, 128)
    h = relu_bf16(dense(h, w2_ref, b2_ref))             # (TM, 64)
    z = dense(h, w3_ref, b3_ref).astype(jnp.bfloat16)   # (TM, 32) latent
    # ---- decoder ----
    d = relu_bf16(dense(z, w4_ref, b4_ref))             # (TM, 64)
    d = relu_bf16(dense(d, w5_ref, b5_ref))             # (TM, 128)
    y = dense(d, w6_ref, b6_ref)                        # (TM, 784) f32
    o_ref[...] = jax.nn.sigmoid(y)                      # Sigmoid


def _resident_spec(arr):
    """Full-array BlockSpec, grid-invariant block index (stays in VMEM)."""
    return pl.BlockSpec(arr.shape, lambda i: (0, 0))


def _pick_tile(batch, tm_max=512):
    """Batch tile: >=2 grid tiles when batch allows (v7x has 2 TCs), capped
    at tm_max so double-buffered f32 tiles fit v5e's scoped-VMEM default."""
    tm = 128 * pl.cdiv(pl.cdiv(batch, 2), 128)
    return int(max(128, min(tm_max, tm)))


@jax.jit
def autoencoder_forward(x, bf16_params):
    """x: (B, 784) float32; bf16_params: 6 x (w bf16 (fi,fo), b f32 (1,fo))."""
    B = x.shape[0]
    tm = _pick_tile(B)
    num_tiles = pl.cdiv(B, tm)
    bp = num_tiles * tm

    # Only the batch dim is padded (zeros are inert; rows sliced off at the end).
    xp = jnp.pad(x, ((0, bp - B), (0, 0))) if bp != B else x

    (w1, b1), (w2, b2), (w3, b3), (w4, b4), (w5, b5), (w6, b6) = bf16_params
    operands = (xp,
                w1, b1, w2, b2, w3, b3,
                w4, b4, w5, b5, w6, b6)

    in_specs = [pl.BlockSpec((tm, F_IN), lambda i: (i, 0))]          # x tile
    in_specs += [_resident_spec(a) for a in operands[1:]]            # weights/biases
    out_specs = pl.BlockSpec((tm, F_IN), lambda i: (i, 0))

    flops = 2 * bp * sum(fi * fo for fi, fo in LAYER_DIMS)
    bytes_accessed = (int(xp.size) * xp.dtype.itemsize            # x in
                      + bp * F_IN * 4                             # f32 out
                      + sum(int(a.size) * a.dtype.itemsize for a in operands[1:]))
    cost = pl.CostEstimate(flops=flops,
                           transcendentals=2 * bp * F_IN,         # sigmoid ~ exp + recip
                           bytes_accessed=bytes_accessed)

    out = pl.pallas_call(
        autoencoder_kernel,
        out_shape=jax.ShapeDtypeStruct((bp, F_IN), jnp.float32),
        grid=(num_tiles,),
        in_specs=in_specs,
        out_specs=out_specs,
        compiler_params=pltpu.CompilerParams(
            dimension_semantics=("parallel",)),   # shard batch tiles across v7x's 2 TCs
        cost_estimate=cost,
    )(*operands)

    return out[:B] if bp != B else out


def prepare_params(params):
    """One-time weight prep, hoisted out of the jitted forward: bf16 weights,
    f32 biases (bias add stays in f32 inside the kernel)."""
    return tuple((w.astype(jnp.bfloat16), b) for w, b in params)


def init_linear(key, fan_in, fan_out):
    """Deterministic init mimicking PyTorch nn.Linear default (U[-1/sqrt(fan_in), +])."""
    kw, kb = jax.random.split(key)
    bound = 1.0 / jnp.sqrt(jnp.float32(fan_in))
    w = jax.random.uniform(kw, (fan_in, fan_out), jnp.float32, -bound, bound)
    b = jax.random.uniform(kb, (1, fan_out), jnp.float32, -bound, bound)
    return w, b


def make_params(key):
    keys = jax.random.split(key, len(LAYER_DIMS))
    return tuple(init_linear(k, fi, fo) for k, (fi, fo) in zip(keys, LAYER_DIMS))


def _ref_chain(x, params, cast):
    def dense(a, w, b):
        return jnp.dot(cast(a), cast(w), preferred_element_type=jnp.float32) + b
    h = jnp.maximum(dense(x, *params[0]), 0.0)
    h = jnp.maximum(dense(h, *params[1]), 0.0)
    z = dense(h, *params[2])
    d = jnp.maximum(dense(z, *params[3]), 0.0)
    d = jnp.maximum(dense(d, *params[4]), 0.0)
    return jax.nn.sigmoid(dense(d, *params[5]))


def reference_forward_bf16(x, params):
    return _ref_chain(x, params, lambda a: a.astype(jnp.bfloat16))


def reference_forward_f32(x, params):
    return _ref_chain(x, params, lambda a: a)


if __name__ == "__main__":
    key = jax.random.PRNGKey(0)
    kx, kp = jax.random.split(key)

    B = 200  # non-multiple of the 128-row tile -> exercises padding + 2-tile grid
    x = jax.random.uniform(kx, (B, F_IN), jnp.float32)
    params = make_params(kp)
    kernel_params = prepare_params(params)

    out = jax.block_until_ready(autoencoder_forward(x, kernel_params))
    assert out.shape == (B, F_IN)

    ref_bf16 = reference_forward_bf16(x, params)   # same matmul numerics as kernel
    ref_f32 = reference_forward_f32(x, params)     # faithful f32 PyTorch semantics
    assert jnp.allclose(out, ref_bf16, atol=2e-3, rtol=2e-3)
    assert jnp.allclose(out, ref_f32, atol=3e-2, rtol=3e-2)

    print("KERNEL_OK")
</pallas_src>

<mosaic_0001>
module attributes {stable_mosaic.version = 11 : i64} {
  func.func @autoencoder_kernel(%arg0: i32, %arg1: memref<128x784xf32, #tpu.memory_space<vmem>>, %arg2: memref<784x128xbf16, #tpu.memory_space<vmem>>, %arg3: memref<1x128xf32, #tpu.memory_space<vmem>>, %arg4: memref<128x64xbf16, #tpu.memory_space<vmem>>, %arg5: memref<1x64xf32, #tpu.memory_space<vmem>>, %arg6: memref<64x32xbf16, #tpu.memory_space<vmem>>, %arg7: memref<1x32xf32, #tpu.memory_space<vmem>>, %arg8: memref<32x64xbf16, #tpu.memory_space<vmem>>, %arg9: memref<1x64xf32, #tpu.memory_space<vmem>>, %arg10: memref<64x128xbf16, #tpu.memory_space<vmem>>, %arg11: memref<1x128xf32, #tpu.memory_space<vmem>>, %arg12: memref<128x784xbf16, #tpu.memory_space<vmem>>, %arg13: memref<1x784xf32, #tpu.memory_space<vmem>>, %arg14: memref<128x784xf32, #tpu.memory_space<vmem>>) attributes {dimension_semantics = [#tpu.dimension_semantics<parallel>], iteration_bounds = array<i64: 2>, scalar_prefetch = 0 : i64, scratch_operands = 0 : i64, tpu.core_type = #tpu.core_type<tc>, window_params = [{transform_indices = @transform_0, window_bounds = array<i64: 128, 784>}, {pipeline_mode = #tpu.pipeline_mode<synchronous>, transform_indices = @transform_1, window_bounds = array<i64: 784, 128>}, {pipeline_mode = #tpu.pipeline_mode<synchronous>, transform_indices = @transform_2, window_bounds = array<i64: 1, 128>}, {pipeline_mode = #tpu.pipeline_mode<synchronous>, transform_indices = @transform_3, window_bounds = array<i64: 128, 64>}, {pipeline_mode = #tpu.pipeline_mode<synchronous>, transform_indices = @transform_4, window_bounds = array<i64: 1, 64>}, {pipeline_mode = #tpu.pipeline_mode<synchronous>, transform_indices = @transform_5, window_bounds = array<i64: 64, 32>}, {pipeline_mode = #tpu.pipeline_mode<synchronous>, transform_indices = @transform_6, window_bounds = array<i64: 1, 32>}, {pipeline_mode = #tpu.pipeline_mode<synchronous>, transform_indices = @transform_7, window_bounds = array<i64: 32, 64>}, {pipeline_mode = #tpu.pipeline_mode<synchronous>, transform_indices = @transform_8, window_bounds = array<i64: 1, 64>}, {pipeline_mode = #tpu.pipeline_mode<synchronous>, transform_indices = @transform_9, window_bounds = array<i64: 64, 128>}, {pipeline_mode = #tpu.pipeline_mode<synchronous>, transform_indices = @transform_10, window_bounds = array<i64: 1, 128>}, {pipeline_mode = #tpu.pipeline_mode<synchronous>, transform_indices = @transform_11, window_bounds = array<i64: 128, 784>}, {pipeline_mode = #tpu.pipeline_mode<synchronous>, transform_indices = @transform_12, window_bounds = array<i64: 1, 784>}, {transform_indices = @transform_13, window_bounds = array<i64: 128, 784>}]} {
    %c0 = arith.constant 0 : index
    %c0_0 = arith.constant 0 : index
    %0 = vector.load %arg1[%c0, %c0_0] : memref<128x784xf32, #tpu.memory_space<vmem>>, vector<128x784xf32>
    %1 = arith.truncf %0 : vector<128x784xf32> to vector<128x784xbf16>
    %c0_1 = arith.constant 0 : index
    %c0_2 = arith.constant 0 : index
    %2 = vector.load %arg2[%c0_1, %c0_2] : memref<784x128xbf16, #tpu.memory_space<vmem>>, vector<784x128xbf16>
    %cst = arith.constant dense<0.000000e+00> : vector<128x128xf32>
    %3 = tpu.matmul %1, %2, %cst {dimension_numbers = #tpu.dot_dimension_numbers<[1], [0], [0], [1], [0, 0, 1, 1], [], []>} : vector<128x784xbf16>, vector<784x128xbf16>, vector<128x128xf32> -> vector<128x128xf32>
    %c0_3 = arith.constant 0 : index
    %c0_4 = arith.constant 0 : index
    %4 = vector.load %arg3[%c0_3, %c0_4] : memref<1x128xf32, #tpu.memory_space<vmem>>, vector<1x128xf32>
    %5 = vector.broadcast %4 : vector<1x128xf32> to vector<128x128xf32>
    %6 = arith.addf %3, %5 : vector<128x128xf32>
    %cst_5 = arith.constant 0.000000e+00 : f32
    %7 = vector.broadcast %cst_5 : f32 to vector<128x128xf32>
    %8 = arith.maximumf %6, %7 : vector<128x128xf32>
    %9 = arith.truncf %8 : vector<128x128xf32> to vector<128x128xbf16>
    %c0_6 = arith.constant 0 : index
    %c0_7 = arith.constant 0 : index
    %10 = vector.load %arg4[%c0_6, %c0_7] : memref<128x64xbf16, #tpu.memory_space<vmem>>, vector<128x64xbf16>
    %cst_8 = arith.constant dense<0.000000e+00> : vector<128x64xf32>
    %11 = tpu.matmul %9, %10, %cst_8 {dimension_numbers = #tpu.dot_dimension_numbers<[1], [0], [0], [1], [0, 0, 1, 1], [], []>} : vector<128x128xbf16>, vector<128x64xbf16>, vector<128x64xf32> -> vector<128x64xf32>
    %c0_9 = arith.constant 0 : index
    %c0_10 = arith.constant 0 : index
    %12 = vector.load %arg5[%c0_9, %c0_10] : memref<1x64xf32, #tpu.memory_space<vmem>>, vector<1x64xf32>
    %13 = vector.broadcast %12 : vector<1x64xf32> to vector<128x64xf32>
    %14 = arith.addf %11, %13 : vector<128x64xf32>
    %cst_11 = arith.constant 0.000000e+00 : f32
    %15 = vector.broadcast %cst_11 : f32 to vector<128x64xf32>
    %16 = arith.maximumf %14, %15 : vector<128x64xf32>
    %17 = arith.truncf %16 : vector<128x64xf32> to vector<128x64xbf16>
    %c0_12 = arith.constant 0 : index
    %c0_13 = arith.constant 0 : index
    %18 = vector.load %arg6[%c0_12, %c0_13] : memref<64x32xbf16, #tpu.memory_space<vmem>>, vector<64x32xbf16>
    %cst_14 = arith.constant dense<0.000000e+00> : vector<128x32xf32>
    %19 = tpu.matmul %17, %18, %cst_14 {dimension_numbers = #tpu.dot_dimension_numbers<[1], [0], [0], [1], [0, 0, 1, 1], [], []>} : vector<128x64xbf16>, vector<64x32xbf16>, vector<128x32xf32> -> vector<128x32xf32>
    %c0_15 = arith.constant 0 : index
    %c0_16 = arith.constant 0 : index
    %20 = vector.load %arg7[%c0_15, %c0_16] : memref<1x32xf32, #tpu.memory_space<vmem>>, vector<1x32xf32>
    %21 = vector.broadcast %20 : vector<1x32xf32> to vector<128x32xf32>
    %22 = arith.addf %19, %21 : vector<128x32xf32>
    %23 = arith.truncf %22 : vector<128x32xf32> to vector<128x32xbf16>
    %c0_17 = arith.constant 0 : index
    %c0_18 = arith.constant 0 : index
    %24 = vector.load %arg8[%c0_17, %c0_18] : memref<32x64xbf16, #tpu.memory_space<vmem>>, vector<32x64xbf16>
    %cst_19 = arith.constant dense<0.000000e+00> : vector<128x64xf32>
    %25 = tpu.matmul %23, %24, %cst_19 {dimension_numbers = #tpu.dot_dimension_numbers<[1], [0], [0], [1], [0, 0, 1, 1], [], []>} : vector<128x32xbf16>, vector<32x64xbf16>, vector<128x64xf32> -> vector<128x64xf32>
    %c0_20 = arith.constant 0 : index
    %c0_21 = arith.constant 0 : index
    %26 = vector.load %arg9[%c0_20, %c0_21] : memref<1x64xf32, #tpu.memory_space<vmem>>, vector<1x64xf32>
    %27 = vector.broadcast %26 : vector<1x64xf32> to vector<128x64xf32>
    %28 = arith.addf %25, %27 : vector<128x64xf32>
    %cst_22 = arith.constant 0.000000e+00 : f32
    %29 = vector.broadcast %cst_22 : f32 to vector<128x64xf32>
    %30 = arith.maximumf %28, %29 : vector<128x64xf32>
    %31 = arith.truncf %30 : vector<128x64xf32> to vector<128x64xbf16>
    %c0_23 = arith.constant 0 : index
    %c0_24 = arith.constant 0 : index
    %32 = vector.load %arg10[%c0_23, %c0_24] : memref<64x128xbf16, #tpu.memory_space<vmem>>, vector<64x128xbf16>
    %cst_25 = arith.constant dense<0.000000e+00> : vector<128x128xf32>
    %33 = tpu.matmul %31, %32, %cst_25 {dimension_numbers = #tpu.dot_dimension_numbers<[1], [0], [0], [1], [0, 0, 1, 1], [], []>} : vector<128x64xbf16>, vector<64x128xbf16>, vector<128x128xf32> -> vector<128x128xf32>
    %c0_26 = arith.constant 0 : index
    %c0_27 = arith.constant 0 : index
    %34 = vector.load %arg11[%c0_26, %c0_27] : memref<1x128xf32, #tpu.memory_space<vmem>>, vector<1x128xf32>
    %35 = vector.broadcast %34 : vector<1x128xf32> to vector<128x128xf32>
    %36 = arith.addf %33, %35 : vector<128x128xf32>
    %cst_28 = arith.constant 0.000000e+00 : f32
    %37 = vector.broadcast %cst_28 : f32 to vector<128x128xf32>
    %38 = arith.maximumf %36, %37 : vector<128x128xf32>
    %39 = arith.truncf %38 : vector<128x128xf32> to vector<128x128xbf16>
    %c0_29 = arith.constant 0 : index
    %c0_30 = arith.constant 0 : index
    %40 = vector.load %arg12[%c0_29, %c0_30] : memref<128x784xbf16, #tpu.memory_space<vmem>>, vector<128x784xbf16>
    %cst_31 = arith.constant dense<0.000000e+00> : vector<128x784xf32>
    %41 = tpu.matmul %39, %40, %cst_31 {dimension_numbers = #tpu.dot_dimension_numbers<[1], [0], [0], [1], [0, 0, 1, 1], [], []>} : vector<128x128xbf16>, vector<128x784xbf16>, vector<128x784xf32> -> vector<128x784xf32>
    %c0_32 = arith.constant 0 : index
    %c0_33 = arith.constant 0 : index
    %42 = vector.load %arg13[%c0_32, %c0_33] : memref<1x784xf32, #tpu.memory_space<vmem>>, vector<1x784xf32>
    %43 = vector.broadcast %42 : vector<1x784xf32> to vector<128x784xf32>
    %44 = arith.addf %41, %43 : vector<128x784xf32>
    %45 = arith.negf %44 : vector<128x784xf32>
    %46 = math.exp %45 : vector<128x784xf32>
    %cst_34 = arith.constant 1.000000e+00 : f32
    %47 = vector.broadcast %cst_34 : f32 to vector<128x784xf32>
    %48 = arith.addf %47, %46 : vector<128x784xf32>
    %49 = arith.divf %47, %48 : vector<128x784xf32>
    %c0_35 = arith.constant 0 : index
    %c0_36 = arith.constant 0 : index
    %50 = vector.load %arg14[%c0_35, %c0_36] : memref<128x784xf32, #tpu.memory_space<vmem>>, vector<128x784xf32>
    tpu.vector_store %arg14[%c0_35, %c0_36], %49 {strides = array<i32>} : memref<128x784xf32, #tpu.memory_space<vmem>>, vector<128x784xf32>,
    return
  }
  func.func @transform_0(%arg0: i32) -> (i32, i32) {
    %c0_i32 = arith.constant 0 : i32
    %c0_i32_0 = arith.constant 0 : i32
    return %arg0, %c0_i32 : i32, i32
  }
  func.func @transform_1(%arg0: i32) -> (i32, i32) {
    %c0_i32 = arith.constant 0 : i32
    %c0_i32_0 = arith.constant 0 : i32
    %c0_i32_1 = arith.constant 0 : i32
    return %c0_i32, %c0_i32_0 : i32, i32
  }
  func.func @transform_2(%arg0: i32) -> (i32, i32) {
    %c0_i32 = arith.constant 0 : i32
    %c0_i32_0 = arith.constant 0 : i32
    %c0_i32_1 = arith.constant 0 : i32
    return %c0_i32, %c0_i32_0 : i32, i32
  }
  func.func @transform_3(%arg0: i32) -> (i32, i32) {
    %c0_i32 = arith.constant 0 : i32
    %c0_i32_0 = arith.constant 0 : i32
    %c0_i32_1 = arith.constant 0 : i32
    return %c0_i32, %c0_i32_0 : i32, i32
  }
  func.func @transform_4(%arg0: i32) -> (i32, i32) {
    %c0_i32 = arith.constant 0 : i32
    %c0_i32_0 = arith.constant 0 : i32
    %c0_i32_1 = arith.constant 0 : i32
    return %c0_i32, %c0_i32_0 : i32, i32
  }
  func.func @transform_5(%arg0: i32) -> (i32, i32) {
    %c0_i32 = arith.constant 0 : i32
    %c0_i32_0 = arith.constant 0 : i32
    %c0_i32_1 = arith.constant 0 : i32
    return %c0_i32, %c0_i32_0 : i32, i32
  }
  func.func @transform_6(%arg0: i32) -> (i32, i32) {
    %c0_i32 = arith.constant 0 : i32
    %c0_i32_0 = arith.constant 0 : i32
    %c0_i32_1 = arith.constant 0 : i32
    return %c0_i32, %c0_i32_0 : i32, i32
  }
  func.func @transform_7(%arg0: i32) -> (i32, i32) {
    %c0_i32 = arith.constant 0 : i32
    %c0_i32_0 = arith.constant 0 : i32
    %c0_i32_1 = arith.constant 0 : i32
    return %c0_i32, %c0_i32_0 : i32, i32
  }
  func.func @transform_8(%arg0: i32) -> (i32, i32) {
    %c0_i32 = arith.constant 0 : i32
    %c0_i32_0 = arith.constant 0 : i32
    %c0_i32_1 = arith.constant 0 : i32
    return %c0_i32, %c0_i32_0 : i32, i32
  }
  func.func @transform_9(%arg0: i32) -> (i32, i32) {
    %c0_i32 = arith.constant 0 : i32
    %c0_i32_0 = arith.constant 0 : i32
    %c0_i32_1 = arith.constant 0 : i32
    return %c0_i32, %c0_i32_0 : i32, i32
  }
  func.func @transform_10(%arg0: i32) -> (i32, i32) {
    %c0_i32 = arith.constant 0 : i32
    %c0_i32_0 = arith.constant 0 : i32
    %c0_i32_1 = arith.constant 0 : i32
    return %c0_i32, %c0_i32_0 : i32, i32
  }
  func.func @transform_11(%arg0: i32) -> (i32, i32) {
    %c0_i32 = arith.constant 0 : i32
    %c0_i32_0 = arith.constant 0 : i32
    %c0_i32_1 = arith.constant 0 : i32
    return %c0_i32, %c0_i32_0 : i32, i32
  }
  func.func @transform_12(%arg0: i32) -> (i32, i32) {
    %c0_i32 = arith.constant 0 : i32
    %c0_i32_0 = arith.constant 0 : i32
    %c0_i32_1 = arith.constant 0 : i32
    return %c0_i32, %c0_i32_0 : i32, i32
  }
  func.func @transform_13(%arg0: i32) -> (i32, i32) {
    %c0_i32 = arith.constant 0 : i32
    %c0_i32_0 = arith.constant 0 : i32
    return %arg0, %c0_i32 : i32, i32
  }
}

</mosaic_0001>

<llo_original>
// kernel: autoencoder_forward.1
$region0: #{autoencoder_forward.1}
  #allocation0 [shape = 'u32[]', space=smem, size = 0x4, offset = 0x4, fixed_abs, tag = 'smem constant byte address 0x4 - core index']
  #allocation1 [shape = 'u32[144,128]{1,0:T(1,128)}', space=vmem, size = 0x12000, scoped, tag = 'internal scratch']
  %s0 = inlined_call_operand.vmem [shape: f32[256,784], index: 0, kind: input, shape index: {}]
  %s1 = inlined_call_operand.vmem [shape: bf16[784,128], index: 1, kind: input, shape index: {}]
  %s2 = inlined_call_operand.vmem [shape: f32[1,128], index: 2, kind: input, shape index: {}]
  %s3 = inlined_call_operand.vmem [shape: bf16[128,64], index: 3, kind: input, shape index: {}]
  %s4 = inlined_call_operand.vmem [shape: f32[1,64], index: 4, kind: input, shape index: {}]
  %s5 = inlined_call_operand.vmem [shape: bf16[64,32], index: 5, kind: input, shape index: {}]
  %s6 = inlined_call_operand.vmem [shape: f32[1,32], index: 6, kind: input, shape index: {}]
  %s7 = inlined_call_operand.vmem [shape: bf16[32,64], index: 7, kind: input, shape index: {}]
  %s8 = inlined_call_operand.vmem [shape: f32[1,64], index: 8, kind: input, shape index: {}]
  %s9 = inlined_call_operand.vmem [shape: bf16[64,128], index: 9, kind: input, shape index: {}]
  %s10 = inlined_call_operand.vmem [shape: f32[1,128], index: 10, kind: input, shape index: {}]
  %s11 = inlined_call_operand.vmem [shape: bf16[128,784], index: 11, kind: input, shape index: {}]
  %s12 = inlined_call_operand.vmem [shape: f32[1,784], index: 12, kind: input, shape index: {}]
  %s13 = inlined_call_operand.vmem [shape: f32[256,784], index: 13, kind: output, shape index: {}]
  %s14 = sld [smem:[#allocation0]]
  $region85: #{autoencoder_forward.1} parent=0
    _
  %s16 = ssub.s32 1, %s14
  %s17 = scalar_select 0, %s16, %s14
  loop: start=0, step=1, limit=4
  $region2: #{autoencoder_forward.1} parent=0 // loop_pre_header
    _
  $region3: #{autoencoder_forward.1} parent=0 // loop_header
    %s19 = sphi 0, %s23
    %p20 = scmp.ge.s32.totalorder %s19, 4
    %s29 = sphi 0, %s31
    %s32 = sphi 0, %s29
    %s33 = sphi 0, %s32
    %s49 = sphi 0, %s33
    %s53 = sphi 0, %s53
    %s55 = sphi 0, %s53
    %s56 = sphi 0, %s55
    %s70 = sphi 0, %s56
    %s74 = sphi 0, %s74
    %s76 = sphi 0, %s74
    %s77 = sphi 0, %s76
    %s91 = sphi 0, %s77
    %s95 = sphi 0, %s95
    %s97 = sphi 0, %s95
    %s98 = sphi 0, %s97
    %s112 = sphi 0, %s98
    %s116 = sphi 0, %s116
    %s118 = sphi 0, %s116
    %s119 = sphi 0, %s118
    %s133 = sphi 0, %s119
    %s137 = sphi 0, %s137
    %s139 = sphi 0, %s137
    %s140 = sphi 0, %s139
    %s154 = sphi 0, %s140
    %s158 = sphi 0, %s158
    %s160 = sphi 0, %s158
    %s161 = sphi 0, %s160
    %s175 = sphi 0, %s161
    %s179 = sphi 0, %s179
    %s181 = sphi 0, %s179
    %s182 = sphi 0, %s181
    %s196 = sphi 0, %s182
    %s200 = sphi 0, %s200
    %s202 = sphi 0, %s200
    %s203 = sphi 0, %s202
    %s217 = sphi 0, %s203
    %s221 = sphi 0, %s221
    %s223 = sphi 0, %s221
    %s224 = sphi 0, %s223
    %s238 = sphi 0, %s224
    %s242 = sphi 0, %s242
    %s244 = sphi 0, %s242
    %s245 = sphi 0, %s244
    %s259 = sphi 0, %s245
    %s263 = sphi 0, %s263
    %s265 = sphi 0, %s263
    %s266 = sphi 0, %s265
    %s280 = sphi 0, %s266
    %s284 = sphi 0, %s284
    %s286 = sphi 0, %s284
    %s287 = sphi 0, %s286
    %s301 = sphi 0, %s287
    %s307 = sphi 0, %s309
    %s310 = sphi 0, %s307
    %s311 = sphi 0, %s310
    %s327 = sphi 0, %s311
  $region4: #{autoencoder_forward.1} parent=0 // loop_header_branch
    %22 = sbr.rel (%p20) target = $region8
  $region5: #{autoencoder_forward.1} parent=0 // loop_body
    %s24 = ssub.s32 %s19, 1
    %s25 = ssub.s32 %s19, 2
    %s26 = sadd.s32 %s19, 1
    %s27 = ssub.s32 %s19, %s26
    %p28 = scmp.eq.s32.totalorder %s27, 0
    %s30 = sadd.s32 %s29, 1
    %s31 = scalar_select %p28, %s29, %s30
    %p34 = pneg %p28
    %p35 = scmp.eq.s32.totalorder %s19, 1
    %p36 = por %p34, %p35
    %p37 = scmp.ne.s32.totalorder %s29, %s32
    %p38 = scmp.eq.s32.totalorder %s19, 0
    %p39 = por %p37, %p38
    %p40 = scmp.ne.s32.totalorder %s29, %s32
    %p41 = scmp.eq.s32.totalorder %s24, 1
    %p42 = por %p40, %p41
    %p43 = scmp.ne.s32.totalorder %s32, %s33
    %p44 = scmp.eq.s32.totalorder %s24, 0
    %p45 = por %p43, %p44
    %p46 = scmp.ne.s32.totalorder %s32, %s33
    %p47 = scmp.eq.s32.totalorder %s25, 1
    %p48 = por %p46, %p47
    %p50 = scmp.ne.s32.totalorder %s33, %s49
    %p51 = scmp.eq.s32.totalorder %s25, 0
    %p52 = por %p50, %p51
    %s54 = sadd.s32 %s53, 1
    %p57 = scmp.eq.s32.totalorder %s19, 1
    %p58 = scmp.ne.s32.totalorder %s53, %s55
    %p59 = scmp.eq.s32.totalorder %s19, 0
    %p60 = por %p58, %p59
    %p61 = scmp.ne.s32.totalorder %s53, %s55
    %p62 = scmp.eq.s32.totalorder %s24, 1
    %p63 = por %p61, %p62
    %p64 = scmp.ne.s32.totalorder %s55, %s56
    %p65 = scmp.eq.s32.totalorder %s24, 0
    %p66 = por %p64, %p65
    %p67 = scmp.ne.s32.totalorder %s55, %s56
    %p68 = scmp.eq.s32.totalorder %s25, 1
    %p69 = por %p67, %p68
    %p71 = scmp.ne.s32.totalorder %s56, %s70
    %p72 = scmp.eq.s32.totalorder %s25, 0
    %p73 = por %p71, %p72
    %s75 = sadd.s32 %s74, 1
    %p78 = scmp.eq.s32.totalorder %s19, 1
    %p79 = scmp.ne.s32.totalorder %s74, %s76
    %p80 = scmp.eq.s32.totalorder %s19, 0
    %p81 = por %p79, %p80
    %p82 = scmp.ne.s32.totalorder %s74, %s76
    %p83 = scmp.eq.s32.totalorder %s24, 1
    %p84 = por %p82, %p83
    %p85 = scmp.ne.s32.totalorder %s76, %s77
    %p86 = scmp.eq.s32.totalorder %s24, 0
    %p87 = por %p85, %p86
    %p88 = scmp.ne.s32.totalorder %s76, %s77
    %p89 = scmp.eq.s32.totalorder %s25, 1
    %p90 = por %p88, %p89
    %p92 = scmp.ne.s32.totalorder %s77, %s91
    %p93 = scmp.eq.s32.totalorder %s25, 0
    %p94 = por %p92, %p93
    %s96 = sadd.s32 %s95, 1
    %p99 = scmp.eq.s32.totalorder %s19, 1
    %p100 = scmp.ne.s32.totalorder %s95, %s97
    %p101 = scmp.eq.s32.totalorder %s19, 0
    %p102 = por %p100, %p101
    %p103 = scmp.ne.s32.totalorder %s95, %s97
    %p104 = scmp.eq.s32.totalorder %s24, 1
    %p105 = por %p103, %p104
    %p106 = scmp.ne.s32.totalorder %s97, %s98
    %p107 = scmp.eq.s32.totalorder %s24, 0
    %p108 = por %p106, %p107
    %p109 = scmp.ne.s32.totalorder %s97, %s98
    %p110 = scmp.eq.s32.totalorder %s25, 1
    %p111 = por %p109, %p110
    %p113 = scmp.ne.s32.totalorder %s98, %s112
    %p114 = scmp.eq.s32.totalorder %s25, 0
    %p115 = por %p113, %p114
    %s117 = sadd.s32 %s116, 1
    %p120 = scmp.eq.s32.totalorder %s19, 1
    %p121 = scmp.ne.s32.totalorder %s116, %s118
    %p122 = scmp.eq.s32.totalorder %s19, 0
    %p123 = por %p121, %p122
    %p124 = scmp.ne.s32.totalorder %s116, %s118
    %p125 = scmp.eq.s32.totalorder %s24, 1
    %p126 = por %p124, %p125
    %p127 = scmp.ne.s32.totalorder %s118, %s119
    %p128 = scmp.eq.s32.totalorder %s24, 0
    %p129 = por %p127, %p128
    %p130 = scmp.ne.s32.totalorder %s118, %s119
    %p131 = scmp.eq.s32.totalorder %s25, 1
    %p132 = por %p130, %p131
    %p134 = scmp.ne.s32.totalorder %s119, %s133
    %p135 = scmp.eq.s32.totalorder %s25, 0
    %p136 = por %p134, %p135
    %s138 = sadd.s32 %s137, 1
    %p141 = scmp.eq.s32.totalorder %s19, 1
    %p142 = scmp.ne.s32.totalorder %s137, %s139
    %p143 = scmp.eq.s32.totalorder %s19, 0
    %p144 = por %p142, %p143
    %p145 = scmp.ne.s32.totalorder %s137, %s139
    %p146 = scmp.eq.s32.totalorder %s24, 1
    %p147 = por %p145, %p146
    %p148 = scmp.ne.s32.totalorder %s139, %s140
    %p149 = scmp.eq.s32.totalorder %s24, 0
    %p150 = por %p148, %p149
    %p151 = scmp.ne.s32.totalorder %s139, %s140
    %p152 = scmp.eq.s32.totalorder %s25, 1
    %p153 = por %p151, %p152
    %p155 = scmp.ne.s32.totalorder %s140, %s154
    %p156 = scmp.eq.s32.totalorder %s25, 0
    %p157 = por %p155, %p156
    %s159 = sadd.s32 %s158, 1
    %p162 = scmp.eq.s32.totalorder %s19, 1
    %p163 = scmp.ne.s32.totalorder %s158, %s160
    %p164 = scmp.eq.s32.totalorder %s19, 0
    %p165 = por %p163, %p164
    %p166 = scmp.ne.s32.totalorder %s158, %s160
    %p167 = scmp.eq.s32.totalorder %s24, 1
    %p168 = por %p166, %p167
    %p169 = scmp.ne.s32.totalorder %s160, %s161
    %p170 = scmp.eq.s32.totalorder %s24, 0
    %p171 = por %p169, %p170
    %p172 = scmp.ne.s32.totalorder %s160, %s161
    %p173 = scmp.eq.s32.totalorder %s25, 1
    %p174 = por %p172, %p173
    %p176 = scmp.ne.s32.totalorder %s161, %s175
    %p177 = scmp.eq.s32.totalorder %s25, 0
    %p178 = por %p176, %p177
    %s180 = sadd.s32 %s179, 1
    %p183 = scmp.eq.s32.totalorder %s19, 1
    %p184 = scmp.ne.s32.totalorder %s179, %s181
    %p185 = scmp.eq.s32.totalorder %s19, 0
    %p186 = por %p184, %p185
    %p187 = scmp.ne.s32.totalorder %s179, %s181
    %p188 = scmp.eq.s32.totalorder %s24, 1
    %p189 = por %p187, %p188
    %p190 = scmp.ne.s32.totalorder %s181, %s182
    %p191 = scmp.eq.s32.totalorder %s24, 0
    %p192 = por %p190, %p191
    %p193 = scmp.ne.s32.totalorder %s181, %s182
    %p194 = scmp.eq.s32.totalorder %s25, 1
    %p195 = por %p193, %p194
    %p197 = scmp.ne.s32.totalorder %s182, %s196
    %p198 = scmp.eq.s32.totalorder %s25, 0
    %p199 = por %p197, %p198
    %s201 = sadd.s32 %s200, 1
    %p204 = scmp.eq.s32.totalorder %s19, 1
    %p205 = scmp.ne.s32.totalorder %s200, %s202
    %p206 = scmp.eq.s32.totalorder %s19, 0
    %p207 = por %p205, %p206
    %p208 = scmp.ne.s32.totalorder %s200, %s202
    %p209 = scmp.eq.s32.totalorder %s24, 1
    %p210 = por %p208, %p209
    %p211 = scmp.ne.s32.totalorder %s202, %s203
    %p212 = scmp.eq.s32.totalorder %s24, 0
    %p213 = por %p211, %p212
    %p214 = scmp.ne.s32.totalorder %s202, %s203
    %p215 = scmp.eq.s32.totalorder %s25, 1
    %p216 = por %p214, %p215
    %p218 = scmp.ne.s32.totalorder %s203, %s217
    %p219 = scmp.eq.s32.totalorder %s25, 0
    %p220 = por %p218, %p219
    %s222 = sadd.s32 %s221, 1
    %p225 = scmp.eq.s32.totalorder %s19, 1
    %p226 = scmp.ne.s32.totalorder %s221, %s223
    %p227 = scmp.eq.s32.totalorder %s19, 0
    %p228 = por %p226, %p227
    %p229 = scmp.ne.s32.totalorder %s221, %s223
    %p230 = scmp.eq.s32.totalorder %s24, 1
    %p231 = por %p229, %p230
    %p232 = scmp.ne.s32.totalorder %s223, %s224
    %p233 = scmp.eq.s32.totalorder %s24, 0
    %p234 = por %p232, %p233
    %p235 = scmp.ne.s32.totalorder %s223, %s224
    %p236 = scmp.eq.s32.totalorder %s25, 1
    %p237 = por %p235, %p236
    %p239 = scmp.ne.s32.totalorder %s224, %s238
    %p240 = scmp.eq.s32.totalorder %s25, 0
    %p241 = por %p239, %p240
    %s243 = sadd.s32 %s242, 1
    %p246 = scmp.eq.s32.totalorder %s19, 1
    %p247 = scmp.ne.s32.totalorder %s242, %s244
    %p248 = scmp.eq.s32.totalorder %s19, 0
    %p249 = por %p247, %p248
    %p250 = scmp.ne.s32.totalorder %s242, %s244
    %p251 = scmp.eq.s32.totalorder %s24, 1
    %p252 = por %p250, %p251
    %p253 = scmp.ne.s32.totalorder %s244, %s245
    %p254 = scmp.eq.s32.totalorder %s24, 0
    %p255 = por %p253, %p254
    %p256 = scmp.ne.s32.totalorder %s244, %s245
    %p257 = scmp.eq.s32.totalorder %s25, 1
    %p258 = por %p256, %p257
    %p260 = scmp.ne.s32.totalorder %s245, %s259
    %p261 = scmp.eq.s32.totalorder %s25, 0
    %p262 = por %p260, %p261
    %s264 = sadd.s32 %s263, 1
    %p267 = scmp.eq.s32.totalorder %s19, 1
    %p268 = scmp.ne.s32.totalorder %s263, %s265
    %p269 = scmp.eq.s32.totalorder %s19, 0
    %p270 = por %p268, %p269
    %p271 = scmp.ne.s32.totalorder %s263, %s265
    %p272 = scmp.eq.s32.totalorder %s24, 1
    %p273 = por %p271, %p272
    %p274 = scmp.ne.s32.totalorder %s265, %s266
    %p275 = scmp.eq.s32.totalorder %s24, 0
    %p276 = por %p274, %p275
    %p277 = scmp.ne.s32.totalorder %s265, %s266
    %p278 = scmp.eq.s32.totalorder %s25, 1
    %p279 = por %p277, %p278
    %p281 = scmp.ne.s32.totalorder %s266, %s280
    %p282 = scmp.eq.s32.totalorder %s25, 0
    %p283 = por %p281, %p282
    %s285 = sadd.s32 %s284, 1
    %p288 = scmp.eq.s32.totalorder %s19, 1
    %p289 = scmp.ne.s32.totalorder %s284, %s286
    %p290 = scmp.eq.s32.totalorder %s19, 0
    %p291 = por %p289, %p290
    %p292 = scmp.ne.s32.totalorder %s284, %s286
    %p293 = scmp.eq.s32.totalorder %s24, 1
    %p294 = por %p292, %p293
    %p295 = scmp.ne.s32.totalorder %s286, %s287
    %p296 = scmp.eq.s32.totalorder %s24, 0
    %p297 = por %p295, %p296
    %p298 = scmp.ne.s32.totalorder %s286, %s287
    %p299 = scmp.eq.s32.totalorder %s25, 1
    %p300 = por %p298, %p299
    %p302 = scmp.ne.s32.totalorder %s287, %s301
    %p303 = scmp.eq.s32.totalorder %s25, 0
    %p304 = por %p302, %p303
    %s305 = ssub.s32 %s19, %s26
    %p306 = scmp.eq.s32.totalorder %s305, 0
    %s308 = sadd.s32 %s307, 1
    %s309 = scalar_select %p306, %s307, %s308
    %p312 = pneg %p306
    %p313 = scmp.eq.s32.totalorder %s19, 1
    %p314 = por %p312, %p313
    %p315 = scmp.ne.s32.totalorder %s307, %s310
    %p316 = scmp.eq.s32.totalorder %s19, 0
    %p317 = por %p315, %p316
    %p318 = scmp.ne.s32.totalorder %s307, %s310
    %p319 = scmp.eq.s32.totalorder %s24, 1
    %p320 = por %p318, %p319
    %p321 = scmp.ne.s32.totalorder %s310, %s311
    %p322 = scmp.eq.s32.totalorder %s24, 0
    %p323 = por %p321, %p322
    %p324 = scmp.ne.s32.totalorder %s310, %s311
    %p325 = scmp.eq.s32.totalorder %s25, 1
    %p326 = por %p324, %p325
    %p328 = scmp.ne.s32.totalorder %s311, %s327
    %p329 = scmp.eq.s32.totalorder %s25, 0
    %p330 = por %p328, %p329
    %p331 = scmp.le.s32.totalorder 1, %s19
    %p332 = scmp.lt.s32.totalorder %s19, 3
    %p333 = pnand %p331, %p332
    %p334 = pneg %p333
    // Predicated region
    $region9: #{autoencoder_forward.1} parent=5 // pred_check
      _
    $region10: #{autoencoder_forward.1} parent=5 // pred_check_branch
      %336 = sbr.rel (%p333) target = $region12
    $region11: #{autoencoder_forward.1} parent=5 // pred_region
      %s337 = ssub.s32 %s19, 1
      // Predicated region
      $region13: #{autoencoder_forward.1} parent=11 // pred_check
        %p338 = pneg %p66
      $region14: #{autoencoder_forward.1} parent=11 // pred_check_branch
        %340 = sbr.rel (%p338) target = $region16
      $region15: #{autoencoder_forward.1} parent=11 // pred_region
        _
      $region16: #{autoencoder_forward.1} parent=11 // pred_fallthru
        _
      // Predicated region
      $region17: #{autoencoder_forward.1} parent=11 // pred_check
        %p341 = pneg %p87
      $region18: #{autoencoder_forward.1} parent=11 // pred_check_branch
        %343 = sbr.rel (%p341) target = $region20
      $region19: #{autoencoder_forward.1} parent=11 // pred_region
        _
      $region20: #{autoencoder_forward.1} parent=11 // pred_fallthru
        _
      // Predicated region
      $region21: #{autoencoder_forward.1} parent=11 // pred_check
        %p344 = pneg %p108
      $region22: #{autoencoder_forward.1} parent=11 // pred_check_branch
        %346 = sbr.rel (%p344) target = $region24
      $region23: #{autoencoder_forward.1} parent=11 // pred_region
        _
      $region24: #{autoencoder_forward.1} parent=11 // pred_fallthru
        _
      // Predicated region
      $region25: #{autoencoder_forward.1} parent=11 // pred_check
        %p347 = pneg %p129
      $region26: #{autoencoder_forward.1} parent=11 // pred_check_branch
        %349 = sbr.rel (%p347) target = $region28
      $region27: #{autoencoder_forward.1} parent=11 // pred_region
        _
      $region28: #{autoencoder_forward.1} parent=11 // pred_fallthru
        _
      // Predicated region
      $region29: #{autoencoder_forward.1} parent=11 // pred_check
        %p350 = pneg %p150
      $region30: #{autoencoder_forward.1} parent=11 // pred_check_branch
        %352 = sbr.rel (%p350) target = $region32
      $region31: #{autoencoder_forward.1} parent=11 // pred_region
        _
      $region32: #{autoencoder_forward.1} parent=11 // pred_fallthru
        _
      // Predicated region
      $region33: #{autoencoder_forward.1} parent=11 // pred_check
        %p353 = pneg %p171
      $region34: #{autoencoder_forward.1} parent=11 // pred_check_branch
        %355 = sbr.rel (%p353) target = $region36
      $region35: #{autoencoder_forward.1} parent=11 // pred_region
        _
      $region36: #{autoencoder_forward.1} parent=11 // pred_fallthru
        _
      // Predicated region
      $region37: #{autoencoder_forward.1} parent=11 // pred_check
        %p356 = pneg %p192
      $region38: #{autoencoder_forward.1} parent=11 // pred_check_branch
        %358 = sbr.rel (%p356) target = $region40
      $region39: #{autoencoder_forward.1} parent=11 // pred_region
        _
      $region40: #{autoencoder_forward.1} parent=11 // pred_fallthru
        _
      // Predicated region
      $region41: #{autoencoder_forward.1} parent=11 // pred_check
        %p359 = pneg %p213
      $region42: #{autoencoder_forward.1} parent=11 // pred_check_branch
        %361 = sbr.rel (%p359) target = $region44
      $region43: #{autoencoder_forward.1} parent=11 // pred_region
        _
      $region44: #{autoencoder_forward.1} parent=11 // pred_fallthru
        _
      // Predicated region
      $region45: #{autoencoder_forward.1} parent=11 // pred_check
        %p362 = pneg %p234
      $region46: #{autoencoder_forward.1} parent=11 // pred_check_branch
        %364 = sbr.rel (%p362) target = $region48
      $region47: #{autoencoder_forward.1} parent=11 // pred_region
        _
      $region48: #{autoencoder_forward.1} parent=11 // pred_fallthru
        _
      // Predicated region
      $region49: #{autoencoder_forward.1} parent=11 // pred_check
        %p365 = pneg %p255
      $region50: #{autoencoder_forward.1} parent=11 // pred_check_branch
        %367 = sbr.rel (%p365) target = $region52
      $region51: #{autoencoder_forward.1} parent=11 // pred_region
        _
      $region52: #{autoencoder_forward.1} parent=11 // pred_fallthru
        _
      // Predicated region
      $region53: #{autoencoder_forward.1} parent=11 // pred_check
        %p368 = pneg %p276
      $region54: #{autoencoder_forward.1} parent=11 // pred_check_branch
        %370 = sbr.rel (%p368) target = $region56
      $region55: #{autoencoder_forward.1} parent=11 // pred_region
        _
      $region56: #{autoencoder_forward.1} parent=11 // pred_fallthru
        _
      // Predicated region
      $region57: #{autoencoder_forward.1} parent=11 // pred_check
        %p371 = pneg %p297
      $region58: #{autoencoder_forward.1} parent=11 // pred_check_branch
        %373 = sbr.rel (%p371) target = $region60
      $region59: #{autoencoder_forward.1} parent=11 // pred_region
        _
      $region60: #{autoencoder_forward.1} parent=11 // pred_fallthru
        _
    $region12: #{autoencoder_forward.1} parent=5 // pred_fallthru
      _
    %p374 = scmp.lt.s32.totalorder %s19, 2
    // Predicated region
    $region61: #{autoencoder_forward.1} parent=5 // pred_check
      %p375 = pneg %p374
    $region62: #{autoencoder_forward.1} parent=5 // pred_check_branch
      %377 = sbr.rel (%p375) target = $region64
    $region63: #{autoencoder_forward.1} parent=5 // pred_region
      // Predicated region
      $region65: #{autoencoder_forward.1} parent=63 // pred_check
        %p378 = pneg %p39
      $region66: #{autoencoder_forward.1} parent=63 // pred_check_branch
        %380 = sbr.rel (%p378) target = $region68
      $region67: #{autoencoder_forward.1} parent=63 // pred_region
        %s381 = smul.u32 16, %s19
        %p382 = scmp.lt.s32.totalorder %s381, 31
        %s383 = scalar_select %p382, %s381, 31
        %s384 = smul.addr %s383, 7
        %s385 = smul.addr %s384, 8
        %s386 = scalar_lea.vmem %s0, %s385
        %s387 = smul.u32 16, %s19
      $region68: #{autoencoder_forward.1} parent=63 // pred_fallthru
        _
    $region64: #{autoencoder_forward.1} parent=5 // pred_fallthru
      _
    %p388 = scmp.le.s32.totalorder 1, %s19
    %p389 = scmp.lt.s32.totalorder %s19, 3
    %p390 = pnand %p388, %p389
    %p391 = pneg %p390
    // Predicated region
    $region69: #{autoencoder_forward.1} parent=5 // pred_check
      _
    $region70: #{autoencoder_forward.1} parent=5 // pred_check_branch
      %393 = sbr.rel (%p390) target = $region72
    $region71: #{autoencoder_forward.1} parent=5 // pred_region
      %s394 = ssub.s32 %s19, 1
      %s395 = smul.u32 16, %s24
      %p396 = scmp.lt.s32.totalorder %s395, 31
      %s397 = scalar_select %p396, %s395, 31
      %s398 = smul.addr %s397, 7
      %s399 = smul.addr %s398, 8
      %s400 = scalar_lea.vmem %s0, %s399
      %p401 = pneg %p45
      %p402 = pneg %p42
      %p403 = pneg %p66
      %p404 = pneg %p63
      %p405 = pneg %p87
      %p406 = pneg %p84
      %p407 = pneg %p108
      %p408 = pneg %p105
      %p409 = pneg %p129
      %p410 = pneg %p126
      %p411 = pneg %p150
      %p412 = pneg %p147
      %p413 = pneg %p171
      %p414 = pneg %p168
      %p415 = pneg %p192
      %p416 = pneg %p189
      %p417 = pneg %p213
      %p418 = pneg %p210
      %p419 = pneg %p234
      %p420 = pneg %p231
      %p421 = pneg %p255
      %p422 = pneg %p252
      %p423 = pneg %p276
      %p424 = pneg %p273
      %p425 = pneg %p297
      %p426 = pneg %p294
      %p427 = pneg %p323
      %p428 = pneg %p320
      %s429 = smul.u32 16, %s24
      %p430 = scmp.lt.s32.totalorder %s429, 31
      %s431 = scalar_select %p430, %s429, 31
      %s432 = smul.addr %s431, 7
      %s433 = smul.addr %s432, 8
      %s434 = scalar_lea.vmem %s13, %s433
      %s435 = smul.u32 16, %s24
      %p436 = scmp.lt.s32.totalorder %s435, 31
      %s437 = scalar_select %p436, %s435, 31
      %s438 = smul.addr %s437, 7
      %s439 = smul.addr %s438, 8
      %s440 = scalar_lea.vmem %s0, %s439
      %s441 = smul.u32 16, %s24
      %s442 = smul.u32 16, %s24
      %p443 = scmp.lt.s32.totalorder %s442, 31
      %s444 = scalar_select %p443, %s442, 31
      %s445 = smul.addr %s444, 7
      %s446 = smul.addr %s445, 8
      %s447 = scalar_lea.vmem %s13, %s446
      %s448 = smul.u32 16, %s24
      %v450 = vld [vmem:[%s440] sm:$0xff]
      %v451 = vld [vmem:[%s440 + $0x8] sm:$0xff]
      %v452 = vld [vmem:[%s440 + $0x10] sm:$0xff]
      %v453 = vld [vmem:[%s440 + $0x18] sm:$0xff]
      %v454 = vld [vmem:[%s440 + $0x20] sm:$0xff]
      %v455 = vld [vmem:[%s440 + $0x28] sm:$0xff]
      %v456 = vld [vmem:[%s440 + $0x30] sm:$0xff]
      %v457 = vld [vmem:[%s440 + $0x38] sm:$0xff]
      %v458 = vld [vmem:[%s440 + $0x40] sm:$0xff]
      %v459 = vld [vmem:[%s440 + $0x48] sm:$0xff]
      %v460 = vld [vmem:[%s440 + $0x50] sm:$0xff]
      %v461 = vld [vmem:[%s440 + $0x58] sm:$0xff]
      %v462 = vld [vmem:[%s440 + $0x60] sm:$0xff]
      %v463 = vld [vmem:[%s440 + $0x68] sm:$0xff]
      %v464 = vld [vmem:[%s440 + $0x70] sm:$0xff]
      %v465 = vld [vmem:[%s440 + $0x78] sm:$0xff]
      %v466 = vld [vmem:[%s440 + $0x80] sm:$0xff]
      %v467 = vld [vmem:[%s440 + $0x88] sm:$0xff]
      %v468 = vld [vmem:[%s440 + $0x90] sm:$0xff]
      %v469 = vld [vmem:[%s440 + $0x98] sm:$0xff]
      %v470 = vld [vmem:[%s440 + $0xa0] sm:$0xff]
      %v471 = vld [vmem:[%s440 + $0xa8] sm:$0xff]
      %v472 = vld [vmem:[%s440 + $0xb0] sm:$0xff]
      %v473 = vld [vmem:[%s440 + $0xb8] sm:$0xff]
      %v474 = vld [vmem:[%s440 + $0xc0] sm:$0xff]
      %v475 = vld [vmem:[%s440 + $0xc8] sm:$0xff]
      %v476 = vld [vmem:[%s440 + $0xd0] sm:$0xff]
      %v477 = vld [vmem:[%s440 + $0xd8] sm:$0xff]
      %v478 = vld [vmem:[%s440 + $0xe0] sm:$0xff]
      %v479 = vld [vmem:[%s440 + $0xe8] sm:$0xff]
      %v480 = vld [vmem:[%s440 + $0xf0] sm:$0xff]
      %v481 = vld [vmem:[%s440 + $0xf8] sm:$0xff]
      %v482 = vld [vmem:[%s440 + $0x100] sm:$0xff]
      %v483 = vld [vmem:[%s440 + $0x108] sm:$0xff]
      %v484 = vld [vmem:[%s440 + $0x110] sm:$0xff]
      %v485 = vld [vmem:[%s440 + $0x118] sm:$0xff]
      %v486 = vld [vmem:[%s440 + $0x120] sm:$0xff]
      %v487 = vld [vmem:[%s440 + $0x128] sm:$0xff]
      %v488 = vld [vmem:[%s440 + $0x130] sm:$0xff]
      %v489 = vld [vmem:[%s440 + $0x138] sm:$0xff]
      %v490 = vld [vmem:[%s440 + $0x140] sm:$0xff]
      %v491 = vld [vmem:[%s440 + $0x148] sm:$0xff]
      %v492 = vld [vmem:[%s440 + $0x150] sm:$0xff]
      %v493 = vld [vmem:[%s440 + $0x158] sm:$0xff]
      %v494 = vld [vmem:[%s440 + $0x160] sm:$0xff]
      %v495 = vld [vmem:[%s440 + $0x168] sm:$0xff]
      %v496 = vld [vmem:[%s440 + $0x170] sm:$0xff]
      %v497 = vld [vmem:[%s440 + $0x178] sm:$0xff]
      %v498 = vld [vmem:[%s440 + $0x180] sm:$0xff]
      %v499 = vld [vmem:[%s440 + $0x188] sm:$0xff]
      %v500 = vld [vmem:[%s440 + $0x190] sm:$0xff]
      %v501 = vld [vmem:[%s440 + $0x198] sm:$0xff]
      %v502 = vld [vmem:[%s440 + $0x1a0] sm:$0xff]
      %v503 = vld [vmem:[%s440 + $0x1a8] sm:$0xff]
      %v504 = vld [vmem:[%s440 + $0x1b0] sm:$0xff]
      %v505 = vld [vmem:[%s440 + $0x1b8] sm:$0xff]
      %v506 = vld [vmem:[%s440 + $0x1c0] sm:$0xff]
      %v507 = vld [vmem:[%s440 + $0x1c8] sm:$0xff]
      %v508 = vld [vmem:[%s440 + $0x1d0] sm:$0xff]
      %v509 = vld [vmem:[%s440 + $0x1d8] sm:$0xff]
      %v510 = vld [vmem:[%s440 + $0x1e0] sm:$0xff]
      %v511 = vld [vmem:[%s440 + $0x1e8] sm:$0xff]
      %v512 = vld [vmem:[%s440 + $0x1f0] sm:$0xff]
      %v513 = vld [vmem:[%s440 + $0x1f8] sm:$0xff]
      %v514 = vld [vmem:[%s440 + $0x200] sm:$0xff]
      %v515 = vld [vmem:[%s440 + $0x208] sm:$0xff]
      %v516 = vld [vmem:[%s440 + $0x210] sm:$0xff]
      %v517 = vld [vmem:[%s440 + $0x218] sm:$0xff]
      %v518 = vld [vmem:[%s440 + $0x220] sm:$0xff]
      %v519 = vld [vmem:[%s440 + $0x228] sm:$0xff]
      %v520 = vld [vmem:[%s440 + $0x230] sm:$0xff]
      %v521 = vld [vmem:[%s440 + $0x238] sm:$0xff]
      %v522 = vld [vmem:[%s440 + $0x240] sm:$0xff]
      %v523 = vld [vmem:[%s440 + $0x248] sm:$0xff]
      %v524 = vld [vmem:[%s440 + $0x250] sm:$0xff]
      %v525 = vld [vmem:[%s440 + $0x258] sm:$0xff]
      %v526 = vld [vmem:[%s440 + $0x260] sm:$0xff]
      %v527 = vld [vmem:[%s440 + $0x268] sm:$0xff]
      %v528 = vld [vmem:[%s440 + $0x270] sm:$0xff]
      %v529 = vld [vmem:[%s440 + $0x278] sm:$0xff]
      %v530 = vld [vmem:[%s440 + $0x280] sm:$0xff]
      %v531 = vld [vmem:[%s440 + $0x288] sm:$0xff]
      %v532 = vld [vmem:[%s440 + $0x290] sm:$0xff]
      %v533 = vld [vmem:[%s440 + $0x298] sm:$0xff]
      %v534 = vld [vmem:[%s440 + $0x2a0] sm:$0xff]
      %v535 = vld [vmem:[%s440 + $0x2a8] sm:$0xff]
      %v536 = vld [vmem:[%s440 + $0x2b0] sm:$0xff]
      %v537 = vld [vmem:[%s440 + $0x2b8] sm:$0xff]
      %v538 = vld [vmem:[%s440 + $0x2c0] sm:$0xff]
      %v539 = vld [vmem:[%s440 + $0x2c8] sm:$0xff]
      %v540 = vld [vmem:[%s440 + $0x2d0] sm:$0xff]
      %v541 = vld [vmem:[%s440 + $0x2d8] sm:$0xff]
      %v542 = vld [vmem:[%s440 + $0x2e0] sm:$0xff]
      %v543 = vld [vmem:[%s440 + $0x2e8] sm:$0xff]
      %v544 = vld [vmem:[%s440 + $0x2f0] sm:$0xff]
      %v545 = vld [vmem:[%s440 + $0x2f8] sm:$0xff]
      %v546 = vld [vmem:[%s440 + $0x300] sm:$0xff]
      %v547 = vld [vmem:[%s440 + $0x308] sm:$0xff]
      %v548 = vld [vmem:[%s440 + $0x310] sm:$0xff]
      %v549 = vld [vmem:[%s440 + $0x318] sm:$0xff]
      %v550 = vld [vmem:[%s440 + $0x320] sm:$0xff]
      %v551 = vld [vmem:[%s440 + $0x328] sm:$0xff]
      %v552 = vld [vmem:[%s440 + $0x330] sm:$0xff]
      %v553 = vld [vmem:[%s440 + $0x338] sm:$0xff]
      %v554 = vld [vmem:[%s440 + $0x340] sm:$0xff]
      %v555 = vld [vmem:[%s440 + $0x348] sm:$0xff]
      %v556 = vld [vmem:[%s440 + $0x350] sm:$0xff]
      %v557 = vld [vmem:[%s440 + $0x358] sm:$0xff]
      %v558 = vld [vmem:[%s440 + $0x360] sm:$0xff]
      %v559 = vld [vmem:[%s440 + $0x368] sm:$0xff]
      %v560 = vld [vmem:[%s440 + $0x370] sm:$0xff]
      %v561 = vld [vmem:[%s440 + $0x378] sm:$0xff]
      %v562 = vpack.c.bf16 %v457, %v450
      %v563 = vpack.c.bf16 %v458, %v451
      %v564 = vpack.c.bf16 %v459, %v452
      %v565 = vpack.c.bf16 %v460, %v453
      %v566 = vpack.c.bf16 %v461, %v454
      %v567 = vpack.c.bf16 %v462, %v455
      %v568 = vpack.c.bf16 %v463, %v456
      %v569 = vpack.c.bf16 %v471, %v464
      %v570 = vpack.c.bf16 %v472, %v465
      %v571 = vpack.c.bf16 %v473, %v466
      %v572 = vpack.c.bf16 %v474, %v467
      %v573 = vpack.c.bf16 %v475, %v468
      %v574 = vpack.c.bf16 %v476, %v469
      %v575 = vpack.c.bf16 %v477, %v470
      %v576 = vpack.c.bf16 %v485, %v478
      %v577 = vpack.c.bf16 %v486, %v479
      %v578 = vpack.c.bf16 %v487, %v480
      %v579 = vpack.c.bf16 %v488, %v481
      %v580 = vpack.c.bf16 %v489, %v482
      %v581 = vpack.c.bf16 %v490, %v483
      %v582 = vpack.c.bf16 %v491, %v484
      %v583 = vpack.c.bf16 %v499, %v492
      %v584 = vpack.c.bf16 %v500, %v493
      %v585 = vpack.c.bf16 %v501, %v494
      %v586 = vpack.c.bf16 %v502, %v495
      %v587 = vpack.c.bf16 %v503, %v496
      %v588 = vpack.c.bf16 %v504, %v497
      %v589 = vpack.c.bf16 %v505, %v498
      %v590 = vpack.c.bf16 %v513, %v506
      %v591 = vpack.c.bf16 %v514, %v507
      %v592 = vpack.c.bf16 %v515, %v508
      %v593 = vpack.c.bf16 %v516, %v509
      %v594 = vpack.c.bf16 %v517, %v510
      %v595 = vpack.c.bf16 %v518, %v511
      %v596 = vpack.c.bf16 %v519, %v512
      %v597 = vpack.c.bf16 %v527, %v520
      %v598 = vpack.c.bf16 %v528, %v521
      %v599 = vpack.c.bf16 %v529, %v522
      %v600 = vpack.c.bf16 %v530, %v523
      %v601 = vpack.c.bf16 %v531, %v524
      %v602 = vpack.c.bf16 %v532, %v525
      %v603 = vpack.c.bf16 %v533, %v526
      %v604 = vpack.c.bf16 %v541, %v534
      %v605 = vpack.c.bf16 %v542, %v535
      %v606 = vpack.c.bf16 %v543, %v536
      %v607 = vpack.c.bf16 %v544, %v537
      %v608 = vpack.c.bf16 %v545, %v538
      %v609 = vpack.c.bf16 %v546, %v539
      %v610 = vpack.c.bf16 %v547, %v540
      %v611 = vpack.c.bf16 %v555, %v548
      %v612 = vpack.c.bf16 %v556, %v549
      %v613 = vpack.c.bf16 %v557, %v550
      %v614 = vpack.c.bf16 %v558, %v551
      %v615 = vpack.c.bf16 %v559, %v552
      %v616 = vpack.c.bf16 %v560, %v553
      %v617 = vpack.c.bf16 %v561, %v554
      %v618 = vld [vmem:[%s1] sm:$0xf]
      %v619 = vld [vmem:[%s1 + $0x4] sm:$0xf]
      %v620 = vld [vmem:[%s1 + $0x8] sm:$0xf]
      %v621 = vld [vmem:[%s1 + $0xc] sm:$0xf]
      %v622 = vld [vmem:[%s1 + $0x10] sm:$0xf]
      %v623 = vld [vmem:[%s1 + $0x14] sm:$0xf]
      %v624 = vld [vmem:[%s1 + $0x18] sm:$0xf]
      %v625 = vld [vmem:[%s1 + $0x1c] sm:$0xf]
      %v626 = vld [vmem:[%s1 + $0x20] sm:$0xf]
      %v627 = vld [vmem:[%s1 + $0x24] sm:$0xf]
      %v628 = vld [vmem:[%s1 + $0x28] sm:$0xf]
      %v629 = vld [vmem:[%s1 + $0x2c] sm:$0xf]
      %v630 = vld [vmem:[%s1 + $0x30] sm:$0xf]
      %v631 = vld [vmem:[%s1 + $0x34] sm:$0xf]
      %v632 = vld [vmem:[%s1 + $0x38] sm:$0xf]
      %v633 = vld [vmem:[%s1 + $0x3c] sm:$0xf]
      %v634 = vld [vmem:[%s1 + $0x40] sm:$0xf]
      %v635 = vld [vmem:[%s1 + $0x44] sm:$0xf]
      %v636 = vld [vmem:[%s1 + $0x48] sm:$0xf]
      %v637 = vld [vmem:[%s1 + $0x4c] sm:$0xf]
      %v638 = vld [vmem:[%s1 + $0x50] sm:$0xf]
      %v639 = vld [vmem:[%s1 + $0x54] sm:$0xf]
      %v640 = vld [vmem:[%s1 + $0x58] sm:$0xf]
      %v641 = vld [vmem:[%s1 + $0x5c] sm:$0xf]
      %v642 = vld [vmem:[%s1 + $0x60] sm:$0xf]
      %v643 = vld [vmem:[%s1 + $0x64] sm:$0xf]
      %v644 = vld [vmem:[%s1 + $0x68] sm:$0xf]
      %v645 = vld [vmem:[%s1 + $0x6c] sm:$0xf]
      %v646 = vld [vmem:[%s1 + $0x70] sm:$0xf]
      %v647 = vld [vmem:[%s1 + $0x74] sm:$0xf]
      %v648 = vld [vmem:[%s1 + $0x78] sm:$0xf]
      %v649 = vld [vmem:[%s1 + $0x7c] sm:$0xf]
      %v650 = vld [vmem:[%s1 + $0x80] sm:$0xf]
      %v651 = vld [vmem:[%s1 + $0x84] sm:$0xf]
      %v652 = vld [vmem:[%s1 + $0x88] sm:$0xf]
      %v653 = vld [vmem:[%s1 + $0x8c] sm:$0xf]
      %v654 = vld [vmem:[%s1 + $0x90] sm:$0xf]
      %v655 = vld [vmem:[%s1 + $0x94] sm:$0xf]
      %v656 = vld [vmem:[%s1 + $0x98] sm:$0xf]
      %v657 = vld [vmem:[%s1 + $0x9c] sm:$0xf]
      %v658 = vld [vmem:[%s1 + $0xa0] sm:$0xf]
      %v659 = vld [vmem:[%s1 + $0xa4] sm:$0xf]
      %v660 = vld [vmem:[%s1 + $0xa8] sm:$0xf]
      %v661 = vld [vmem:[%s1 + $0xac] sm:$0xf]
      %v662 = vld [vmem:[%s1 + $0xb0] sm:$0xf]
      %v663 = vld [vmem:[%s1 + $0xb4] sm:$0xf]
      %v664 = vld [vmem:[%s1 + $0xb8] sm:$0xf]
      %v665 = vld [vmem:[%s1 + $0xbc] sm:$0xf]
      %v666 = vld [vmem:[%s1 + $0xc0] sm:$0xf]
      %v667 = vld [vmem:[%s1 + $0xc4] sm:$0xf]
      %v668 = vld [vmem:[%s1 + $0xc8] sm:$0xf]
      %v669 = vld [vmem:[%s1 + $0xcc] sm:$0xf]
      %v670 = vld [vmem:[%s1 + $0xd0] sm:$0xf]
      %v671 = vld [vmem:[%s1 + $0xd4] sm:$0xf]
      %v672 = vld [vmem:[%s1 + $0xd8] sm:$0xf]
      %v673 = vld [vmem:[%s1 + $0xdc] sm:$0xf]
      %v674 = vld [vmem:[%s1 + $0xe0] sm:$0xf]
      %v675 = vld [vmem:[%s1 + $0xe4] sm:$0xf]
      %v676 = vld [vmem:[%s1 + $0xe8] sm:$0xf]
      %v677 = vld [vmem:[%s1 + $0xec] sm:$0xf]
      %v678 = vld [vmem:[%s1 + $0xf0] sm:$0xf]
      %v679 = vld [vmem:[%s1 + $0xf4] sm:$0xf]
      %v680 = vld [vmem:[%s1 + $0xf8] sm:$0xf]
      %v681 = vld [vmem:[%s1 + $0xfc] sm:$0xf]
      %v682 = vld [vmem:[%s1 + $0x100] sm:$0xf]
      %v683 = vld [vmem:[%s1 + $0x104] sm:$0xf]
      %v684 = vld [vmem:[%s1 + $0x108] sm:$0xf]
      %v685 = vld [vmem:[%s1 + $0x10c] sm:$0xf]
      %v686 = vld [vmem:[%s1 + $0x110] sm:$0xf]
      %v687 = vld [vmem:[%s1 + $0x114] sm:$0xf]
      %v688 = vld [vmem:[%s1 + $0x118] sm:$0xf]
      %v689 = vld [vmem:[%s1 + $0x11c] sm:$0xf]
      %v690 = vld [vmem:[%s1 + $0x120] sm:$0xf]
      %v691 = vld [vmem:[%s1 + $0x124] sm:$0xf]
      %v692 = vld [vmem:[%s1 + $0x128] sm:$0xf]
      %v693 = vld [vmem:[%s1 + $0x12c] sm:$0xf]
      %v694 = vld [vmem:[%s1 + $0x130] sm:$0xf]
      %v695 = vld [vmem:[%s1 + $0x134] sm:$0xf]
      %v696 = vld [vmem:[%s1 + $0x138] sm:$0xf]
      %v697 = vld [vmem:[%s1 + $0x13c] sm:$0xf]
      %v698 = vld [vmem:[%s1 + $0x140] sm:$0xf]
      %v699 = vld [vmem:[%s1 + $0x144] sm:$0xf]
      %v700 = vld [vmem:[%s1 + $0x148] sm:$0xf]
      %v701 = vld [vmem:[%s1 + $0x14c] sm:$0xf]
      %v702 = vld [vmem:[%s1 + $0x150] sm:$0xf]
      %v703 = vld [vmem:[%s1 + $0x154] sm:$0xf]
      %v704 = vld [vmem:[%s1 + $0x158] sm:$0xf]
      %v705 = vld [vmem:[%s1 + $0x15c] sm:$0xf]
      %v706 = vld [vmem:[%s1 + $0x160] sm:$0xf]
      %v707 = vld [vmem:[%s1 + $0x164] sm:$0xf]
      %v708 = vld [vmem:[%s1 + $0x168] sm:$0xf]
      %v709 = vld [vmem:[%s1 + $0x16c] sm:$0xf]
      %v710 = vld [vmem:[%s1 + $0x170] sm:$0xf]
      %v711 = vld [vmem:[%s1 + $0x174] sm:$0xf]
      %v712 = vld [vmem:[%s1 + $0x178] sm:$0xf]
      %v713 = vld [vmem:[%s1 + $0x17c] sm:$0xf]
      %v714 = vld [vmem:[%s1 + $0x180] sm:$0xf]
      %v715 = vld [vmem:[%s1 + $0x184] sm:$0xf]
      %v716 = vld [vmem:[%s2] sm:$0x1]
      %v718 = vlaneseq
      %v719 = vshrl.u32 %v718, 7
      %v720 = vsub.s32 0, %v719
      %v721 = vrot.slane %v716, %v720
      %v821 = vunpack.c.l.b16 %v618
      %v822 = vunpack.c.l.b16 %v619
      %v823 = vunpack.c.l.b16 %v620
      %v824 = vunpack.c.l.b16 %v621
      %v825 = vunpack.c.l.b16 %v622
      %v826 = vunpack.c.l.b16 %v623
      %v827 = vunpack.c.l.b16 %v624
      %v828 = vunpack.c.l.b16 %v625
      %v829 = vunpack.c.l.b16 %v626
      %v830 = vunpack.c.l.b16 %v627
      %v831 = vunpack.c.l.b16 %v628
      %v832 = vunpack.c.l.b16 %v629
      %v833 = vunpack.c.l.b16 %v630
      %v834 = vunpack.c.l.b16 %v631
      %v835 = vunpack.c.l.b16 %v632
      %v836 = vunpack.c.l.b16 %v633
      %v837 = vunpack.c.l.b16 %v634
      %v838 = vunpack.c.l.b16 %v635
      %v839 = vunpack.c.l.b16 %v636
      %v840 = vunpack.c.l.b16 %v637
      %v841 = vunpack.c.l.b16 %v638
      %v842 = vunpack.c.l.b16 %v639
      %v843 = vunpack.c.l.b16 %v640
      %v844 = vunpack.c.l.b16 %v641
      %v845 = vunpack.c.l.b16 %v642
      %v846 = vunpack.c.l.b16 %v643
      %v847 = vunpack.c.l.b16 %v644
      %v848 = vunpack.c.l.b16 %v645
      %v849 = vunpack.c.l.b16 %v646
      %v850 = vunpack.c.l.b16 %v647
      %v851 = vunpack.c.l.b16 %v648
      %v852 = vunpack.c.l.b16 %v649
      %v853 = vunpack.c.l.b16 %v650
      %v854 = vunpack.c.l.b16 %v651
      %v855 = vunpack.c.l.b16 %v652
      %v856 = vunpack.c.l.b16 %v653
      %v857 = vunpack.c.l.b16 %v654
      %v858 = vunpack.c.l.b16 %v655
      %v859 = vunpack.c.l.b16 %v656
      %v860 = vunpack.c.l.b16 %v657
      %v861 = vunpack.c.l.b16 %v658
      %v862 = vunpack.c.l.b16 %v659
      %v863 = vunpack.c.l.b16 %v660
      %v864 = vunpack.c.l.b16 %v661
      %v865 = vunpack.c.l.b16 %v662
      %v866 = vunpack.c.l.b16 %v663
      %v867 = vunpack.c.l.b16 %v664
      %v868 = vunpack.c.l.b16 %v665
      %v869 = vunpack.c.l.b16 %v666
      %v870 = vunpack.c.l.b16 %v667
      %v871 = vunpack.c.l.b16 %v668
      %v872 = vunpack.c.l.b16 %v669
      %v873 = vunpack.c.l.b16 %v670
      %v874 = vunpack.c.l.b16 %v671
      %v875 = vunpack.c.l.b16 %v672
      %v876 = vunpack.c.l.b16 %v673
      %v877 = vunpack.c.l.b16 %v674
      %v878 = vunpack.c.l.b16 %v675
      %v879 = vunpack.c.l.b16 %v676
      %v880 = vunpack.c.l.b16 %v677
      %v881 = vunpack.c.l.b16 %v678
      %v882 = vunpack.c.l.b16 %v679
      %v883 = vunpack.c.l.b16 %v680
      %v884 = vunpack.c.l.b16 %v681
      %v885 = vunpack.c.l.b16 %v682
      %v886 = vunpack.c.l.b16 %v683
      %v887 = vunpack.c.l.b16 %v684
      %v888 = vunpack.c.l.b16 %v685
      %v889 = vunpack.c.l.b16 %v686
      %v890 = vunpack.c.l.b16 %v687
      %v891 = vunpack.c.l.b16 %v688
      %v892 = vunpack.c.l.b16 %v689
      %v893 = vunpack.c.l.b16 %v690
      %v894 = vunpack.c.l.b16 %v691
      %v895 = vunpack.c.l.b16 %v692
      %v896 = vunpack.c.l.b16 %v693
      %v897 = vunpack.c.l.b16 %v694
      %v898 = vunpack.c.l.b16 %v695
      %v899 = vunpack.c.l.b16 %v696
      %v900 = vunpack.c.l.b16 %v697
      %v901 = vunpack.c.l.b16 %v698
      %v902 = vunpack.c.l.b16 %v699
      %v903 = vunpack.c.l.b16 %v700
      %v904 = vunpack.c.l.b16 %v701
      %v905 = vunpack.c.l.b16 %v702
      %v906 = vunpack.c.l.b16 %v703
      %v907 = vunpack.c.l.b16 %v704
      %v908 = vunpack.c.l.b16 %v705
      %v909 = vunpack.c.l.b16 %v706
      %v910 = vunpack.c.l.b16 %v707
      %v911 = vunpack.c.l.b16 %v708
      %v912 = vunpack.c.l.b16 %v709
      %v913 = vunpack.c.l.b16 %v710
      %v914 = vunpack.c.l.b16 %v711
      %v915 = vunpack.c.l.b16 %v712
      %v916 = vunpack.c.l.b16 %v713
      %v917 = vunpack.c.l.b16 %v714
      %v918 = vunpack.c.l.b16 %v715
      %v919 = vpack.c.b16 %v822, %v821
      %v920 = vpack.c.b16 %v824, %v823
      %v921 = vpack.c.b16 %v826, %v825
      %v922 = vpack.c.b16 %v828, %v827
      %v923 = vpack.c.b16 %v830, %v829
      %v924 = vpack.c.b16 %v832, %v831
      %v925 = vpack.c.b16 %v834, %v833
      %v926 = vpack.c.b16 %v836, %v835
      %v927 = vpack.c.b16 %v838, %v837
      %v928 = vpack.c.b16 %v840, %v839
      %v929 = vpack.c.b16 %v842, %v841
      %v930 = vpack.c.b16 %v844, %v843
      %v931 = vpack.c.b16 %v846, %v845
      %v932 = vpack.c.b16 %v848, %v847
      %v933 = vpack.c.b16 %v850, %v849
      %v934 = vpack.c.b16 %v852, %v851
      %v935 = vpack.c.b16 %v854, %v853
      %v936 = vpack.c.b16 %v856, %v855
      %v937 = vpack.c.b16 %v858, %v857
      %v938 = vpack.c.b16 %v860, %v859
      %v939 = vpack.c.b16 %v862, %v861
      %v940 = vpack.c.b16 %v864, %v863
      %v941 = vpack.c.b16 %v866, %v865
      %v942 = vpack.c.b16 %v868, %v867
      %v943 = vpack.c.b16 %v870, %v869
      %v944 = vpack.c.b16 %v872, %v871
      %v945 = vpack.c.b16 %v874, %v873
      %v946 = vpack.c.b16 %v876, %v875
      %v947 = vpack.c.b16 %v878, %v877
      %v948 = vpack.c.b16 %v880, %v879
      %v949 = vpack.c.b16 %v882, %v881
      %v950 = vpack.c.b16 %v884, %v883
      %v951 = vpack.c.b16 %v886, %v885
      %v952 = vpack.c.b16 %v888, %v887
      %v953 = vpack.c.b16 %v890, %v889
      %v954 = vpack.c.b16 %v892, %v891
      %v955 = vpack.c.b16 %v894, %v893
      %v956 = vpack.c.b16 %v896, %v895
      %v957 = vpack.c.b16 %v898, %v897
      %v958 = vpack.c.b16 %v900, %v899
      %v959 = vpack.c.b16 %v902, %v901
      %v960 = vpack.c.b16 %v904, %v903
      %v961 = vpack.c.b16 %v906, %v905
      %v962 = vpack.c.b16 %v908, %v907
      %v963 = vpack.c.b16 %v910, %v909
      %v964 = vpack.c.b16 %v912, %v911
      %v965 = vpack.c.b16 %v914, %v913
      %v966 = vpack.c.b16 %v916, %v915
      %v967 = vpack.c.b16 %v918, %v917
      %vm1017 = vcmask 130048
      %v1019 = vsel %vm1017, %v568, 0
      %v1022 = vsel %vm1017, %v575, 0
      %v1025 = vsel %vm1017, %v582, 0
      %v1028 = vsel %vm1017, %v589, 0
      %v1031 = vsel %vm1017, %v596, 0
      %v1034 = vsel %vm1017, %v603, 0
      %v1037 = vsel %vm1017, %v610, 0
      %v1040 = vsel %vm1017, %v617, 0
      %1042 = vmatprep.subr.bf16.mxu0 0
      %1043 = vmatpush1.bf16.msra.mxu0 %v919
      %1044 = vmatprep.subr.bf16.mxu0 0
      %1045 = vmatpush1.bf16.msra.mxu0 %v920
      %1046 = vmatprep.subr.bf16.mxu0 0
      %1047 = vmatpush1.bf16.msra.mxu0 %v921
      %1048 = vmatprep.subr.bf16.mxu0 0
      %1049 = vmatpush1.bf16.msra.mxu0 %v922
      %1050 = vmatprep.subr.bf16.mxu0 0
      %1051 = vmatpush1.bf16.msra.mxu0 %v923
      %1052 = vmatprep.subr.bf16.mxu0 0
      %1053 = vmatpush1.bf16.msra.mxu0 %v924
      %1054 = vmatprep.subr.bf16.mxu0 0
      %1055 = vmatpush1.bf16.msra.mxu0 %v925
      %1056 = vmatprep.subr.bf16.mxu0 0
      %1057 = vmatpush1.bf16.msra.mxu0 %v926
      %1058 = vmatprep.subr.bf16.mxu0 0
      %1059 = vmatpush1.bf16.msra.mxu0 %v927
      %1060 = vmatprep.subr.bf16.mxu0 0
      %1061 = vmatpush1.bf16.msra.mxu0 %v928
      %1062 = vmatprep.subr.bf16.mxu0 0
      %1063 = vmatpush1.bf16.msra.mxu0 %v929
      %1064 = vmatprep.subr.bf16.mxu0 0
      %1065 = vmatpush1.bf16.msra.mxu0 %v930
      %1066 = vmatprep.subr.bf16.mxu0 0
      %1067 = vmatpush1.bf16.msra.mxu0 %v931
      %1068 = vmatprep.subr.bf16.mxu0 0
      %1069 = vmatpush1.bf16.msra.mxu0 %v932
      %1070 = vmatprep.subr.bf16.mxu0 0
      %1071 = vmatpush1.bf16.msra.mxu0 %v933
      %1072 = vmatprep.subr.bf16.mxu0 0
      %1073 = vmatpush1.bf16.msra.mxu0 %v934
      %1074 = vmatprep.mubr.bf16.mxu0 %v563
      %1075 = vmatmul.mubr.bf16.gmra.mrb[0].mxu0 %v562
      %v1076 = vpop.f32.mrb[0].mxu0
      %v1077 = vadd.f32 %v721, %v1076
      %v1078 = vpop.f32.mrb[0].mxu0
      %v1079 = vpop.f32.mrb[0].mxu0
      %v1080 = vadd.f32 %v721, %v1079
      %v1081 = vpop.f32.mrb[0].mxu0
      %1082 = vmatprep.mubr.bf16.mxu0 %v570
      %1083 = vmatmul.mubr.bf16.gmra.mrb[0].mxu0 %v569
      %v1084 = vpop.f32.mrb[0].mxu0
      %v1085 = vadd.f32 %v721, %v1084
      %v1086 = vpop.f32.mrb[0].mxu0
      %v1087 = vpop.f32.mrb[0].mxu0
      %v1088 = vadd.f32 %v721, %v1087
      %v1089 = vpop.f32.mrb[0].mxu0
      %1090 = vmatprep.mubr.bf16.mxu0 %v577
      %1091 = vmatmul.mubr.bf16.gmra.mrb[0].mxu0 %v576
      %v1092 = vpop.f32.mrb[0].mxu0
      %v1093 = vadd.f32 %v721, %v1092
      %v1094 = vpop.f32.mrb[0].mxu0
      %v1095 = vpop.f32.mrb[0].mxu0
      %v1096 = vadd.f32 %v721, %v1095
      %v1097 = vpop.f32.mrb[0].mxu0
      %1098 = vmatprep.mubr.bf16.mxu0 %v584
      %1099 = vmatmul.mubr.bf16.gmra.mrb[0].mxu0 %v583
      %v1100 = vpop.f32.mrb[0].mxu0
      %v1101 = vadd.f32 %v721, %v1100
      %v1102 = vpop.f32.mrb[0].mxu0
      %v1103 = vpop.f32.mrb[0].mxu0
      %v1104 = vadd.f32 %v721, %v1103
      %v1105 = vpop.f32.mrb[0].mxu0
      %1106 = vmatprep.mubr.bf16.mxu0 %v591
      %1107 = vmatmul.mubr.bf16.gmra.mrb[0].mxu0 %v590
      %v1108 = vpop.f32.mrb[0].mxu0
      %v1109 = vadd.f32 %v721, %v1108
      %v1110 = vpop.f32.mrb[0].mxu0
      %v1111 = vpop.f32.mrb[0].mxu0
      %v1112 = vadd.f32 %v721, %v1111
      %v1113 = vpop.f32.mrb[0].mxu0
      %1114 = vmatprep.mubr.bf16.mxu0 %v598
      %1115 = vmatmul.mubr.bf16.gmra.mrb[0].mxu0 %v597
      %v1116 = vpop.f32.mrb[0].mxu0
      %v1117 = vadd.f32 %v721, %v1116
      %v1118 = vpop.f32.mrb[0].mxu0
      %v1119 = vpop.f32.mrb[0].mxu0
      %v1120 = vadd.f32 %v721, %v1119
      %v1121 = vpop.f32.mrb[0].mxu0
      %1122 = vmatprep.mubr.bf16.mxu0 %v605
      %1123 = vmatmul.mubr.bf16.gmra.mrb[0].mxu0 %v604
      %v1124 = vpop.f32.mrb[0].mxu0
      %v1125 = vadd.f32 %v721, %v1124
      %v1126 = vpop.f32.mrb[0].mxu0
      %v1127 = vpop.f32.mrb[0].mxu0
      %v1128 = vadd.f32 %v721, %v1127
      %v1129 = vpop.f32.mrb[0].mxu0
      %1130 = vmatprep.mubr.bf16.mxu0 %v612
      %1131 = vmatmul.mubr.bf16.gmra.mrb[0].mxu0 %v611
      %v1132 = vpop.f32.mrb[0].mxu0
      %v1133 = vadd.f32 %v721, %v1132
      %v1134 = vpop.f32.mrb[0].mxu0
      %v1135 = vpop.f32.mrb[0].mxu0
      %v1136 = vadd.f32 %v721, %v1135
      %v1137 = vpop.f32.mrb[0].mxu0
      %1138 = vdwg.mxu0
      %1139 = vmatprep.subr.bf16.mxu0 0
      %1140 = vmatpush1.bf16.msra.mxu0 %v935
      %1141 = vmatprep.subr.bf16.mxu0 0
      %1142 = vmatpush1.bf16.msra.mxu0 %v936
      %1143 = vmatprep.subr.bf16.mxu0 0
      %1144 = vmatpush1.bf16.msra.mxu0 %v937
      %1145 = vmatprep.subr.bf16.mxu0 0
      %1146 = vmatpush1.bf16.msra.mxu0 %v938
      %1147 = vmatprep.subr.bf16.mxu0 0
      %1148 = vmatpush1.bf16.msra.mxu0 %v939
      %1149 = vmatprep.subr.bf16.mxu0 0
      %1150 = vmatpush1.bf16.msra.mxu0 %v940
      %1151 = vmatprep.subr.bf16.mxu0 0
      %1152 = vmatpush1.bf16.msra.mxu0 %v941
      %1153 = vmatprep.subr.bf16.mxu0 0
      %1154 = vmatpush1.bf16.msra.mxu0 %v942
      %1155 = vmatprep.subr.bf16.mxu0 0
      %1156 = vmatpush1.bf16.msra.mxu0 %v943
      %1157 = vmatprep.subr.bf16.mxu0 0
      %1158 = vmatpush1.bf16.msra.mxu0 %v944
      %1159 = vmatprep.subr.bf16.mxu0 0
      %1160 = vmatpush1.bf16.msra.mxu0 %v945
      %1161 = vmatprep.subr.bf16.mxu0 0
      %1162 = vmatpush1.bf16.msra.mxu0 %v946
      %1163 = vmatprep.subr.bf16.mxu0 0
      %1164 = vmatpush1.bf16.msra.mxu0 %v947
      %1165 = vmatprep.subr.bf16.mxu0 0
      %1166 = vmatpush1.bf16.msra.mxu0 %v948
      %1167 = vmatprep.subr.bf16.mxu0 0
      %1168 = vmatpush1.bf16.msra.mxu0 %v949
      %1169 = vmatprep.subr.bf16.mxu0 0
      %1170 = vmatpush1.bf16.msra.mxu0 %v950
      %1171 = vmatprep.mubr.bf16.mxu0 %v565
      %1172 = vmatmul.mubr.bf16.gmra.mrb[0].mxu0 %v564
      %v1173 = vpop.f32.mrb[0].mxu0
      %v1174 = vadd.f32 %v1077, %v1173
      %v1175 = vpop.f32.mrb[0].mxu0
      %v1176 = vpop.f32.mrb[0].mxu0
      %v1177 = vadd.f32 %v1080, %v1176
      %v1178 = vpop.f32.mrb[0].mxu0
      %1179 = vmatprep.mubr.bf16.mxu0 %v572
      %1180 = vmatmul.mubr.bf16.gmra.mrb[0].mxu0 %v571
      %v1181 = vpop.f32.mrb[0].mxu0
      %v1182 = vadd.f32 %v1085, %v1181
      %v1183 = vpop.f32.mrb[0].mxu0
      %v1184 = vpop.f32.mrb[0].mxu0
      %v1185 = vadd.f32 %v1088, %v1184
      %v1186 = vpop.f32.mrb[0].mxu0
      %1187 = vmatprep.mubr.bf16.mxu0 %v579
      %1188 = vmatmul.mubr.bf16.gmra.mrb[0].mxu0 %v578
      %v1189 = vpop.f32.mrb[0].mxu0
      %v1190 = vadd.f32 %v1093, %v1189
      %v1191 = vpop.f32.mrb[0].mxu0
      %v1192 = vpop.f32.mrb[0].mxu0
      %v1193 = vadd.f32 %v1096, %v1192
      %v1194 = vpop.f32.mrb[0].mxu0
      %1195 = vmatprep.mubr.bf16.mxu0 %v586
      %1196 = vmatmul.mubr.bf16.gmra.mrb[0].mxu0 %v585
      %v1197 = vpop.f32.mrb[0].mxu0
      %v1198 = vadd.f32 %v1101, %v1197
      %v1199 = vpop.f32.mrb[0].mxu0
      %v1200 = vpop.f32.mrb[0].mxu0
      %v1201 = vadd.f32 %v1104, %v1200
      %v1202 = vpop.f32.mrb[0].mxu0
      %1203 = vmatprep.mubr.bf16.mxu0 %v593
      %1204 = vmatmul.mubr.bf16.gmra.mrb[0].mxu0 %v592
      %v1205 = vpop.f32.mrb[0].mxu0
      %v1206 = vadd.f32 %v1109, %v1205
      %v1207 = vpop.f32.mrb[0].mxu0
      %v1208 = vpop.f32.mrb[0].mxu0
      %v1209 = vadd.f32 %v1112, %v1208
      %v1210 = vpop.f32.mrb[0].mxu0
      %1211 = vmatprep.mubr.bf16.mxu0 %v600
      %1212 = vmatmul.mubr.bf16.gmra.mrb[0].mxu0 %v599
      %v1213 = vpop.f32.mrb[0].mxu0
      %v1214 = vadd.f32 %v1117, %v1213
      %v1215 = vpop.f32.mrb[0].mxu0
      %v1216 = vpop.f32.mrb[0].mxu0
      %v1217 = vadd.f32 %v1120, %v1216
      %v1218 = vpop.f32.mrb[0].mxu0
      %1219 = vmatprep.mubr.bf16.mxu0 %v607
      %1220 = vmatmul.mubr.bf16.gmra.mrb[0].mxu0 %v606
      %v1221 = vpop.f32.mrb[0].mxu0
      %v1222 = vadd.f32 %v1125, %v1221
      %v1223 = vpop.f32.mrb[0].mxu0
      %v1224 = vpop.f32.mrb[0].mxu0
      %v1225 = vadd.f32 %v1128, %v1224
      %v1226 = vpop.f32.mrb[0].mxu0
      %1227 = vmatprep.mubr.bf16.mxu0 %v614
      %1228 = vmatmul.mubr.bf16.gmra.mrb[0].mxu0 %v613
      %v1229 = vpop.f32.mrb[0].mxu0
      %v1230 = vadd.f32 %v1133, %v1229
      %v1231 = vpop.f32.mrb[0].mxu0
      %v1232 = vpop.f32.mrb[0].mxu0
      %v1233 = vadd.f32 %v1136, %v1232
      %v1234 = vpop.f32.mrb[0].mxu0
      %1235 = vdwg.mxu0
      %1236 = vmatprep.subr.bf16.mxu0 0
      %1237 = vmatpush1.bf16.msra.mxu0 %v951
      %1238 = vmatprep.subr.bf16.mxu0 0
      %1239 = vmatpush1.bf16.msra.mxu0 %v952
      %1240 = vmatprep.subr.bf16.mxu0 0
      %1241 = vmatpush1.bf16.msra.mxu0 %v953
      %1242 = vmatprep.subr.bf16.mxu0 0
      %1243 = vmatpush1.bf16.msra.mxu0 %v954
      %1244 = vmatprep.subr.bf16.mxu0 0
      %1245 = vmatpush1.bf16.msra.mxu0 %v955
      %1246 = vmatprep.subr.bf16.mxu0 0
      %1247 = vmatpush1.bf16.msra.mxu0 %v956
      %1248 = vmatprep.subr.bf16.mxu0 0
      %1249 = vmatpush1.bf16.msra.mxu0 %v957
      %1250 = vmatprep.subr.bf16.mxu0 0
      %1251 = vmatpush1.bf16.msra.mxu0 %v958
      %1252 = vmatprep.subr.bf16.mxu0 0
      %1253 = vmatpush1.bf16.msra.mxu0 %v959
      %1254 = vmatprep.subr.bf16.mxu0 0
      %1255 = vmatpush1.bf16.msra.mxu0 %v960
      %1256 = vmatprep.subr.bf16.mxu0 0
      %1257 = vmatpush1.bf16.msra.mxu0 %v961
      %1258 = vmatprep.subr.bf16.mxu0 0
      %1259 = vmatpush1.bf16.msra.mxu0 %v962
      %1260 = vmatprep.subr.bf16.mxu0 0
      %1261 = vmatpush1.bf16.msra.mxu0 %v963
      %1262 = vmatprep.subr.bf16.mxu0 0
      %1263 = vmatpush1.bf16.msra.mxu0 %v964
      %1264 = vmatprep.subr.bf16.mxu0 0
      %1265 = vmatpush1.bf16.msra.mxu0 %v965
      %1266 = vmatprep.subr.bf16.mxu0 0
      %1267 = vmatpush1.bf16.msra.mxu0 %v966
      %1268 = vmatprep.mubr.bf16.mxu0 %v567
      %1269 = vmatmul.mubr.bf16.gmra.mrb[0].mxu0 %v566
      %v1270 = vpop.f32.mrb[0].mxu0
      %v1271 = vadd.f32 %v1174, %v1270
      %v1272 = vpop.f32.mrb[0].mxu0
      %v1273 = vpop.f32.mrb[0].mxu0
      %v1274 = vadd.f32 %v1177, %v1273
      %v1275 = vpop.f32.mrb[0].mxu0
      %1276 = vmatprep.mubr.bf16.mxu0 %v574
      %1277 = vmatmul.mubr.bf16.gmra.mrb[0].mxu0 %v573
      %v1278 = vpop.f32.mrb[0].mxu0
      %v1279 = vadd.f32 %v1182, %v1278
      %v1280 = vpop.f32.mrb[0].mxu0
      %v1281 = vpop.f32.mrb[0].mxu0
      %v1282 = vadd.f32 %v1185, %v1281
      %v1283 = vpop.f32.mrb[0].mxu0
      %1284 = vmatprep.mubr.bf16.mxu0 %v581
      %1285 = vmatmul.mubr.bf16.gmra.mrb[0].mxu0 %v580
      %v1286 = vpop.f32.mrb[0].mxu0
      %v1287 = vadd.f32 %v1190, %v1286
      %v1288 = vpop.f32.mrb[0].mxu0
      %v1289 = vpop.f32.mrb[0].mxu0
      %v1290 = vadd.f32 %v1193, %v1289
      %v1291 = vpop.f32.mrb[0].mxu0
      %1292 = vmatprep.mubr.bf16.mxu0 %v588
      %1293 = vmatmul.mubr.bf16.gmra.mrb[0].mxu0 %v587
      %v1294 = vpop.f32.mrb[0].mxu0
      %v1295 = vadd.f32 %v1198, %v1294
      %v1296 = vpop.f32.mrb[0].mxu0
      %v1297 = vpop.f32.mrb[0].mxu0
      %v1298 = vadd.f32 %v1201, %v1297
      %v1299 = vpop.f32.mrb[0].mxu0
      %1300 = vmatprep.mubr.bf16.mxu0 %v595
      %1301 = vmatmul.mubr.bf16.gmra.mrb[0].mxu0 %v594
      %v1302 = vpop.f32.mrb[0].mxu0
      %v1303 = vadd.f32 %v1206, %v1302
      %v1304 = vpop.f32.mrb[0].mxu0
      %v1305 = vpop.f32.mrb[0].mxu0
      %v1306 = vadd.f32 %v1209, %v1305
      %v1307 = vpop.f32.mrb[0].mxu0
      %1308 = vmatprep.mubr.bf16.mxu0 %v602
      %1309 = vmatmul.mubr.bf16.gmra.mrb[0].mxu0 %v601
      %v1310 = vpop.f32.mrb[0].mxu0
      %v1311 = vadd.f32 %v1214, %v1310
      %v1312 = vpop.f32.mrb[0].mxu0
      %v1313 = vpop.f32.mrb[0].mxu0
      %v1314 = vadd.f32 %v1217, %v1313
      %v1315 = vpop.f32.mrb[0].mxu0
      %1316 = vmatprep.mubr.bf16.mxu0 %v609
      %1317 = vmatmul.mubr.bf16.gmra.mrb[0].mxu0 %v608
      %v1318 = vpop.f32.mrb[0].mxu0
      %v1319 = vadd.f32 %v1222, %v1318
      %v1320 = vpop.f32.mrb[0].mxu0
      %v1321 = vpop.f32.mrb[0].mxu0
      %v1322 = vadd.f32 %v1225, %v1321
      %v1323 = vpop.f32.mrb[0].mxu0
      %1324 = vmatprep.mubr.bf16.mxu0 %v616
      %1325 = vmatmul.mubr.bf16.gmra.mrb[0].mxu0 %v615
      %v1326 = vpop.f32.mrb[0].mxu0
      %v1327 = vadd.f32 %v1230, %v1326
      %v1328 = vpop.f32.mrb[0].mxu0
      %v1329 = vpop.f32.mrb[0].mxu0
      %v1330 = vadd.f32 %v1233, %v1329
      %v1331 = vpop.f32.mrb[0].mxu0
      %1332 = vdwg.mxu0
      %1333 = vmatprep.subr.bf16.mxu0 0
      %1334 = vmatpush1.bf16.msra.mxu0 %v967
      %1335 = vmatprep.subr.bf16.mxu0 0
      %1336 = vmatpush1.bf16.msra.mxu0 0
      %1337 = vmatprep.subr.bf16.mxu0 0
      %1338 = vmatpush1.bf16.msra.mxu0 0
      %1339 = vmatprep.subr.bf16.mxu0 0
      %1340 = vmatpush1.bf16.msra.mxu0 0
      %1341 = vmatprep.subr.bf16.mxu0 0
      %1342 = vmatpush1.bf16.msra.mxu0 0
      %1343 = vmatprep.subr.bf16.mxu0 0
      %1344 = vmatpush1.bf16.msra.mxu0 0
      %1345 = vmatprep.subr.bf16.mxu0 0
      %1346 = vmatpush1.bf16.msra.mxu0 0
      %1347 = vmatprep.subr.bf16.mxu0 0
      %1348 = vmatpush1.bf16.msra.mxu0 0
      %1349 = vmatprep.subr.bf16.mxu0 0
      %1350 = vmatpush1.bf16.msra.mxu0 0
      %1351 = vmatprep.subr.bf16.mxu0 0
      %1352 = vmatpush1.bf16.msra.mxu0 0
      %1353 = vmatprep.subr.bf16.mxu0 0
      %1354 = vmatpush1.bf16.msra.mxu0 0
      %1355 = vmatprep.subr.bf16.mxu0 0
      %1356 = vmatpush1.bf16.msra.mxu0 0
      %1357 = vmatprep.subr.bf16.mxu0 0
      %1358 = vmatpush1.bf16.msra.mxu0 0
      %1359 = vmatprep.subr.bf16.mxu0 0
      %1360 = vmatpush1.bf16.msra.mxu0 0
      %1361 = vmatprep.subr.bf16.mxu0 0
      %1362 = vmatpush1.bf16.msra.mxu0 0
      %1363 = vmatprep.subr.bf16.mxu0 0
      %1364 = vmatpush1.bf16.msra.mxu0 0
      %1365 = vmatprep.mubr.bf16.mxu0 0
      %1366 = vmatmul.mubr.bf16.gmra.mrb[0].mxu0 %v1019
      %v1367 = vpop.f32.mrb[0].mxu0
      %v1368 = vadd.f32 %v1271, %v1367
      %v1369 = vpop.f32.mrb[0].mxu0
      %v1370 = vpop.f32.mrb[0].mxu0
      %v1371 = vadd.f32 %v1274, %v1370
      %v1372 = vpop.f32.mrb[0].mxu0
      %1373 = vmatprep.mubr.bf16.mxu0 0
      %1374 = vmatmul.mubr.bf16.gmra.mrb[0].mxu0 %v1022
      %v1375 = vpop.f32.mrb[0].mxu0
      %v1376 = vadd.f32 %v1279, %v1375
      %v1377 = vpop.f32.mrb[0].mxu0
      %v1378 = vpop.f32.mrb[0].mxu0
      %v1379 = vadd.f32 %v1282, %v1378
      %v1380 = vpop.f32.mrb[0].mxu0
      %1381 = vmatprep.mubr.bf16.mxu0 0
      %1382 = vmatmul.mubr.bf16.gmra.mrb[0].mxu0 %v1025
      %v1383 = vpop.f32.mrb[0].mxu0
      %v1384 = vadd.f32 %v1287, %v1383
      %v1385 = vpop.f32.mrb[0].mxu0
      %v1386 = vpop.f32.mrb[0].mxu0
      %v1387 = vadd.f32 %v1290, %v1386
      %v1388 = vpop.f32.mrb[0].mxu0
      %1389 = vmatprep.mubr.bf16.mxu0 0
      %1390 = vmatmul.mubr.bf16.gmra.mrb[0].mxu0 %v1028
      %v1391 = vpop.f32.mrb[0].mxu0
      %v1392 = vadd.f32 %v1295, %v1391
      %v1393 = vpop.f32.mrb[0].mxu0
      %v1394 = vpop.f32.mrb[0].mxu0
      %v1395 = vadd.f32 %v1298, %v1394
      %v1396 = vpop.f32.mrb[0].mxu0
      %1397 = vmatprep.mubr.bf16.mxu0 0
      %1398 = vmatmul.mubr.bf16.gmra.mrb[0].mxu0 %v1031
      %v1399 = vpop.f32.mrb[0].mxu0
      %v1400 = vadd.f32 %v1303, %v1399
      %v1401 = vpop.f32.mrb[0].mxu0
      %v1402 = vpop.f32.mrb[0].mxu0
      %v1403 = vadd.f32 %v1306, %v1402
      %v1404 = vpop.f32.mrb[0].mxu0
      %1405 = vmatprep.mubr.bf16.mxu0 0
      %1406 = vmatmul.mubr.bf16.gmra.mrb[0].mxu0 %v1034
      %v1407 = vpop.f32.mrb[0].mxu0
      %v1408 = vadd.f32 %v1311, %v1407
      %v1409 = vpop.f32.mrb[0].mxu0
      %v1410 = vpop.f32.mrb[0].mxu0
      %v1411 = vadd.f32 %v1314, %v1410
      %v1412 = vpop.f32.mrb[0].mxu0
      %1413 = vmatprep.mubr.bf16.mxu0 0
      %1414 = vmatmul.mubr.bf16.gmra.mrb[0].mxu0 %v1037
      %v1415 = vpop.f32.mrb[0].mxu0
      %v1416 = vadd.f32 %v1319, %v1415
      %v1417 = vpop.f32.mrb[0].mxu0
      %v1418 = vpop.f32.mrb[0].mxu0
      %v1419 = vadd.f32 %v1322, %v1418
      %v1420 = vpop.f32.mrb[0].mxu0
      %1421 = vmatprep.mubr.bf16.mxu0 0
      %1422 = vmatmul.mubr.bf16.gmra.mrb[0].mxu0 %v1040
      %v1423 = vpop.f32.mrb[0].mxu0
      %v1424 = vadd.f32 %v1327, %v1423
      %v1425 = vpop.f32.mrb[0].mxu0
      %v1426 = vpop.f32.mrb[0].mxu0
      %v1427 = vadd.f32 %v1330, %v1426
      %v1428 = vpop.f32.mrb[0].mxu0
      %1429 = vdwg.mxu0
      %v1430 = vmax.f32 %v1368, 0.0
      %v1431 = vmax.f32 %v1371, 0.0
      %v1432 = vmax.f32 %v1376, 0.0
      %v1433 = vmax.f32 %v1379, 0.0
      %v1434 = vmax.f32 %v1384, 0.0
      %v1435 = vmax.f32 %v1387, 0.0
      %v1436 = vmax.f32 %v1392, 0.0
      %v1437 = vmax.f32 %v1395, 0.0
      %v1438 = vmax.f32 %v1400, 0.0
      %v1439 = vmax.f32 %v1403, 0.0
      %v1440 = vmax.f32 %v1408, 0.0
      %v1441 = vmax.f32 %v1411, 0.0
      %v1442 = vmax.f32 %v1416, 0.0
      %v1443 = vmax.f32 %v1419, 0.0
      %v1444 = vmax.f32 %v1424, 0.0
      %v1445 = vmax.f32 %v1427, 0.0
      %v1446 = vpack.c.bf16 %v1431, %v1430
      %v1447 = vpack.c.bf16 %v1433, %v1432
      %v1448 = vpack.c.bf16 %v1435, %v1434
      %v1449 = vpack.c.bf16 %v1437, %v1436
      %v1450 = vpack.c.bf16 %v1439, %v1438
      %v1451 = vpack.c.bf16 %v1441, %v1440
      %v1452 = vpack.c.bf16 %v1443, %v1442
      %v1453 = vpack.c.bf16 %v1445, %v1444
      %v1454 = vld [vmem:[%s3] sm:$0xf]
      %v1455 = vld [vmem:[%s3 + $0x4] sm:$0xf]
      %v1456 = vld [vmem:[%s3 + $0x8] sm:$0xf]
      %v1457 = vld [vmem:[%s3 + $0xc] sm:$0xf]
      %v1458 = vld [vmem:[%s3 + $0x10] sm:$0xf]
      %v1459 = vld [vmem:[%s3 + $0x14] sm:$0xf]
      %v1460 = vld [vmem:[%s3 + $0x18] sm:$0xf]
      %v1461 = vld [vmem:[%s3 + $0x1c] sm:$0xf]
      %v1462 = vld [vmem:[%s3 + $0x20] sm:$0xf]
      %v1463 = vld [vmem:[%s3 + $0x24] sm:$0xf]
      %v1464 = vld [vmem:[%s3 + $0x28] sm:$0xf]
      %v1465 = vld [vmem:[%s3 + $0x2c] sm:$0xf]
      %v1466 = vld [vmem:[%s3 + $0x30] sm:$0xf]
      %v1467 = vld [vmem:[%s3 + $0x34] sm:$0xf]
      %v1468 = vld [vmem:[%s3 + $0x38] sm:$0xf]
      %v1469 = vld [vmem:[%s3 + $0x3c] sm:$0xf]
      %v1470 = vld [vmem:[%s4] sm:$0x1]
      %v1472 = vlaneseq
      %v1473 = vshrl.u32 %v1472, 7
      %v1474 = vsub.s32 0, %v1473
      %v1475 = vrot.slane %v1470, %v1474
      %v1493 = vunpack.c.l.b16 %v1454
      %v1494 = vunpack.c.l.b16 %v1455
      %v1495 = vunpack.c.l.b16 %v1456
      %v1496 = vunpack.c.l.b16 %v1457
      %v1497 = vunpack.c.l.b16 %v1458
      %v1498 = vunpack.c.l.b16 %v1459
      %v1499 = vunpack.c.l.b16 %v1460
      %v1500 = vunpack.c.l.b16 %v1461
      %v1501 = vunpack.c.l.b16 %v1462
      %v1502 = vunpack.c.l.b16 %v1463
      %v1503 = vunpack.c.l.b16 %v1464
      %v1504 = vunpack.c.l.b16 %v1465
      %v1505 = vunpack.c.l.b16 %v1466
      %v1506 = vunpack.c.l.b16 %v1467
      %v1507 = vunpack.c.l.b16 %v1468
      %v1508 = vunpack.c.l.b16 %v1469
      %v1509 = vpack.c.b16 %v1494, %v1493
      %v1510 = vpack.c.b16 %v1496, %v1495
      %v1511 = vpack.c.b16 %v1498, %v1497
      %v1512 = vpack.c.b16 %v1500, %v1499
      %v1513 = vpack.c.b16 %v1502, %v1501
      %v1514 = vpack.c.b16 %v1504, %v1503
      %v1515 = vpack.c.b16 %v1506, %v1505
      %v1516 = vpack.c.b16 %v1508, %v1507
      %1525 = vmatprep.subr.bf16.mxu0 0
      %1526 = vmatpush1.bf16.msra.mxu0 %v1509
      %1527 = vmatprep.subr.bf16.mxu0 0
      %1528 = vmatpush1.bf16.msra.mxu0 %v1510
      %1529 = vmatprep.subr.bf16.mxu0 0
      %1530 = vmatpush1.bf16.msra.mxu0 %v1511
      %1531 = vmatprep.subr.bf16.mxu0 0
      %1532 = vmatpush1.bf16.msra.mxu0 %v1512
      %1533 = vmatprep.subr.bf16.mxu0 0
      %1534 = vmatpush1.bf16.msra.mxu0 %v1513
      %1535 = vmatprep.subr.bf16.mxu0 0
      %1536 = vmatpush1.bf16.msra.mxu0 %v1514
      %1537 = vmatprep.subr.bf16.mxu0 0
      %1538 = vmatpush1.bf16.msra.mxu0 %v1515
      %1539 = vmatprep.subr.bf16.mxu0 0
      %1540 = vmatpush1.bf16.msra.mxu0 %v1516
      %1541 = vmatprep.subr.bf16.mxu0 0
      %1542 = vmatpush1.bf16.msra.mxu0 0
      %1543 = vmatprep.subr.bf16.mxu0 0
      %1544 = vmatpush1.bf16.msra.mxu0 0
      %1545 = vmatprep.subr.bf16.mxu0 0
      %1546 = vmatpush1.bf16.msra.mxu0 0
      %1547 = vmatprep.subr.bf16.mxu0 0
      %1548 = vmatpush1.bf16.msra.mxu0 0
      %1549 = vmatprep.subr.bf16.mxu0 0
      %1550 = vmatpush1.bf16.msra.mxu0 0
      %1551 = vmatprep.subr.bf16.mxu0 0
      %1552 = vmatpush1.bf16.msra.mxu0 0
      %1553 = vmatprep.subr.bf16.mxu0 0
      %1554 = vmatpush1.bf16.msra.mxu0 0
      %1555 = vmatprep.subr.bf16.mxu0 0
      %1556 = vmatpush1.bf16.msra.mxu0 0
      %1557 = vmatprep.mubr.bf16.mxu0 0
      %1558 = vmatmul.mubr.bf16.gmra.mrb[0].mxu0 %v1446
      %v1559 = vpop.f32.mrb[0].mxu0
      %v1560 = vadd.f32 %v1475, %v1559
      %v1561 = vpop.f32.mrb[0].mxu0
      %v1562 = vpop.f32.mrb[0].mxu0
      %v1563 = vadd.f32 %v1475, %v1562
      %v1564 = vpop.f32.mrb[0].mxu0
      %1565 = vmatprep.mubr.bf16.mxu0 0
      %1566 = vmatmul.mubr.bf16.gmra.mrb[0].mxu0 %v1447
      %v1567 = vpop.f32.mrb[0].mxu0
      %v1568 = vadd.f32 %v1475, %v1567
      %v1569 = vpop.f32.mrb[0].mxu0
      %v1570 = vpop.f32.mrb[0].mxu0
      %v1571 = vadd.f32 %v1475, %v1570
      %v1572 = vpop.f32.mrb[0].mxu0
      %1573 = vmatprep.mubr.bf16.mxu0 0
      %1574 = vmatmul.mubr.bf16.gmra.mrb[0].mxu0 %v1448
      %v1575 = vpop.f32.mrb[0].mxu0
      %v1576 = vadd.f32 %v1475, %v1575
      %v1577 = vpop.f32.mrb[0].mxu0
      %v1578 = vpop.f32.mrb[0].mxu0
      %v1579 = vadd.f32 %v1475, %v1578
      %v1580 = vpop.f32.mrb[0].mxu0
      %1581 = vmatprep.mubr.bf16.mxu0 0
      %1582 = vmatmul.mubr.bf16.gmra.mrb[0].mxu0 %v1449
      %v1583 = vpop.f32.mrb[0].mxu0
      %v1584 = vadd.f32 %v1475, %v1583
      %v1585 = vpop.f32.mrb[0].mxu0
      %v1586 = vpop.f32.mrb[0].mxu0
      %v1587 = vadd.f32 %v1475, %v1586
      %v1588 = vpop.f32.mrb[0].mxu0
      %1589 = vmatprep.mubr.bf16.mxu0 0
      %1590 = vmatmul.mubr.bf16.gmra.mrb[0].mxu0 %v1450
      %v1591 = vpop.f32.mrb[0].mxu0
      %v1592 = vadd.f32 %v1475, %v1591
      %v1593 = vpop.f32.mrb[0].mxu0
      %v1594 = vpop.f32.mrb[0].mxu0
      %v1595 = vadd.f32 %v1475, %v1594
      %v1596 = vpop.f32.mrb[0].mxu0
      %1597 = vmatprep.mubr.bf16.mxu0 0
      %1598 = vmatmul.mubr.bf16.gmra.mrb[0].mxu0 %v1451
      %v1599 = vpop.f32.mrb[0].mxu0
      %v1600 = vadd.f32 %v1475, %v1599
      %v1601 = vpop.f32.mrb[0].mxu0
      %v1602 = vpop.f32.mrb[0].mxu0
      %v1603 = vadd.f32 %v1475, %v1602
      %v1604 = vpop.f32.mrb[0].mxu0
      %1605 = vmatprep.mubr.bf16.mxu0 0
      %1606 = vmatmul.mubr.bf16.gmra.mrb[0].mxu0 %v1452
      %v1607 = vpop.f32.mrb[0].mxu0
      %v1608 = vadd.f32 %v1475, %v1607
      %v1609 = vpop.f32.mrb[0].mxu0
      %v1610 = vpop.f32.mrb[0].mxu0
      %v1611 = vadd.f32 %v1475, %v1610
      %v1612 = vpop.f32.mrb[0].mxu0
      %1613 = vmatprep.mubr.bf16.mxu0 0
      %1614 = vmatmul.mubr.bf16.gmra.mrb[0].mxu0 %v1453
      %v1615 = vpop.f32.mrb[0].mxu0
      %v1616 = vadd.f32 %v1475, %v1615
      %v1617 = vpop.f32.mrb[0].mxu0
      %v1618 = vpop.f32.mrb[0].mxu0
      %v1619 = vadd.f32 %v1475, %v1618
      %v1620 = vpop.f32.mrb[0].mxu0
      %1621 = vdwg.mxu0
      %v1622 = vmax.f32 %v1560, 0.0
      %v1623 = vmax.f32 %v1563, 0.0
      %v1624 = vmax.f32 %v1568, 0.0
      %v1625 = vmax.f32 %v1571, 0.0
      %v1626 = vmax.f32 %v1576, 0.0
      %v1627 = vmax.f32 %v1579, 0.0
      %v1628 = vmax.f32 %v1584, 0.0
      %v1629 = vmax.f32 %v1587, 0.0
      %v1630 = vmax.f32 %v1592, 0.0
      %v1631 = vmax.f32 %v1595, 0.0
      %v1632 = vmax.f32 %v1600, 0.0
      %v1633 = vmax.f32 %v1603, 0.0
      %v1634 = vmax.f32 %v1608, 0.0
      %v1635 = vmax.f32 %v1611, 0.0
      %v1636 = vmax.f32 %v1616, 0.0
      %v1637 = vmax.f32 %v1619, 0.0
      %v1638 = vpack.c.bf16 %v1623, %v1622
      %v1639 = vpack.c.bf16 %v1625, %v1624
      %v1640 = vpack.c.bf16 %v1627, %v1626
      %v1641 = vpack.c.bf16 %v1629, %v1628
      %v1642 = vpack.c.bf16 %v1631, %v1630
      %v1643 = vpack.c.bf16 %v1633, %v1632
      %v1644 = vpack.c.bf16 %v1635, %v1634
      %v1645 = vpack.c.bf16 %v1637, %v1636
      %v1646 = vld [vmem:[%s5] sm:$0xf]
      %v1647 = vld [vmem:[%s5 + $0x4] sm:$0xf]
      %v1648 = vld [vmem:[%s5 + $0x8] sm:$0xf]
      %v1649 = vld [vmem:[%s5 + $0xc] sm:$0xf]
      %v1650 = vld [vmem:[%s5 + $0x10] sm:$0xf]
      %v1651 = vld [vmem:[%s5 + $0x14] sm:$0xf]
      %v1652 = vld [vmem:[%s5 + $0x18] sm:$0xf]
      %v1653 = vld [vmem:[%s5 + $0x1c] sm:$0xf]
      %v1654 = vld [vmem:[%s6] sm:$0x1]
      %v1656 = vlaneseq
      %v1657 = vshrl.u32 %v1656, 7
      %v1658 = vsub.s32 0, %v1657
      %v1659 = vrot.slane %v1654, %v1658
      %v1669 = vunpack.c.l.b16 %v1646
      %v1670 = vunpack.c.l.b16 %v1647
      %v1671 = vunpack.c.l.b16 %v1648
      %v1672 = vunpack.c.l.b16 %v1649
      %v1673 = vunpack.c.l.b16 %v1650
      %v1674 = vunpack.c.l.b16 %v1651
      %v1675 = vunpack.c.l.b16 %v1652
      %v1676 = vunpack.c.l.b16 %v1653
      %v1677 = vpack.c.b16 %v1670, %v1669
      %v1678 = vpack.c.b16 %v1672, %v1671
      %v1679 = vpack.c.b16 %v1674, %v1673
      %v1680 = vpack.c.b16 %v1676, %v1675
      %vm1685 = vcmask 523264
      %v1687 = vsel %vm1685, %v1638, 0
      %v1690 = vsel %vm1685, %v1639, 0
      %v1693 = vsel %vm1685, %v1640, 0
      %v1696 = vsel %vm1685, %v1641, 0
      %v1699 = vsel %vm1685, %v1642, 0
      %v1702 = vsel %vm1685, %v1643, 0
      %v1705 = vsel %vm1685, %v1644, 0
      %v1708 = vsel %vm1685, %v1645, 0
      %1710 = vmatprep.subr.bf16.mxu0 0
      %1711 = vmatpush1.bf16.msra.mxu0 %v1677
      %1712 = vmatprep.subr.bf16.mxu0 0
      %1713 = vmatpush1.bf16.msra.mxu0 %v1678
      %1714 = vmatprep.subr.bf16.mxu0 0
      %1715 = vmatpush1.bf16.msra.mxu0 %v1679
      %1716 = vmatprep.subr.bf16.mxu0 0
      %1717 = vmatpush1.bf16.msra.mxu0 %v1680
      %1718 = vmatprep.subr.bf16.mxu0 0
      %1719 = vmatpush1.bf16.msra.mxu0 0
      %1720 = vmatprep.subr.bf16.mxu0 0
      %1721 = vmatpush1.bf16.msra.mxu0 0
      %1722 = vmatprep.subr.bf16.mxu0 0
      %1723 = vmatpush1.bf16.msra.mxu0 0
      %1724 = vmatprep.subr.bf16.mxu0 0
      %1725 = vmatpush1.bf16.msra.mxu0 0
      %1726 = vmatprep.subr.bf16.mxu0 0
      %1727 = vmatpush1.bf16.msra.mxu0 0
      %1728 = vmatprep.subr.bf16.mxu0 0
      %1729 = vmatpush1.bf16.msra.mxu0 0
      %1730 = vmatprep.subr.bf16.mxu0 0
      %1731 = vmatpush1.bf16.msra.mxu0 0
      %1732 = vmatprep.subr.bf16.mxu0 0
      %1733 = vmatpush1.bf16.msra.mxu0 0
      %1734 = vmatprep.subr.bf16.mxu0 0
      %1735 = vmatpush1.bf16.msra.mxu0 0
      %1736 = vmatprep.subr.bf16.mxu0 0
      %1737 = vmatpush1.bf16.msra.mxu0 0
      %1738 = vmatprep.subr.bf16.mxu0 0
      %1739 = vmatpush1.bf16.msra.mxu0 0
      %1740 = vmatprep.subr.bf16.mxu0 0
      %1741 = vmatpush1.bf16.msra.mxu0 0
      %1742 = vmatprep.mubr.bf16.mxu0 0
      %1743 = vmatmul.mubr.bf16.gmra.mrb[0].mxu0 %v1687
      %v1744 = vpop.f32.mrb[0].mxu0
      %v1745 = vadd.f32 %v1659, %v1744
      %v1746 = vpop.f32.mrb[0].mxu0
      %v1747 = vpop.f32.mrb[0].mxu0
      %v1748 = vadd.f32 %v1659, %v1747
      %v1749 = vpop.f32.mrb[0].mxu0
      %1750 = vmatprep.mubr.bf16.mxu0 0
      %1751 = vmatmul.mubr.bf16.gmra.mrb[0].mxu0 %v1690
      %v1752 = vpop.f32.mrb[0].mxu0
      %v1753 = vadd.f32 %v1659, %v1752
      %v1754 = vpop.f32.mrb[0].mxu0
      %v1755 = vpop.f32.mrb[0].mxu0
      %v1756 = vadd.f32 %v1659, %v1755
      %v1757 = vpop.f32.mrb[0].mxu0
      %1758 = vmatprep.mubr.bf16.mxu0 0
      %1759 = vmatmul.mubr.bf16.gmra.mrb[0].mxu0 %v1693
      %v1760 = vpop.f32.mrb[0].mxu0
      %v1761 = vadd.f32 %v1659, %v1760
      %v1762 = vpop.f32.mrb[0].mxu0
      %v1763 = vpop.f32.mrb[0].mxu0
      %v1764 = vadd.f32 %v1659, %v1763
      %v1765 = vpop.f32.mrb[0].mxu0
      %1766 = vmatprep.mubr.bf16.mxu0 0
      %1767 = vmatmul.mubr.bf16.gmra.mrb[0].mxu0 %v1696
      %v1768 = vpop.f32.mrb[0].mxu0
      %v1769 = vadd.f32 %v1659, %v1768
      %v1770 = vpop.f32.mrb[0].mxu0
      %v1771 = vpop.f32.mrb[0].mxu0
      %v1772 = vadd.f32 %v1659, %v1771
      %v1773 = vpop.f32.mrb[0].mxu0
      %1774 = vmatprep.mubr.bf16.mxu0 0
      %1775 = vmatmul.mubr.bf16.gmra.mrb[0].mxu0 %v1699
      %v1776 = vpop.f32.mrb[0].mxu0
      %v1777 = vadd.f32 %v1659, %v1776
      %v1778 = vpop.f32.mrb[0].mxu0
      %v1779 = vpop.f32.mrb[0].mxu0
      %v1780 = vadd.f32 %v1659, %v1779
      %v1781 = vpop.f32.mrb[0].mxu0
      %1782 = vmatprep.mubr.bf16.mxu0 0
      %1783 = vmatmul.mubr.bf16.gmra.mrb[0].mxu0 %v1702
      %v1784 = vpop.f32.mrb[0].mxu0
      %v1785 = vadd.f32 %v1659, %v1784
      %v1786 = vpop.f32.mrb[0].mxu0
      %v1787 = vpop.f32.mrb[0].mxu0
      %v1788 = vadd.f32 %v1659, %v1787
      %v1789 = vpop.f32.mrb[0].mxu0
      %1790 = vmatprep.mubr.bf16.mxu0 0
      %1791 = vmatmul.mubr.bf16.gmra.mrb[0].mxu0 %v1705
      %v1792 = vpop.f32.mrb[0].mxu0
      %v1793 = vadd.f32 %v1659, %v1792
      %v1794 = vpop.f32.mrb[0].mxu0
      %v1795 = vpop.f32.mrb[0].mxu0
      %v1796 = vadd.f32 %v1659, %v1795
      %v1797 = vpop.f32.mrb[0].mxu0
      %1798 = vmatprep.mubr.bf16.mxu0 0
      %1799 = vmatmul.mubr.bf16.gmra.mrb[0].mxu0 %v1708
      %v1800 = vpop.f32.mrb[0].mxu0
      %v1801 = vadd.f32 %v1659, %v1800
      %v1802 = vpop.f32.mrb[0].mxu0
      %v1803 = vpop.f32.mrb[0].mxu0
      %v1804 = vadd.f32 %v1659, %v1803
      %v1805 = vpop.f32.mrb[0].mxu0
      %1806 = vdwg.mxu0
      %v1807 = vpack.c.bf16 %v1748, %v1745
      %v1808 = vpack.c.bf16 %v1756, %v1753
      %v1809 = vpack.c.bf16 %v1764, %v1761
      %v1810 = vpack.c.bf16 %v1772, %v1769
      %v1811 = vpack.c.bf16 %v1780, %v1777
      %v1812 = vpack.c.bf16 %v1788, %v1785
      %v1813 = vpack.c.bf16 %v1796, %v1793
      %v1814 = vpack.c.bf16 %v1804, %v1801
      %v1815 = vld [vmem:[%s7] sm:$0xf]
      %v1816 = vld [vmem:[%s7 + $0x4] sm:$0xf]
      %v1817 = vld [vmem:[%s7 + $0x8] sm:$0xf]
      %v1818 = vld [vmem:[%s7 + $0xc] sm:$0xf]
      %v1819 = vld [vmem:[%s8] sm:$0x1]
      %v1821 = vlaneseq
      %v1822 = vshrl.u32 %v1821, 7
      %v1823 = vsub.s32 0, %v1822
      %v1824 = vrot.slane %v1819, %v1823
      %v1830 = vunpack.c.l.b16 %v1815
      %v1831 = vunpack.c.l.b16 %v1816
      %v1832 = vunpack.c.l.b16 %v1817
      %v1833 = vunpack.c.l.b16 %v1818
      %v1834 = vpack.c.b16 %v1831, %v1830
      %v1835 = vpack.c.b16 %v1833, %v1832
      %vm1838 = vcmask 261120
      %v1840 = vsel %vm1838, %v1807, 0
      %v1843 = vsel %vm1838, %v1808, 0
      %v1846 = vsel %vm1838, %v1809, 0
      %v1849 = vsel %vm1838, %v1810, 0
      %v1852 = vsel %vm1838, %v1811, 0
      %v1855 = vsel %vm1838, %v1812, 0
      %v1858 = vsel %vm1838, %v1813, 0
      %v1861 = vsel %vm1838, %v1814, 0
      %1863 = vmatprep.subr.bf16.mxu0 0
      %1864 = vmatpush1.bf16.msra.mxu0 %v1834
      %1865 = vmatprep.subr.bf16.mxu0 0
      %1866 = vmatpush1.bf16.msra.mxu0 %v1835
      %1867 = vmatprep.subr.bf16.mxu0 0
      %1868 = vmatpush1.bf16.msra.mxu0 0
      %1869 = vmatprep.subr.bf16.mxu0 0
      %1870 = vmatpush1.bf16.msra.mxu0 0
      %1871 = vmatprep.subr.bf16.mxu0 0
      %1872 = vmatpush1.bf16.msra.mxu0 0
      %1873 = vmatprep.subr.bf16.mxu0 0
      %1874 = vmatpush1.bf16.msra.mxu0 0
      %1875 = vmatprep.subr.bf16.mxu0 0
      %1876 = vmatpush1.bf16.msra.mxu0 0
      %1877 = vmatprep.subr.bf16.mxu0 0
      %1878 = vmatpush1.bf16.msra.mxu0 0
      %1879 = vmatprep.subr.bf16.mxu0 0
      %1880 = vmatpush1.bf16.msra.mxu0 0
      %1881 = vmatprep.subr.bf16.mxu0 0
      %1882 = vmatpush1.bf16.msra.mxu0 0
      %1883 = vmatprep.subr.bf16.mxu0 0
      %1884 = vmatpush1.bf16.msra.mxu0 0
      %1885 = vmatprep.subr.bf16.mxu0 0
      %1886 = vmatpush1.bf16.msra.mxu0 0
      %1887 = vmatprep.subr.bf16.mxu0 0
      %1888 = vmatpush1.bf16.msra.mxu0 0
      %1889 = vmatprep.subr.bf16.mxu0 0
      %1890 = vmatpush1.bf16.msra.mxu0 0
      %1891 = vmatprep.subr.bf16.mxu0 0
      %1892 = vmatpush1.bf16.msra.mxu0 0
      %1893 = vmatprep.subr.bf16.mxu0 0
      %1894 = vmatpush1.bf16.msra.mxu0 0
      %1895 = vmatprep.mubr.bf16.mxu0 0
      %1896 = vmatmul.mubr.bf16.gmra.mrb[0].mxu0 %v1840
      %v1897 = vpop.f32.mrb[0].mxu0
      %v1898 = vadd.f32 %v1824, %v1897
      %v1899 = vpop.f32.mrb[0].mxu0
      %v1900 = vpop.f32.mrb[0].mxu0
      %v1901 = vadd.f32 %v1824, %v1900
      %v1902 = vpop.f32.mrb[0].mxu0
      %1903 = vmatprep.mubr.bf16.mxu0 0
      %1904 = vmatmul.mubr.bf16.gmra.mrb[0].mxu0 %v1843
      %v1905 = vpop.f32.mrb[0].mxu0
      %v1906 = vadd.f32 %v1824, %v1905
      %v1907 = vpop.f32.mrb[0].mxu0
      %v1908 = vpop.f32.mrb[0].mxu0
      %v1909 = vadd.f32 %v1824, %v1908
      %v1910 = vpop.f32.mrb[0].mxu0
      %1911 = vmatprep.mubr.bf16.mxu0 0
      %1912 = vmatmul.mubr.bf16.gmra.mrb[0].mxu0 %v1846
      %v1913 = vpop.f32.mrb[0].mxu0
      %v1914 = vadd.f32 %v1824, %v1913
      %v1915 = vpop.f32.mrb[0].mxu0
      %v1916 = vpop.f32.mrb[0].mxu0
      %v1917 = vadd.f32 %v1824, %v1916
      %v1918 = vpop.f32.mrb[0].mxu0
      %1919 = vmatprep.mubr.bf16.mxu0 0
      %1920 = vmatmul.mubr.bf16.gmra.mrb[0].mxu0 %v1849
      %v1921 = vpop.f32.mrb[0].mxu0
      %v1922 = vadd.f32 %v1824, %v1921
      %v1923 = vpop.f32.mrb[0].mxu0
      %v1924 = vpop.f32.mrb[0].mxu0
      %v1925 = vadd.f32 %v1824, %v1924
      %v1926 = vpop.f32.mrb[0].mxu0
      %1927 = vmatprep.mubr.bf16.mxu0 0
      %1928 = vmatmul.mubr.bf16.gmra.mrb[0].mxu0 %v1852
      %v1929 = vpop.f32.mrb[0].mxu0
      %v1930 = vadd.f32 %v1824, %v1929
      %v1931 = vpop.f32.mrb[0].mxu0
      %v1932 = vpop.f32.mrb[0].mxu0
      %v1933 = vadd.f32 %v1824, %v1932
      %v1934 = vpop.f32.mrb[0].mxu0
      %1935 = vmatprep.mubr.bf16.mxu0 0
      %1936 = vmatmul.mubr.bf16.gmra.mrb[0].mxu0 %v1855
      %v1937 = vpop.f32.mrb[0].mxu0
      %v1938 = vadd.f32 %v1824, %v1937
      %v1939 = vpop.f32.mrb[0].mxu0
      %v1940 = vpop.f32.mrb[0].mxu0
      %v1941 = vadd.f32 %v1824, %v1940
      %v1942 = vpop.f32.mrb[0].mxu0
      %1943 = vmatprep.mubr.bf16.mxu0 0
      %1944 = vmatmul.mubr.bf16.gmra.mrb[0].mxu0 %v1858
      %v1945 = vpop.f32.mrb[0].mxu0
      %v1946 = vadd.f32 %v1824, %v1945
      %v1947 = vpop.f32.mrb[0].mxu0
      %v1948 = vpop.f32.mrb[0].mxu0
      %v1949 = vadd.f32 %v1824, %v1948
      %v1950 = vpop.f32.mrb[0].mxu0
      %1951 = vmatprep.mubr.bf16.mxu0 0
      %1952 = vmatmul.mubr.bf16.gmra.mrb[0].mxu0 %v1861
      %v1953 = vpop.f32.mrb[0].mxu0
      %v1954 = vadd.f32 %v1824, %v1953
      %v1955 = vpop.f32.mrb[0].mxu0
      %v1956 = vpop.f32.mrb[0].mxu0
      %v1957 = vadd.f32 %v1824, %v1956
      %v1958 = vpop.f32.mrb[0].mxu0
      %1959 = vdwg.mxu0
      %v1960 = vmax.f32 %v1898, 0.0
      %v1961 = vmax.f32 %v1901, 0.0
      %v1962 = vmax.f32 %v1906, 0.0
      %v1963 = vmax.f32 %v1909, 0.0
      %v1964 = vmax.f32 %v1914, 0.0
      %v1965 = vmax.f32 %v1917, 0.0
      %v1966 = vmax.f32 %v1922, 0.0
      %v1967 = vmax.f32 %v1925, 0.0
      %v1968 = vmax.f32 %v1930, 0.0
      %v1969 = vmax.f32 %v1933, 0.0
      %v1970 = vmax.f32 %v1938, 0.0
      %v1971 = vmax.f32 %v1941, 0.0
      %v1972 = vmax.f32 %v1946, 0.0
      %v1973 = vmax.f32 %v1949, 0.0
      %v1974 = vmax.f32 %v1954, 0.0
      %v1975 = vmax.f32 %v1957, 0.0
      %v1976 = vpack.c.bf16 %v1961, %v1960
      %v1977 = vpack.c.bf16 %v1963, %v1962
      %v1978 = vpack.c.bf16 %v1965, %v1964
      %v1979 = vpack.c.bf16 %v1967, %v1966
      %v1980 = vpack.c.bf16 %v1969, %v1968
      %v1981 = vpack.c.bf16 %v1971, %v1970
      %v1982 = vpack.c.bf16 %v1973, %v1972
      %v1983 = vpack.c.bf16 %v1975, %v1974
      %v1984 = vld [vmem:[%s9] sm:$0xf]
      %v1985 = vld [vmem:[%s9 + $0x4] sm:$0xf]
      %v1986 = vld [vmem:[%s9 + $0x8] sm:$0xf]
      %v1987 = vld [vmem:[%s9 + $0xc] sm:$0xf]
      %v1988 = vld [vmem:[%s9 + $0x10] sm:$0xf]
      %v1989 = vld [vmem:[%s9 + $0x14] sm:$0xf]
      %v1990 = vld [vmem:[%s9 + $0x18] sm:$0xf]
      %v1991 = vld [vmem:[%s9 + $0x1c] sm:$0xf]
      %v1992 = vld [vmem:[%s10] sm:$0x1]
      %v1994 = vlaneseq
      %v1995 = vshrl.u32 %v1994, 7
      %v1996 = vsub.s32 0, %v1995
      %v1997 = vrot.slane %v1992, %v1996
      %v2007 = vunpack.c.l.b16 %v1984
      %v2008 = vunpack.c.l.b16 %v1985
      %v2009 = vunpack.c.l.b16 %v1986
      %v2010 = vunpack.c.l.b16 %v1987
      %v2011 = vunpack.c.l.b16 %v1988
      %v2012 = vunpack.c.l.b16 %v1989
      %v2013 = vunpack.c.l.b16 %v1990
      %v2014 = vunpack.c.l.b16 %v1991
      %v2015 = vpack.c.b16 %v2008, %v2007
      %v2016 = vpack.c.b16 %v2010, %v2009
      %v2017 = vpack.c.b16 %v2012, %v2011
      %v2018 = vpack.c.b16 %v2014, %v2013
      %v2024 = vsel %vm1685, %v1976, 0
      %v2027 = vsel %vm1685, %v1977, 0
      %v2030 = vsel %vm1685, %v1978, 0
      %v2033 = vsel %vm1685, %v1979, 0
      %v2036 = vsel %vm1685, %v1980, 0
      %v2039 = vsel %vm1685, %v1981, 0
      %v2042 = vsel %vm1685, %v1982, 0
      %v2045 = vsel %vm1685, %v1983, 0
      %2047 = vmatprep.subr.bf16.mxu0 0
      %2048 = vmatpush1.bf16.msra.mxu0 %v2015
      %2049 = vmatprep.subr.bf16.mxu0 0
      %2050 = vmatpush1.bf16.msra.mxu0 %v2016
      %2051 = vmatprep.subr.bf16.mxu0 0
      %2052 = vmatpush1.bf16.msra.mxu0 %v2017
      %2053 = vmatprep.subr.bf16.mxu0 0
      %2054 = vmatpush1.bf16.msra.mxu0 %v2018
      %2055 = vmatprep.subr.bf16.mxu0 0
      %2056 = vmatpush1.bf16.msra.mxu0 0
      %2057 = vmatprep.subr.bf16.mxu0 0
      %2058 = vmatpush1.bf16.msra.mxu0 0
      %2059 = vmatprep.subr.bf16.mxu0 0
      %2060 = vmatpush1.bf16.msra.mxu0 0
      %2061 = vmatprep.subr.bf16.mxu0 0
      %2062 = vmatpush1.bf16.msra.mxu0 0
      %2063 = vmatprep.subr.bf16.mxu0 0
      %2064 = vmatpush1.bf16.msra.mxu0 0
      %2065 = vmatprep.subr.bf16.mxu0 0
      %2066 = vmatpush1.bf16.msra.mxu0 0
      %2067 = vmatprep.subr.bf16.mxu0 0
      %2068 = vmatpush1.bf16.msra.mxu0 0
      %2069 = vmatprep.subr.bf16.mxu0 0
      %2070 = vmatpush1.bf16.msra.mxu0 0
      %2071 = vmatprep.subr.bf16.mxu0 0
      %2072 = vmatpush1.bf16.msra.mxu0 0
      %2073 = vmatprep.subr.bf16.mxu0 0
      %2074 = vmatpush1.bf16.msra.mxu0 0
      %2075 = vmatprep.subr.bf16.mxu0 0
      %2076 = vmatpush1.bf16.msra.mxu0 0
      %2077 = vmatprep.subr.bf16.mxu0 0
      %2078 = vmatpush1.bf16.msra.mxu0 0
      %2079 = vmatprep.mubr.bf16.mxu0 0
      %2080 = vmatmul.mubr.bf16.gmra.mrb[0].mxu0 %v2024
      %v2081 = vpop.f32.mrb[0].mxu0
      %v2082 = vadd.f32 %v1997, %v2081
      %v2083 = vpop.f32.mrb[0].mxu0
      %v2084 = vpop.f32.mrb[0].mxu0
      %v2085 = vadd.f32 %v1997, %v2084
      %v2086 = vpop.f32.mrb[0].mxu0
      %2087 = vmatprep.mubr.bf16.mxu0 0
      %2088 = vmatmul.mubr.bf16.gmra.mrb[0].mxu0 %v2027
      %v2089 = vpop.f32.mrb[0].mxu0
      %v2090 = vadd.f32 %v1997, %v2089
      %v2091 = vpop.f32.mrb[0].mxu0
      %v2092 = vpop.f32.mrb[0].mxu0
      %v2093 = vadd.f32 %v1997, %v2092
      %v2094 = vpop.f32.mrb[0].mxu0
      %2095 = vmatprep.mubr.bf16.mxu0 0
      %2096 = vmatmul.mubr.bf16.gmra.mrb[0].mxu0 %v2030
      %v2097 = vpop.f32.mrb[0].mxu0
      %v2098 = vadd.f32 %v1997, %v2097
      %v2099 = vpop.f32.mrb[0].mxu0
      %v2100 = vpop.f32.mrb[0].mxu0
      %v2101 = vadd.f32 %v1997, %v2100
      %v2102 = vpop.f32.mrb[0].mxu0
      %2103 = vmatprep.mubr.bf16.mxu0 0
      %2104 = vmatmul.mubr.bf16.gmra.mrb[0].mxu0 %v2033
      %v2105 = vpop.f32.mrb[0].mxu0
      %v2106 = vadd.f32 %v1997, %v2105
      %v2107 = vpop.f32.mrb[0].mxu0
      %v2108 = vpop.f32.mrb[0].mxu0
      %v2109 = vadd.f32 %v1997, %v2108
      %v2110 = vpop.f32.mrb[0].mxu0
      %2111 = vmatprep.mubr.bf16.mxu0 0
      %2112 = vmatmul.mubr.bf16.gmra.mrb[0].mxu0 %v2036
      %v2113 = vpop.f32.mrb[0].mxu0
      %v2114 = vadd.f32 %v1997, %v2113
      %v2115 = vpop.f32.mrb[0].mxu0
      %v2116 = vpop.f32.mrb[0].mxu0
      %v2117 = vadd.f32 %v1997, %v2116
      %v2118 = vpop.f32.mrb[0].mxu0
      %2119 = vmatprep.mubr.bf16.mxu0 0
      %2120 = vmatmul.mubr.bf16.gmra.mrb[0].mxu0 %v2039
      %v2121 = vpop.f32.mrb[0].mxu0
      %v2122 = vadd.f32 %v1997, %v2121
      %v2123 = vpop.f32.mrb[0].mxu0
      %v2124 = vpop.f32.mrb[0].mxu0
      %v2125 = vadd.f32 %v1997, %v2124
      %v2126 = vpop.f32.mrb[0].mxu0
      %2127 = vmatprep.mubr.bf16.mxu0 0
      %2128 = vmatmul.mubr.bf16.gmra.mrb[0].mxu0 %v2042
      %v2129 = vpop.f32.mrb[0].mxu0
      %v2130 = vadd.f32 %v1997, %v2129
      %v2131 = vpop.f32.mrb[0].mxu0
      %v2132 = vpop.f32.mrb[0].mxu0
      %v2133 = vadd.f32 %v1997, %v2132
      %v2134 = vpop.f32.mrb[0].mxu0
      %2135 = vmatprep.mubr.bf16.mxu0 0
      %2136 = vmatmul.mubr.bf16.gmra.mrb[0].mxu0 %v2045
      %v2137 = vpop.f32.mrb[0].mxu0
      %v2138 = vadd.f32 %v1997, %v2137
      %v2139 = vpop.f32.mrb[0].mxu0
      %v2140 = vpop.f32.mrb[0].mxu0
      %v2141 = vadd.f32 %v1997, %v2140
      %v2142 = vpop.f32.mrb[0].mxu0
      %2143 = vdwg.mxu0
      %v2144 = vmax.f32 %v2082, 0.0
      %v2145 = vmax.f32 %v2085, 0.0
      %v2146 = vmax.f32 %v2090, 0.0
      %v2147 = vmax.f32 %v2093, 0.0
      %v2148 = vmax.f32 %v2098, 0.0
      %v2149 = vmax.f32 %v2101, 0.0
      %v2150 = vmax.f32 %v2106, 0.0
      %v2151 = vmax.f32 %v2109, 0.0
      %v2152 = vmax.f32 %v2114, 0.0
      %v2153 = vmax.f32 %v2117, 0.0
      %v2154 = vmax.f32 %v2122, 0.0
      %v2155 = vmax.f32 %v2125, 0.0
      %v2156 = vmax.f32 %v2130, 0.0
      %v2157 = vmax.f32 %v2133, 0.0
      %v2158 = vmax.f32 %v2138, 0.0
      %v2159 = vmax.f32 %v2141, 0.0
      %v2160 = vpack.c.bf16 %v2145, %v2144
      %v2161 = vpack.c.bf16 %v2147, %v2146
      %v2162 = vpack.c.bf16 %v2149, %v2148
      %v2163 = vpack.c.bf16 %v2151, %v2150
      %v2164 = vpack.c.bf16 %v2153, %v2152
      %v2165 = vpack.c.bf16 %v2155, %v2154
      %v2166 = vpack.c.bf16 %v2157, %v2156
      %v2167 = vpack.c.bf16 %v2159, %v2158
      %v2168 = vld [vmem:[%s11] sm:$0xff]
      %v2169 = vld [vmem:[%s11 + $0x8] sm:$0xff]
      %v2170 = vld [vmem:[%s11 + $0x10] sm:$0xff]
      %v2171 = vld [vmem:[%s11 + $0x18] sm:$0xf]
      %v2172 = vld [vmem:[%s11 + $0x1c] sm:$0xff]
      %v2173 = vld [vmem:[%s11 + $0x24] sm:$0xff]
      %v2174 = vld [vmem:[%s11 + $0x2c] sm:$0xff]
      %v2175 = vld [vmem:[%s11 + $0x34] sm:$0xf]
      %v2176 = vld [vmem:[%s11 + $0x38] sm:$0xff]
      %v2177 = vld [vmem:[%s11 + $0x40] sm:$0xff]
      %v2178 = vld [vmem:[%s11 + $0x48] sm:$0xff]
      %v2179 = vld [vmem:[%s11 + $0x50] sm:$0xf]
      %v2180 = vld [vmem:[%s11 + $0x54] sm:$0xff]
      %v2181 = vld [vmem:[%s11 + $0x5c] sm:$0xff]
      %v2182 = vld [vmem:[%s11 + $0x64] sm:$0xff]
      %v2183 = vld [vmem:[%s11 + $0x6c] sm:$0xf]
      %v2184 = vld [vmem:[%s11 + $0x70] sm:$0xff]
      %v2185 = vld [vmem:[%s11 + $0x78] sm:$0xff]
      %v2186 = vld [vmem:[%s11 + $0x80] sm:$0xff]
      %v2187 = vld [vmem:[%s11 + $0x88] sm:$0xf]
      %v2188 = vld [vmem:[%s11 + $0x8c] sm:$0xff]
      %v2189 = vld [vmem:[%s11 + $0x94] sm:$0xff]
      %v2190 = vld [vmem:[%s11 + $0x9c] sm:$0xff]
      %v2191 = vld [vmem:[%s11 + $0xa4] sm:$0xf]
      %v2192 = vld [vmem:[%s11 + $0xa8] sm:$0xff]
      %v2193 = vld [vmem:[%s11 + $0xb0] sm:$0xff]
      %v2194 = vld [vmem:[%s11 + $0xb8] sm:$0xff]
      %v2195 = vld [vmem:[%s11 + $0xc0] sm:$0xf]
      %v2196 = vld [vmem:[%s11 + $0xc4] sm:$0xff]
      %v2197 = vld [vmem:[%s11 + $0xcc] sm:$0xff]
      %v2198 = vld [vmem:[%s11 + $0xd4] sm:$0xff]
      %v2199 = vld [vmem:[%s11 + $0xdc] sm:$0xf]
      %v2200 = vld [vmem:[%s11 + $0xe0] sm:$0xff]
      %v2201 = vld [vmem:[%s11 + $0xe8] sm:$0xff]
      %v2202 = vld [vmem:[%s11 + $0xf0] sm:$0xff]
      %v2203 = vld [vmem:[%s11 + $0xf8] sm:$0xf]
      %v2204 = vld [vmem:[%s11 + $0xfc] sm:$0xff]
      %v2205 = vld [vmem:[%s11 + $0x104] sm:$0xff]
      %v2206 = vld [vmem:[%s11 + $0x10c] sm:$0xff]
      %v2207 = vld [vmem:[%s11 + $0x114] sm:$0xf]
      %v2208 = vld [vmem:[%s11 + $0x118] sm:$0xff]
      %v2209 = vld [vmem:[%s11 + $0x120] sm:$0xff]
      %v2210 = vld [vmem:[%s11 + $0x128] sm:$0xff]
      %v2211 = vld [vmem:[%s11 + $0x130] sm:$0xf]
      %v2212 = vld [vmem:[%s11 + $0x134] sm:$0xff]
      %v2213 = vld [vmem:[%s11 + $0x13c] sm:$0xff]
      %v2214 = vld [vmem:[%s11 + $0x144] sm:$0xff]
      %v2215 = vld [vmem:[%s11 + $0x14c] sm:$0xf]
      %v2216 = vld [vmem:[%s11 + $0x150] sm:$0xff]
      %v2217 = vld [vmem:[%s11 + $0x158] sm:$0xff]
      %v2218 = vld [vmem:[%s11 + $0x160] sm:$0xff]
      %v2219 = vld [vmem:[%s11 + $0x168] sm:$0xf]
      %v2220 = vld [vmem:[%s11 + $0x16c] sm:$0xff]
      %v2221 = vld [vmem:[%s11 + $0x174] sm:$0xff]
      %v2222 = vld [vmem:[%s11 + $0x17c] sm:$0xff]
      %v2223 = vld [vmem:[%s11 + $0x184] sm:$0xf]
      %v2224 = vld [vmem:[%s11 + $0x188] sm:$0xff]
      %v2225 = vld [vmem:[%s11 + $0x190] sm:$0xff]
      %v2226 = vld [vmem:[%s11 + $0x198] sm:$0xff]
      %v2227 = vld [vmem:[%s11 + $0x1a0] sm:$0xf]
      %v2228 = vld [vmem:[%s11 + $0x1a4] sm:$0xff]
      %v2229 = vld [vmem:[%s11 + $0x1ac] sm:$0xff]
      %v2230 = vld [vmem:[%s11 + $0x1b4] sm:$0xff]
      %v2231 = vld [vmem:[%s11 + $0x1bc] sm:$0xf]
      %v2232 = vld [vmem:[%s12] sm:$0x7f]
      %v2234 = vlaneseq
      %v2235 = vshrl.u32 %v2234, 7
      %v2236 = vsub.s32 0, %v2235
      %v2237 = vrot.slane %v2232, %v2236
      %v2238 = vlaneseq
      %v2239 = vshrl.u32 %v2238, 7
      %v2240 = vsub.s32 1, %v2239
      %v2241 = vrot.slane %v2232, %v2240
      %v2242 = vlaneseq
      %v2243 = vshrl.u32 %v2242, 7
      %v2244 = vsub.s32 2, %v2243
      %v2245 = vrot.slane %v2232, %v2244
      %v2246 = vlaneseq
      %v2247 = vshrl.u32 %v2246, 7
      %v2248 = vsub.s32 3, %v2247
      %v2249 = vrot.slane %v2232, %v2248
      %v2250 = vlaneseq
      %v2251 = vshrl.u32 %v2250, 7
      %v2252 = vsub.s32 4, %v2251
      %v2253 = vrot.slane %v2232, %v2252
      %v2254 = vlaneseq
      %v2255 = vshrl.u32 %v2254, 7
      %v2256 = vsub.s32 5, %v2255
      %v2257 = vrot.slane %v2232, %v2256
      %v2258 = vlaneseq
      %v2259 = vshrl.u32 %v2258, 7
      %v2260 = vsub.s32 6, %v2259
      %v2261 = vrot.slane %v2232, %v2260
      %v2333 = vunpack.c.l.b16 %v2168
      %v2334 = vunpack.c.h.b16 %v2168
      %v2335 = vunpack.c.l.b16 %v2169
      %v2336 = vunpack.c.h.b16 %v2169
      %v2337 = vunpack.c.l.b16 %v2170
      %v2338 = vunpack.c.h.b16 %v2170
      %v2339 = vunpack.c.l.b16 %v2171
      %v2340 = vunpack.c.l.b16 %v2172
      %v2341 = vunpack.c.h.b16 %v2172
      %v2342 = vunpack.c.l.b16 %v2173
      %v2343 = vunpack.c.h.b16 %v2173
      %v2344 = vunpack.c.l.b16 %v2174
      %v2345 = vunpack.c.h.b16 %v2174
      %v2346 = vunpack.c.l.b16 %v2175
      %v2347 = vunpack.c.l.b16 %v2176
      %v2348 = vunpack.c.h.b16 %v2176
      %v2349 = vunpack.c.l.b16 %v2177
      %v2350 = vunpack.c.h.b16 %v2177
      %v2351 = vunpack.c.l.b16 %v2178
      %v2352 = vunpack.c.h.b16 %v2178
      %v2353 = vunpack.c.l.b16 %v2179
      %v2354 = vunpack.c.l.b16 %v2180
      %v2355 = vunpack.c.h.b16 %v2180
      %v2356 = vunpack.c.l.b16 %v2181
      %v2357 = vunpack.c.h.b16 %v2181
      %v2358 = vunpack.c.l.b16 %v2182
      %v2359 = vunpack.c.h.b16 %v2182
      %v2360 = vunpack.c.l.b16 %v2183
      %v2361 = vunpack.c.l.b16 %v2184
      %v2362 = vunpack.c.h.b16 %v2184
      %v2363 = vunpack.c.l.b16 %v2185
      %v2364 = vunpack.c.h.b16 %v2185
      %v2365 = vunpack.c.l.b16 %v2186
      %v2366 = vunpack.c.h.b16 %v2186
      %v2367 = vunpack.c.l.b16 %v2187
      %v2368 = vunpack.c.l.b16 %v2188
      %v2369 = vunpack.c.h.b16 %v2188
      %v2370 = vunpack.c.l.b16 %v2189
      %v2371 = vunpack.c.h.b16 %v2189
      %v2372 = vunpack.c.l.b16 %v2190
      %v2373 = vunpack.c.h.b16 %v2190
      %v2374 = vunpack.c.l.b16 %v2191
      %v2375 = vunpack.c.l.b16 %v2192
      %v2376 = vunpack.c.h.b16 %v2192
      %v2377 = vunpack.c.l.b16 %v2193
      %v2378 = vunpack.c.h.b16 %v2193
      %v2379 = vunpack.c.l.b16 %v2194
      %v2380 = vunpack.c.h.b16 %v2194
      %v2381 = vunpack.c.l.b16 %v2195
      %v2382 = vunpack.c.l.b16 %v2196
      %v2383 = vunpack.c.h.b16 %v2196
      %v2384 = vunpack.c.l.b16 %v2197
      %v2385 = vunpack.c.h.b16 %v2197
      %v2386 = vunpack.c.l.b16 %v2198
      %v2387 = vunpack.c.h.b16 %v2198
      %v2388 = vunpack.c.l.b16 %v2199
      %v2389 = vunpack.c.l.b16 %v2200
      %v2390 = vunpack.c.h.b16 %v2200
      %v2391 = vunpack.c.l.b16 %v2201
      %v2392 = vunpack.c.h.b16 %v2201
      %v2393 = vunpack.c.l.b16 %v2202
      %v2394 = vunpack.c.h.b16 %v2202
      %v2395 = vunpack.c.l.b16 %v2203
      %v2396 = vunpack.c.l.b16 %v2204
      %v2397 = vunpack.c.h.b16 %v2204
      %v2398 = vunpack.c.l.b16 %v2205
      %v2399 = vunpack.c.h.b16 %v2205
      %v2400 = vunpack.c.l.b16 %v2206
      %v2401 = vunpack.c.h.b16 %v2206
      %v2402 = vunpack.c.l.b16 %v2207
      %v2403 = vunpack.c.l.b16 %v2208
      %v2404 = vunpack.c.h.b16 %v2208
      %v2405 = vunpack.c.l.b16 %v2209
      %v2406 = vunpack.c.h.b16 %v2209
      %v2407 = vunpack.c.l.b16 %v2210
      %v2408 = vunpack.c.h.b16 %v2210
      %v2409 = vunpack.c.l.b16 %v2211
      %v2410 = vunpack.c.l.b16 %v2212
      %v2411 = vunpack.c.h.b16 %v2212
      %v2412 = vunpack.c.l.b16 %v2213
      %v2413 = vunpack.c.h.b16 %v2213
      %v2414 = vunpack.c.l.b16 %v2214
      %v2415 = vunpack.c.h.b16 %v2214
      %v2416 = vunpack.c.l.b16 %v2215
      %v2417 = vunpack.c.l.b16 %v2216
      %v2418 = vunpack.c.h.b16 %v2216
      %v2419 = vunpack.c.l.b16 %v2217
      %v2420 = vunpack.c.h.b16 %v2217
      %v2421 = vunpack.c.l.b16 %v2218
      %v2422 = vunpack.c.h.b16 %v2218
      %v2423 = vunpack.c.l.b16 %v2219
      %v2424 = vunpack.c.l.b16 %v2220
      %v2425 = vunpack.c.h.b16 %v2220
      %v2426 = vunpack.c.l.b16 %v2221
      %v2427 = vunpack.c.h.b16 %v2221
      %v2428 = vunpack.c.l.b16 %v2222
      %v2429 = vunpack.c.h.b16 %v2222
      %v2430 = vunpack.c.l.b16 %v2223
      %v2431 = vunpack.c.l.b16 %v2224
      %v2432 = vunpack.c.h.b16 %v2224
      %v2433 = vunpack.c.l.b16 %v2225
      %v2434 = vunpack.c.h.b16 %v2225
      %v2435 = vunpack.c.l.b16 %v2226
      %v2436 = vunpack.c.h.b16 %v2226
      %v2437 = vunpack.c.l.b16 %v2227
      %v2438 = vunpack.c.l.b16 %v2228
      %v2439 = vunpack.c.h.b16 %v2228
      %v2440 = vunpack.c.l.b16 %v2229
      %v2441 = vunpack.c.h.b16 %v2229
      %v2442 = vunpack.c.l.b16 %v2230
      %v2443 = vunpack.c.h.b16 %v2230
      %v2444 = vunpack.c.l.b16 %v2231
      %v2445 = vpack.c.b16 %v2340, %v2333
      %v2446 = vpack.c.b16 %v2341, %v2334
      %v2447 = vpack.c.b16 %v2342, %v2335
      %v2448 = vpack.c.b16 %v2343, %v2336
      %v2449 = vpack.c.b16 %v2344, %v2337
      %v2450 = vpack.c.b16 %v2345, %v2338
      %v2451 = vpack.c.b16 %v2346, %v2339
      %v2452 = vpack.c.b16 %v2354, %v2347
      %v2453 = vpack.c.b16 %v2355, %v2348
      %v2454 = vpack.c.b16 %v2356, %v2349
      %v2455 = vpack.c.b16 %v2357, %v2350
      %v2456 = vpack.c.b16 %v2358, %v2351
      %v2457 = vpack.c.b16 %v2359, %v2352
      %v2458 = vpack.c.b16 %v2360, %v2353
      %v2459 = vpack.c.b16 %v2368, %v2361
      %v2460 = vpack.c.b16 %v2369, %v2362
      %v2461 = vpack.c.b16 %v2370, %v2363
      %v2462 = vpack.c.b16 %v2371, %v2364
      %v2463 = vpack.c.b16 %v2372, %v2365
      %v2464 = vpack.c.b16 %v2373, %v2366
      %v2465 = vpack.c.b16 %v2374, %v2367
      %v2466 = vpack.c.b16 %v2382, %v2375
      %v2467 = vpack.c.b16 %v2383, %v2376
      %v2468 = vpack.c.b16 %v2384, %v2377
      %v2469 = vpack.c.b16 %v2385, %v2378
      %v2470 = vpack.c.b16 %v2386, %v2379
      %v2471 = vpack.c.b16 %v2387, %v2380
      %v2472 = vpack.c.b16 %v2388, %v2381
      %v2473 = vpack.c.b16 %v2396, %v2389
      %v2474 = vpack.c.b16 %v2397, %v2390
      %v2475 = vpack.c.b16 %v2398, %v2391
      %v2476 = vpack.c.b16 %v2399, %v2392
      %v2477 = vpack.c.b16 %v2400, %v2393
      %v2478 = vpack.c.b16 %v2401, %v2394
      %v2479 = vpack.c.b16 %v2402, %v2395
      %v2480 = vpack.c.b16 %v2410, %v2403
      %v2481 = vpack.c.b16 %v2411, %v2404
      %v2482 = vpack.c.b16 %v2412, %v2405
      %v2483 = vpack.c.b16 %v2413, %v2406
      %v2484 = vpack.c.b16 %v2414, %v2407
      %v2485 = vpack.c.b16 %v2415, %v2408
      %v2486 = vpack.c.b16 %v2416, %v2409
      %v2487 = vpack.c.b16 %v2424, %v2417
      %v2488 = vpack.c.b16 %v2425, %v2418
      %v2489 = vpack.c.b16 %v2426, %v2419
      %v2490 = vpack.c.b16 %v2427, %v2420
      %v2491 = vpack.c.b16 %v2428, %v2421
      %v2492 = vpack.c.b16 %v2429, %v2422
      %v2493 = vpack.c.b16 %v2430, %v2423
      %v2494 = vpack.c.b16 %v2438, %v2431
      %v2495 = vpack.c.b16 %v2439, %v2432
      %v2496 = vpack.c.b16 %v2440, %v2433
      %v2497 = vpack.c.b16 %v2441, %v2434
      %v2498 = vpack.c.b16 %v2442, %v2435
      %v2499 = vpack.c.b16 %v2443, %v2436
      %v2500 = vpack.c.b16 %v2444, %v2437
      %2557 = vmatprep.subr.bf16.mxu0 %v2446
      %2558 = vmatpush1.bf16.msra.mxu0 %v2445
      %2559 = vmatprep.subr.bf16.mxu0 %v2453
      %2560 = vmatpush1.bf16.msra.mxu0 %v2452
      %2561 = vmatprep.subr.bf16.mxu0 %v2460
      %2562 = vmatpush1.bf16.msra.mxu0 %v2459
      %2563 = vmatprep.subr.bf16.mxu0 %v2467
      %2564 = vmatpush1.bf16.msra.mxu0 %v2466
      %2565 = vmatprep.subr.bf16.mxu0 %v2474
      %2566 = vmatpush1.bf16.msra.mxu0 %v2473
      %2567 = vmatprep.subr.bf16.mxu0 %v2481
      %2568 = vmatpush1.bf16.msra.mxu0 %v2480
      %2569 = vmatprep.subr.bf16.mxu0 %v2488
      %2570 = vmatpush1.bf16.msra.mxu0 %v2487
      %2571 = vmatprep.subr.bf16.mxu0 %v2495
      %2572 = vmatpush1.bf16.msra.mxu0 %v2494
      %2573 = vmatprep.subr.bf16.mxu0 0
      %2574 = vmatpush1.bf16.msra.mxu0 0
      %2575 = vmatprep.subr.bf16.mxu0 0
      %2576 = vmatpush1.bf16.msra.mxu0 0
      %2577 = vmatprep.subr.bf16.mxu0 0
      %2578 = vmatpush1.bf16.msra.mxu0 0
      %2579 = vmatprep.subr.bf16.mxu0 0
      %2580 = vmatpush1.bf16.msra.mxu0 0
      %2581 = vmatprep.subr.bf16.mxu0 0
      %2582 = vmatpush1.bf16.msra.mxu0 0
      %2583 = vmatprep.subr.bf16.mxu0 0
      %2584 = vmatpush1.bf16.msra.mxu0 0
      %2585 = vmatprep.subr.bf16.mxu0 0
      %2586 = vmatpush1.bf16.msra.mxu0 0
      %2587 = vmatprep.subr.bf16.mxu0 0
      %2588 = vmatpush1.bf16.msra.mxu0 0
      %2589 = vmatprep.mubr.bf16.mxu0 0
      %2590 = vmatmul.mubr.bf16.gmra.mrb[0].mxu0 %v2160
      %v2591 = vpop.f32.mrb[0].mxu0
      %v2592 = vadd.f32 %v2237, %v2591
      %v2593 = vpop.f32.mrb[0].mxu0
      %v2594 = vadd.f32 %v2241, %v2593
      %v2595 = vpop.f32.mrb[0].mxu0
      %v2596 = vadd.f32 %v2237, %v2595
      %v2597 = vpop.f32.mrb[0].mxu0
      %v2598 = vadd.f32 %v2241, %v2597
      %2599 = vmatprep.mubr.bf16.mxu0 0
      %2600 = vmatmul.mubr.bf16.gmra.mrb[0].mxu0 %v2161
      %v2601 = vpop.f32.mrb[0].mxu0
      %v2602 = vadd.f32 %v2237, %v2601
      %v2603 = vpop.f32.mrb[0].mxu0
      %v2604 = vadd.f32 %v2241, %v2603
      %v2605 = vpop.f32.mrb[0].mxu0
      %v2606 = vadd.f32 %v2237, %v2605
      %v2607 = vpop.f32.mrb[0].mxu0
      %v2608 = vadd.f32 %v2241, %v2607
      %2609 = vmatprep.mubr.bf16.mxu0 0
      %2610 = vmatmul.mubr.bf16.gmra.mrb[0].mxu0 %v2162
      %v2611 = vpop.f32.mrb[0].mxu0
      %v2612 = vadd.f32 %v2237, %v2611
      %v2613 = vpop.f32.mrb[0].mxu0
      %v2614 = vadd.f32 %v2241, %v2613
      %v2615 = vpop.f32.mrb[0].mxu0
      %v2616 = vadd.f32 %v2237, %v2615
      %v2617 = vpop.f32.mrb[0].mxu0
      %v2618 = vadd.f32 %v2241, %v2617
      %2619 = vmatprep.mubr.bf16.mxu0 0
      %2620 = vmatmul.mubr.bf16.gmra.mrb[0].mxu0 %v2163
      %v2621 = vpop.f32.mrb[0].mxu0
      %v2622 = vadd.f32 %v2237, %v2621
      %v2623 = vpop.f32.mrb[0].mxu0
      %v2624 = vadd.f32 %v2241, %v2623
      %v2625 = vpop.f32.mrb[0].mxu0
      %v2626 = vadd.f32 %v2237, %v2625
      %v2627 = vpop.f32.mrb[0].mxu0
      %v2628 = vadd.f32 %v2241, %v2627
      %2629 = vmatprep.mubr.bf16.mxu0 0
      %2630 = vmatmul.mubr.bf16.gmra.mrb[0].mxu0 %v2164
      %v2631 = vpop.f32.mrb[0].mxu0
      %v2632 = vadd.f32 %v2237, %v2631
      %v2633 = vpop.f32.mrb[0].mxu0
      %v2634 = vadd.f32 %v2241, %v2633
      %v2635 = vpop.f32.mrb[0].mxu0
      %v2636 = vadd.f32 %v2237, %v2635
      %v2637 = vpop.f32.mrb[0].mxu0
      %v2638 = vadd.f32 %v2241, %v2637
      %2639 = vmatprep.mubr.bf16.mxu0 0
      %2640 = vmatmul.mubr.bf16.gmra.mrb[0].mxu0 %v2165
      %v2641 = vpop.f32.mrb[0].mxu0
      %v2642 = vadd.f32 %v2237, %v2641
      %v2643 = vpop.f32.mrb[0].mxu0
      %v2644 = vadd.f32 %v2241, %v2643
      %v2645 = vpop.f32.mrb[0].mxu0
      %v2646 = vadd.f32 %v2237, %v2645
      %v2647 = vpop.f32.mrb[0].mxu0
      %v2648 = vadd.f32 %v2241, %v2647
      %2649 = vmatprep.mubr.bf16.mxu0 0
      %2650 = vmatmul.mubr.bf16.gmra.mrb[0].mxu0 %v2166
      %v2651 = vpop.f32.mrb[0].mxu0
      %v2652 = vadd.f32 %v2237, %v2651
      %v2653 = vpop.f32.mrb[0].mxu0
      %v2654 = vadd.f32 %v2241, %v2653
      %v2655 = vpop.f32.mrb[0].mxu0
      %v2656 = vadd.f32 %v2237, %v2655
      %v2657 = vpop.f32.mrb[0].mxu0
      %v2658 = vadd.f32 %v2241, %v2657
      %2659 = vmatprep.mubr.bf16.mxu0 0
      %2660 = vmatmul.mubr.bf16.gmra.mrb[0].mxu0 %v2167
      %v2661 = vpop.f32.mrb[0].mxu0
      %v2662 = vadd.f32 %v2237, %v2661
      %v2663 = vpop.f32.mrb[0].mxu0
      %v2664 = vadd.f32 %v2241, %v2663
      %v2665 = vpop.f32.mrb[0].mxu0
      %v2666 = vadd.f32 %v2237, %v2665
      %v2667 = vpop.f32.mrb[0].mxu0
      %v2668 = vadd.f32 %v2241, %v2667
      %2669 = vdwg.mxu0
      %2670 = vmatprep.subr.bf16.mxu0 %v2448
      %2671 = vmatpush1.bf16.msra.mxu0 %v2447
      %2672 = vmatprep.subr.bf16.mxu0 %v2455
      %2673 = vmatpush1.bf16.msra.mxu0 %v2454
      %2674 = vmatprep.subr.bf16.mxu0 %v2462
      %2675 = vmatpush1.bf16.msra.mxu0 %v2461
      %2676 = vmatprep.subr.bf16.mxu0 %v2469
      %2677 = vmatpush1.bf16.msra.mxu0 %v2468
      %2678 = vmatprep.subr.bf16.mxu0 %v2476
      %2679 = vmatpush1.bf16.msra.mxu0 %v2475
      %2680 = vmatprep.subr.bf16.mxu0 %v2483
      %2681 = vmatpush1.bf16.msra.mxu0 %v2482
      %2682 = vmatprep.subr.bf16.mxu0 %v2490
      %2683 = vmatpush1.bf16.msra.mxu0 %v2489
      %2684 = vmatprep.subr.bf16.mxu0 %v2497
      %2685 = vmatpush1.bf16.msra.mxu0 %v2496
      %2686 = vmatprep.subr.bf16.mxu0 0
      %2687 = vmatpush1.bf16.msra.mxu0 0
      %2688 = vmatprep.subr.bf16.mxu0 0
      %2689 = vmatpush1.bf16.msra.mxu0 0
      %2690 = vmatprep.subr.bf16.mxu0 0
      %2691 = vmatpush1.bf16.msra.mxu0 0
      %2692 = vmatprep.subr.bf16.mxu0 0
      %2693 = vmatpush1.bf16.msra.mxu0 0
      %2694 = vmatprep.subr.bf16.mxu0 0
      %2695 = vmatpush1.bf16.msra.mxu0 0
      %2696 = vmatprep.subr.bf16.mxu0 0
      %2697 = vmatpush1.bf16.msra.mxu0 0
      %2698 = vmatprep.subr.bf16.mxu0 0
      %2699 = vmatpush1.bf16.msra.mxu0 0
      %2700 = vmatprep.subr.bf16.mxu0 0
      %2701 = vmatpush1.bf16.msra.mxu0 0
      %2702 = vmatprep.mubr.bf16.mxu0 0
      %2703 = vmatmul.mubr.bf16.gmra.mrb[0].mxu0 %v2160
      %v2704 = vpop.f32.mrb[0].mxu0
      %v2705 = vadd.f32 %v2245, %v2704
      %v2706 = vpop.f32.mrb[0].mxu0
      %v2707 = vadd.f32 %v2249, %v2706
      %v2708 = vpop.f32.mrb[0].mxu0
      %v2709 = vadd.f32 %v2245, %v2708
      %v2710 = vpop.f32.mrb[0].mxu0
      %v2711 = vadd.f32 %v2249, %v2710
      %2712 = vmatprep.mubr.bf16.mxu0 0
      %2713 = vmatmul.mubr.bf16.gmra.mrb[0].mxu0 %v2161
      %v2714 = vpop.f32.mrb[0].mxu0
      %v2715 = vadd.f32 %v2245, %v2714
      %v2716 = vpop.f32.mrb[0].mxu0
      %v2717 = vadd.f32 %v2249, %v2716
      %v2718 = vpop.f32.mrb[0].mxu0
      %v2719 = vadd.f32 %v2245, %v2718
      %v2720 = vpop.f32.mrb[0].mxu0
      %v2721 = vadd.f32 %v2249, %v2720
      %2722 = vmatprep.mubr.bf16.mxu0 0
      %2723 = vmatmul.mubr.bf16.gmra.mrb[0].mxu0 %v2162
      %v2724 = vpop.f32.mrb[0].mxu0
      %v2725 = vadd.f32 %v2245, %v2724
      %v2726 = vpop.f32.mrb[0].mxu0
      %v2727 = vadd.f32 %v2249, %v2726
      %v2728 = vpop.f32.mrb[0].mxu0
      %v2729 = vadd.f32 %v2245, %v2728
      %v2730 = vpop.f32.mrb[0].mxu0
      %v2731 = vadd.f32 %v2249, %v2730
      %2732 = vmatprep.mubr.bf16.mxu0 0
      %2733 = vmatmul.mubr.bf16.gmra.mrb[0].mxu0 %v2163
      %v2734 = vpop.f32.mrb[0].mxu0
      %v2735 = vadd.f32 %v2245, %v2734
      %v2736 = vpop.f32.mrb[0].mxu0
      %v2737 = vadd.f32 %v2249, %v2736
      %v2738 = vpop.f32.mrb[0].mxu0
      %v2739 = vadd.f32 %v2245, %v2738
      %v2740 = vpop.f32.mrb[0].mxu0
      %v2741 = vadd.f32 %v2249, %v2740
      %2742 = vmatprep.mubr.bf16.mxu0 0
      %2743 = vmatmul.mubr.bf16.gmra.mrb[0].mxu0 %v2164
      %v2744 = vpop.f32.mrb[0].mxu0
      %v2745 = vadd.f32 %v2245, %v2744
      %v2746 = vpop.f32.mrb[0].mxu0
      %v2747 = vadd.f32 %v2249, %v2746
      %v2748 = vpop.f32.mrb[0].mxu0
      %v2749 = vadd.f32 %v2245, %v2748
      %v2750 = vpop.f32.mrb[0].mxu0
      %v2751 = vadd.f32 %v2249, %v2750
      %2752 = vmatprep.mubr.bf16.mxu0 0
      %2753 = vmatmul.mubr.bf16.gmra.mrb[0].mxu0 %v2165
      %v2754 = vpop.f32.mrb[0].mxu0
      %v2755 = vadd.f32 %v2245, %v2754
      %v2756 = vpop.f32.mrb[0].mxu0
      %v2757 = vadd.f32 %v2249, %v2756
      %v2758 = vpop.f32.mrb[0].mxu0
      %v2759 = vadd.f32 %v2245, %v2758
      %v2760 = vpop.f32.mrb[0].mxu0
      %v2761 = vadd.f32 %v2249, %v2760
      %2762 = vmatprep.mubr.bf16.mxu0 0
      %2763 = vmatmul.mubr.bf16.gmra.mrb[0].mxu0 %v2166
      %v2764 = vpop.f32.mrb[0].mxu0
      %v2765 = vadd.f32 %v2245, %v2764
      %v2766 = vpop.f32.mrb[0].mxu0
      %v2767 = vadd.f32 %v2249, %v2766
      %v2768 = vpop.f32.mrb[0].mxu0
      %v2769 = vadd.f32 %v2245, %v2768
      %v2770 = vpop.f32.mrb[0].mxu0
      %v2771 = vadd.f32 %v2249, %v2770
      %2772 = vmatprep.mubr.bf16.mxu0 0
      %2773 = vmatmul.mubr.bf16.gmra.mrb[0].mxu0 %v2167
      %v2774 = vpop.f32.mrb[0].mxu0
      %v2775 = vadd.f32 %v2245, %v2774
      %v2776 = vpop.f32.mrb[0].mxu0
      %v2777 = vadd.f32 %v2249, %v2776
      %v2778 = vpop.f32.mrb[0].mxu0
      %v2779 = vadd.f32 %v2245, %v2778
      %v2780 = vpop.f32.mrb[0].mxu0
      %v2781 = vadd.f32 %v2249, %v2780
      %2782 = vdwg.mxu0
      %2783 = vmatprep.subr.bf16.mxu0 %v2450
      %2784 = vmatpush1.bf16.msra.mxu0 %v2449
      %2785 = vmatprep.subr.bf16.mxu0 %v2457
      %2786 = vmatpush1.bf16.msra.mxu0 %v2456
      %2787 = vmatprep.subr.bf16.mxu0 %v2464
      %2788 = vmatpush1.bf16.msra.mxu0 %v2463
      %2789 = vmatprep.subr.bf16.mxu0 %v2471
      %2790 = vmatpush1.bf16.msra.mxu0 %v2470
      %2791 = vmatprep.subr.bf16.mxu0 %v2478
      %2792 = vmatpush1.bf16.msra.mxu0 %v2477
      %2793 = vmatprep.subr.bf16.mxu0 %v2485
      %2794 = vmatpush1.bf16.msra.mxu0 %v2484
      %2795 = vmatprep.subr.bf16.mxu0 %v2492
      %2796 = vmatpush1.bf16.msra.mxu0 %v2491
      %2797 = vmatprep.subr.bf16.mxu0 %v2499
      %2798 = vmatpush1.bf16.msra.mxu0 %v2498
      %2799 = vmatprep.subr.bf16.mxu0 0
      %2800 = vmatpush1.bf16.msra.mxu0 0
      %2801 = vmatprep.subr.bf16.mxu0 0
      %2802 = vmatpush1.bf16.msra.mxu0 0
      %2803 = vmatprep.subr.bf16.mxu0 0
      %2804 = vmatpush1.bf16.msra.mxu0 0
      %2805 = vmatprep.subr.bf16.mxu0 0
      %2806 = vmatpush1.bf16.msra.mxu0 0
      %2807 = vmatprep.subr.bf16.mxu0 0
      %2808 = vmatpush1.bf16.msra.mxu0 0
      %2809 = vmatprep.subr.bf16.mxu0 0
      %2810 = vmatpush1.bf16.msra.mxu0 0
      %2811 = vmatprep.subr.bf16.mxu0 0
      %2812 = vmatpush1.bf16.msra.mxu0 0
      %2813 = vmatprep.subr.bf16.mxu0 0
      %2814 = vmatpush1.bf16.msra.mxu0 0
      %2815 = vmatprep.mubr.bf16.mxu0 0
      %2816 = vmatmul.mubr.bf16.gmra.mrb[0].mxu0 %v2160
      %v2817 = vpop.f32.mrb[0].mxu0
      %v2818 = vadd.f32 %v2253, %v2817
      %v2819 = vpop.f32.mrb[0].mxu0
      %v2820 = vadd.f32 %v2257, %v2819
      %v2821 = vpop.f32.mrb[0].mxu0
      %v2822 = vadd.f32 %v2253, %v2821
      %v2823 = vpop.f32.mrb[0].mxu0
      %v2824 = vadd.f32 %v2257, %v2823
      %2825 = vmatprep.mubr.bf16.mxu0 0
      %2826 = vmatmul.mubr.bf16.gmra.mrb[0].mxu0 %v2161
      %v2827 = vpop.f32.mrb[0].mxu0
      %v2828 = vadd.f32 %v2253, %v2827
      %v2829 = vpop.f32.mrb[0].mxu0
      %v2830 = vadd.f32 %v2257, %v2829
      %v2831 = vpop.f32.mrb[0].mxu0
      %v2832 = vadd.f32 %v2253, %v2831
      %v2833 = vpop.f32.mrb[0].mxu0
      %v2834 = vadd.f32 %v2257, %v2833
      %2835 = vmatprep.mubr.bf16.mxu0 0
      %2836 = vmatmul.mubr.bf16.gmra.mrb[0].mxu0 %v2162
      %v2837 = vpop.f32.mrb[0].mxu0
      %v2838 = vadd.f32 %v2253, %v2837
      %v2839 = vpop.f32.mrb[0].mxu0
      %v2840 = vadd.f32 %v2257, %v2839
      %v2841 = vpop.f32.mrb[0].mxu0
      %v2842 = vadd.f32 %v2253, %v2841
      %v2843 = vpop.f32.mrb[0].mxu0
      %v2844 = vadd.f32 %v2257, %v2843
      %2845 = vmatprep.mubr.bf16.mxu0 0
      %2846 = vmatmul.mubr.bf16.gmra.mrb[0].mxu0 %v2163
      %v2847 = vpop.f32.mrb[0].mxu0
      %v2848 = vadd.f32 %v2253, %v2847
      %v2849 = vpop.f32.mrb[0].mxu0
      %v2850 = vadd.f32 %v2257, %v2849
      %v2851 = vpop.f32.mrb[0].mxu0
      %v2852 = vadd.f32 %v2253, %v2851
      %v2853 = vpop.f32.mrb[0].mxu0
      %v2854 = vadd.f32 %v2257, %v2853
      %2855 = vmatprep.mubr.bf16.mxu0 0
      %2856 = vmatmul.mubr.bf16.gmra.mrb[0].mxu0 %v2164
      %v2857 = vpop.f32.mrb[0].mxu0
      %v2858 = vadd.f32 %v2253, %v2857
      %v2859 = vpop.f32.mrb[0].mxu0
      %v2860 = vadd.f32 %v2257, %v2859
      %v2861 = vpop.f32.mrb[0].mxu0
      %v2862 = vadd.f32 %v2253, %v2861
      %v2863 = vpop.f32.mrb[0].mxu0
      %v2864 = vadd.f32 %v2257, %v2863
      %2865 = vmatprep.mubr.bf16.mxu0 0
      %2866 = vmatmul.mubr.bf16.gmra.mrb[0].mxu0 %v2165
      %v2867 = vpop.f32.mrb[0].mxu0
      %v2868 = vadd.f32 %v2253, %v2867
      %v2869 = vpop.f32.mrb[0].mxu0
      %v2870 = vadd.f32 %v2257, %v2869
      %v2871 = vpop.f32.mrb[0].mxu0
      %v2872 = vadd.f32 %v2253, %v2871
      %v2873 = vpop.f32.mrb[0].mxu0
      %v2874 = vadd.f32 %v2257, %v2873
      %2875 = vmatprep.mubr.bf16.mxu0 0
      %2876 = vmatmul.mubr.bf16.gmra.mrb[0].mxu0 %v2166
      %v2877 = vpop.f32.mrb[0].mxu0
      %v2878 = vadd.f32 %v2253, %v2877
      %v2879 = vpop.f32.mrb[0].mxu0
      %v2880 = vadd.f32 %v2257, %v2879
      %v2881 = vpop.f32.mrb[0].mxu0
      %v2882 = vadd.f32 %v2253, %v2881
      %v2883 = vpop.f32.mrb[0].mxu0
      %v2884 = vadd.f32 %v2257, %v2883
      %2885 = vmatprep.mubr.bf16.mxu0 0
      %2886 = vmatmul.mubr.bf16.gmra.mrb[0].mxu0 %v2167
      %v2887 = vpop.f32.mrb[0].mxu0
      %v2888 = vadd.f32 %v2253, %v2887
      %v2889 = vpop.f32.mrb[0].mxu0
      %v2890 = vadd.f32 %v2257, %v2889
      %v2891 = vpop.f32.mrb[0].mxu0
      %v2892 = vadd.f32 %v2253, %v2891
      %v2893 = vpop.f32.mrb[0].mxu0
      %v2894 = vadd.f32 %v2257, %v2893
      %2895 = vdwg.mxu0
      %2896 = vmatprep.subr.bf16.mxu0 0
      %2897 = vmatpush1.bf16.msra.mxu0 %v2451
      %2898 = vmatprep.subr.bf16.mxu0 0
      %2899 = vmatpush1.bf16.msra.mxu0 %v2458
      %2900 = vmatprep.subr.bf16.mxu0 0
      %2901 = vmatpush1.bf16.msra.mxu0 %v2465
      %2902 = vmatprep.subr.bf16.mxu0 0
      %2903 = vmatpush1.bf16.msra.mxu0 %v2472
      %2904 = vmatprep.subr.bf16.mxu0 0
      %2905 = vmatpush1.bf16.msra.mxu0 %v2479
      %2906 = vmatprep.subr.bf16.mxu0 0
      %2907 = vmatpush1.bf16.msra.mxu0 %v2486
      %2908 = vmatprep.subr.bf16.mxu0 0
      %2909 = vmatpush1.bf16.msra.mxu0 %v2493
      %2910 = vmatprep.subr.bf16.mxu0 0
      %2911 = vmatpush1.bf16.msra.mxu0 %v2500
      %2912 = vmatprep.subr.bf16.mxu0 0
      %2913 = vmatpush1.bf16.msra.mxu0 0
      %2914 = vmatprep.subr.bf16.mxu0 0
      %2915 = vmatpush1.bf16.msra.mxu0 0
      %2916 = vmatprep.subr.bf16.mxu0 0
      %2917 = vmatpush1.bf16.msra.mxu0 0
      %2918 = vmatprep.subr.bf16.mxu0 0
      %2919 = vmatpush1.bf16.msra.mxu0 0
      %2920 = vmatprep.subr.bf16.mxu0 0
      %2921 = vmatpush1.bf16.msra.mxu0 0
      %2922 = vmatprep.subr.bf16.mxu0 0
      %2923 = vmatpush1.bf16.msra.mxu0 0
      %2924 = vmatprep.subr.bf16.mxu0 0
      %2925 = vmatpush1.bf16.msra.mxu0 0
      %2926 = vmatprep.subr.bf16.mxu0 0
      %2927 = vmatpush1.bf16.msra.mxu0 0
      %2928 = vmatprep.mubr.bf16.mxu0 0
      %2929 = vmatmul.mubr.bf16.gmra.mrb[0].mxu0 %v2160
      %v2930 = vpop.f32.mrb[0].mxu0
      %v2931 = vadd.f32 %v2261, %v2930
      %v2932 = vpop.f32.mrb[0].mxu0
      %v2933 = vpop.f32.mrb[0].mxu0
      %v2934 = vadd.f32 %v2261, %v2933
      %v2935 = vpop.f32.mrb[0].mxu0
      %2936 = vmatprep.mubr.bf16.mxu0 0
      %2937 = vmatmul.mubr.bf16.gmra.mrb[0].mxu0 %v2161
      %v2938 = vpop.f32.mrb[0].mxu0
      %v2939 = vadd.f32 %v2261, %v2938
      %v2940 = vpop.f32.mrb[0].mxu0
      %v2941 = vpop.f32.mrb[0].mxu0
      %v2942 = vadd.f32 %v2261, %v2941
      %v2943 = vpop.f32.mrb[0].mxu0
      %2944 = vmatprep.mubr.bf16.mxu0 0
      %2945 = vmatmul.mubr.bf16.gmra.mrb[0].mxu0 %v2162
      %v2946 = vpop.f32.mrb[0].mxu0
      %v2947 = vadd.f32 %v2261, %v2946
      %v2948 = vpop.f32.mrb[0].mxu0
      %v2949 = vpop.f32.mrb[0].mxu0
      %v2950 = vadd.f32 %v2261, %v2949
      %v2951 = vpop.f32.mrb[0].mxu0
      %2952 = vmatprep.mubr.bf16.mxu0 0
      %2953 = vmatmul.mubr.bf16.gmra.mrb[0].mxu0 %v2163
      %v2954 = vpop.f32.mrb[0].mxu0
      %v2955 = vadd.f32 %v2261, %v2954
      %v2956 = vpop.f32.mrb[0].mxu0
      %v2957 = vpop.f32.mrb[0].mxu0
      %v2958 = vadd.f32 %v2261, %v2957
      %v2959 = vpop.f32.mrb[0].mxu0
      %2960 = vmatprep.mubr.bf16.mxu0 0
      %2961 = vmatmul.mubr.bf16.gmra.mrb[0].mxu0 %v2164
      %v2962 = vpop.f32.mrb[0].mxu0
      %v2963 = vadd.f32 %v2261, %v2962
      %v2964 = vpop.f32.mrb[0].mxu0
      %v2965 = vpop.f32.mrb[0].mxu0
      %v2966 = vadd.f32 %v2261, %v2965
      %v2967 = vpop.f32.mrb[0].mxu0
      %2968 = vmatprep.mubr.bf16.mxu0 0
      %2969 = vmatmul.mubr.bf16.gmra.mrb[0].mxu0 %v2165
      %v2970 = vpop.f32.mrb[0].mxu0
      %v2971 = vadd.f32 %v2261, %v2970
      %v2972 = vpop.f32.mrb[0].mxu0
      %v2973 = vpop.f32.mrb[0].mxu0
      %v2974 = vadd.f32 %v2261, %v2973
      %v2975 = vpop.f32.mrb[0].mxu0
      %2976 = vmatprep.mubr.bf16.mxu0 0
      %2977 = vmatmul.mubr.bf16.gmra.mrb[0].mxu0 %v2166
      %v2978 = vpop.f32.mrb[0].mxu0
      %v2979 = vadd.f32 %v2261, %v2978
      %v2980 = vpop.f32.mrb[0].mxu0
      %v2981 = vpop.f32.mrb[0].mxu0
      %v2982 = vadd.f32 %v2261, %v2981
      %v2983 = vpop.f32.mrb[0].mxu0
      %2984 = vmatprep.mubr.bf16.mxu0 0
      %2985 = vmatmul.mubr.bf16.gmra.mrb[0].mxu0 %v2167
      %v2986 = vpop.f32.mrb[0].mxu0
      %v2987 = vadd.f32 %v2261, %v2986
      %v2988 = vpop.f32.mrb[0].mxu0
      %v2989 = vpop.f32.mrb[0].mxu0
      %v2990 = vadd.f32 %v2261, %v2989
      %v2991 = vpop.f32.mrb[0].mxu0
      %2992 = vdwg.mxu0
      %v2993 = vxor.u32 %v2592, 2147483648
      %v2994 = vxor.u32 %v2594, 2147483648
      %v2995 = vxor.u32 %v2705, 2147483648
      %v2996 = vxor.u32 %v2707, 2147483648
      %v2997 = vxor.u32 %v2818, 2147483648
      %v2998 = vxor.u32 %v2820, 2147483648
      %v2999 = vxor.u32 %v2931, 2147483648
      %v3000 = vxor.u32 %v2596, 2147483648
      %v3001 = vxor.u32 %v2598, 2147483648
      %v3002 = vxor.u32 %v2709, 2147483648
      %v3003 = vxor.u32 %v2711, 2147483648
      %v3004 = vxor.u32 %v2822, 2147483648
      %v3005 = vxor.u32 %v2824, 2147483648
      %v3006 = vxor.u32 %v2934, 2147483648
      %v3007 = vxor.u32 %v2602, 2147483648
      %v3008 = vxor.u32 %v2604, 2147483648
      %v3009 = vxor.u32 %v2715, 2147483648
      %v3010 = vxor.u32 %v2717, 2147483648
      %v3011 = vxor.u32 %v2828, 2147483648
      %v3012 = vxor.u32 %v2830, 2147483648
      %v3013 = vxor.u32 %v2939, 2147483648
      %v3014 = vxor.u32 %v2606, 2147483648
      %v3015 = vxor.u32 %v2608, 2147483648
      %v3016 = vxor.u32 %v2719, 2147483648
      %v3017 = vxor.u32 %v2721, 2147483648
      %v3018 = vxor.u32 %v2832, 2147483648
      %v3019 = vxor.u32 %v2834, 2147483648
      %v3020 = vxor.u32 %v2942, 2147483648
      %v3021 = vxor.u32 %v2612, 2147483648
      %v3022 = vxor.u32 %v2614, 2147483648
      %v3023 = vxor.u32 %v2725, 2147483648
      %v3024 = vxor.u32 %v2727, 2147483648
      %v3025 = vxor.u32 %v2838, 2147483648
      %v3026 = vxor.u32 %v2840, 2147483648
      %v3027 = vxor.u32 %v2947, 2147483648
      %v3028 = vxor.u32 %v2616, 2147483648
      %v3029 = vxor.u32 %v2618, 2147483648
      %v3030 = vxor.u32 %v2729, 2147483648
      %v3031 = vxor.u32 %v2731, 2147483648
      %v3032 = vxor.u32 %v2842, 2147483648
      %v3033 = vxor.u32 %v2844, 2147483648
      %v3034 = vxor.u32 %v2950, 2147483648
      %v3035 = vxor.u32 %v2622, 2147483648
      %v3036 = vxor.u32 %v2624, 2147483648
      %v3037 = vxor.u32 %v2735, 2147483648
      %v3038 = vxor.u32 %v2737, 2147483648
      %v3039 = vxor.u32 %v2848, 2147483648
      %v3040 = vxor.u32 %v2850, 2147483648
      %v3041 = vxor.u32 %v2955, 2147483648
      %v3042 = vxor.u32 %v2626, 2147483648
      %v3043 = vxor.u32 %v2628, 2147483648
      %v3044 = vxor.u32 %v2739, 2147483648
      %v3045 = vxor.u32 %v2741, 2147483648
      %v3046 = vxor.u32 %v2852, 2147483648
      %v3047 = vxor.u32 %v2854, 2147483648
      %v3048 = vxor.u32 %v2958, 2147483648
      %v3049 = vxor.u32 %v2632, 2147483648
      %v3050 = vxor.u32 %v2634, 2147483648
      %v3051 = vxor.u32 %v2745, 2147483648
      %v3052 = vxor.u32 %v2747, 2147483648
      %v3053 = vxor.u32 %v2858, 2147483648
      %v3054 = vxor.u32 %v2860, 2147483648
      %v3055 = vxor.u32 %v2963, 2147483648
      %v3056 = vxor.u32 %v2636, 2147483648
      %v3057 = vxor.u32 %v2638, 2147483648
      %v3058 = vxor.u32 %v2749, 2147483648
      %v3059 = vxor.u32 %v2751, 2147483648
      %v3060 = vxor.u32 %v2862, 2147483648
      %v3061 = vxor.u32 %v2864, 2147483648
      %v3062 = vxor.u32 %v2966, 2147483648
      %v3063 = vxor.u32 %v2642, 2147483648
      %v3064 = vxor.u32 %v2644, 2147483648
      %v3065 = vxor.u32 %v2755, 2147483648
      %v3066 = vxor.u32 %v2757, 2147483648
      %v3067 = vxor.u32 %v2868, 2147483648
      %v3068 = vxor.u32 %v2870, 2147483648
      %v3069 = vxor.u32 %v2971, 2147483648
      %v3070 = vxor.u32 %v2646, 2147483648
      %v3071 = vxor.u32 %v2648, 2147483648
      %v3072 = vxor.u32 %v2759, 2147483648
      %v3073 = vxor.u32 %v2761, 2147483648
      %v3074 = vxor.u32 %v2872, 2147483648
      %v3075 = vxor.u32 %v2874, 2147483648
      %v3076 = vxor.u32 %v2974, 2147483648
      %v3077 = vxor.u32 %v2652, 2147483648
      %v3078 = vxor.u32 %v2654, 2147483648
      %v3079 = vxor.u32 %v2765, 2147483648
      %v3080 = vxor.u32 %v2767, 2147483648
      %v3081 = vxor.u32 %v2878, 2147483648
      %v3082 = vxor.u32 %v2880, 2147483648
      %v3083 = vxor.u32 %v2979, 2147483648
      %v3084 = vxor.u32 %v2656, 2147483648
      %v3085 = vxor.u32 %v2658, 2147483648
      %v3086 = vxor.u32 %v2769, 2147483648
      %v3087 = vxor.u32 %v2771, 2147483648
      %v3088 = vxor.u32 %v2882, 2147483648
      %v3089 = vxor.u32 %v2884, 2147483648
      %v3090 = vxor.u32 %v2982, 2147483648
      %v3091 = vxor.u32 %v2662, 2147483648
      %v3092 = vxor.u32 %v2664, 2147483648
      %v3093 = vxor.u32 %v2775, 2147483648
      %v3094 = vxor.u32 %v2777, 2147483648
      %v3095 = vxor.u32 %v2888, 2147483648
      %v3096 = vxor.u32 %v2890, 2147483648
      %v3097 = vxor.u32 %v2987, 2147483648
      %v3098 = vxor.u32 %v2666, 2147483648
      %v3099 = vxor.u32 %v2668, 2147483648
      %v3100 = vxor.u32 %v2779, 2147483648
      %v3101 = vxor.u32 %v2781, 2147483648
      %v3102 = vxor.u32 %v2892, 2147483648
      %v3103 = vxor.u32 %v2894, 2147483648
      %v3104 = vxor.u32 %v2990, 2147483648
      %v3105 = vmul.f32 %v2993, 1.442695
      %v3106 = vpow.pop %v3105
      %v3107 = vmul.f32 %v2994, 1.442695
      %v3108 = vpow.pop %v3107
      %v3109 = vmul.f32 %v2995, 1.442695
      %v3110 = vpow.pop %v3109
      %v3111 = vmul.f32 %v2996, 1.442695
      %v3112 = vpow.pop %v3111
      %v3113 = vmul.f32 %v2997, 1.442695
      %v3114 = vpow.pop %v3113
      %v3115 = vmul.f32 %v2998, 1.442695
      %v3116 = vpow.pop %v3115
      %v3117 = vmul.f32 %v2999, 1.442695
      %v3118 = vpow.pop %v3117
      %v3119 = vmul.f32 %v3000, 1.442695
      %v3120 = vpow.pop %v3119
      %v3121 = vmul.f32 %v3001, 1.442695
      %v3122 = vpow.pop %v3121
      %v3123 = vmul.f32 %v3002, 1.442695
      %v3124 = vpow.pop %v3123
      %v3125 = vmul.f32 %v3003, 1.442695
      %v3126 = vpow.pop %v3125
      %v3127 = vmul.f32 %v3004, 1.442695
      %v3128 = vpow.pop %v3127
      %v3129 = vmul.f32 %v3005, 1.442695
      %v3130 = vpow.pop %v3129
      %v3131 = vmul.f32 %v3006, 1.442695
      %v3132 = vpow.pop %v3131
      %v3133 = vmul.f32 %v3007, 1.442695
      %v3134 = vpow.pop %v3133
      %v3135 = vmul.f32 %v3008, 1.442695
      %v3136 = vpow.pop %v3135
      %v3137 = vmul.f32 %v3009, 1.442695
      %v3138 = vpow.pop %v3137
      %v3139 = vmul.f32 %v3010, 1.442695
      %v3140 = vpow.pop %v3139
      %v3141 = vmul.f32 %v3011, 1.442695
      %v3142 = vpow.pop %v3141
      %v3143 = vmul.f32 %v3012, 1.442695
      %v3144 = vpow.pop %v3143
      %v3145 = vmul.f32 %v3013, 1.442695
      %v3146 = vpow.pop %v3145
      %v3147 = vmul.f32 %v3014, 1.442695
      %v3148 = vpow.pop %v3147
      %v3149 = vmul.f32 %v3015, 1.442695
      %v3150 = vpow.pop %v3149
      %v3151 = vmul.f32 %v3016, 1.442695
      %v3152 = vpow.pop %v3151
      %v3153 = vmul.f32 %v3017, 1.442695
      %v3154 = vpow.pop %v3153
      %v3155 = vmul.f32 %v3018, 1.442695
      %v3156 = vpow.pop %v3155
      %v3157 = vmul.f32 %v3019, 1.442695
      %v3158 = vpow.pop %v3157
      %v3159 = vmul.f32 %v3020, 1.442695
      %v3160 = vpow.pop %v3159
      %v3161 = vmul.f32 %v3021, 1.442695
      %v3162 = vpow.pop %v3161
      %v3163 = vmul.f32 %v3022, 1.442695
      %v3164 = vpow.pop %v3163
      %v3165 = vmul.f32 %v3023, 1.442695
      %v3166 = vpow.pop %v3165
      %v3167 = vmul.f32 %v3024, 1.442695
      %v3168 = vpow.pop %v3167
      %v3169 = vmul.f32 %v3025, 1.442695
      %v3170 = vpow.pop %v3169
      %v3171 = vmul.f32 %v3026, 1.442695
      %v3172 = vpow.pop %v3171
      %v3173 = vmul.f32 %v3027, 1.442695
      %v3174 = vpow.pop %v3173
      %v3175 = vmul.f32 %v3028, 1.442695
      %v3176 = vpow.pop %v3175
      %v3177 = vmul.f32 %v3029, 1.442695
      %v3178 = vpow.pop %v3177
      %v3179 = vmul.f32 %v3030, 1.442695
      %v3180 = vpow.pop %v3179
      %v3181 = vmul.f32 %v3031, 1.442695
      %v3182 = vpow.pop %v3181
      %v3183 = vmul.f32 %v3032, 1.442695
      %v3184 = vpow.pop %v3183
      %v3185 = vmul.f32 %v3033, 1.442695
      %v3186 = vpow.pop %v3185
      %v3187 = vmul.f32 %v3034, 1.442695
      %v3188 = vpow.pop %v3187
      %v3189 = vmul.f32 %v3035, 1.442695
      %v3190 = vpow.pop %v3189
      %v3191 = vmul.f32 %v3036, 1.442695
      %v3192 = vpow.pop %v3191
      %v3193 = vmul.f32 %v3037, 1.442695
      %v3194 = vpow.pop %v3193
      %v3195 = vmul.f32 %v3038, 1.442695
      %v3196 = vpow.pop %v3195
      %v3197 = vmul.f32 %v3039, 1.442695
      %v3198 = vpow.pop %v3197
      %v3199 = vmul.f32 %v3040, 1.442695
      %v3200 = vpow.pop %v3199
      %v3201 = vmul.f32 %v3041, 1.442695
      %v3202 = vpow.pop %v3201
      %v3203 = vmul.f32 %v3042, 1.442695
      %v3204 = vpow.pop %v3203
      %v3205 = vmul.f32 %v3043, 1.442695
      %v3206 = vpow.pop %v3205
      %v3207 = vmul.f32 %v3044, 1.442695
      %v3208 = vpow.pop %v3207
      %v3209 = vmul.f32 %v3045, 1.442695
      %v3210 = vpow.pop %v3209
      %v3211 = vmul.f32 %v3046, 1.442695
      %v3212 = vpow.pop %v3211
      %v3213 = vmul.f32 %v3047, 1.442695
      %v3214 = vpow.pop %v3213
      %v3215 = vmul.f32 %v3048, 1.442695
      %v3216 = vpow.pop %v3215
      %v3217 = vmul.f32 %v3049, 1.442695
      %v3218 = vpow.pop %v3217
      %v3219 = vmul.f32 %v3050, 1.442695
      %v3220 = vpow.pop %v3219
      %v3221 = vmul.f32 %v3051, 1.442695
      %v3222 = vpow.pop %v3221
      %v3223 = vmul.f32 %v3052, 1.442695
      %v3224 = vpow.pop %v3223
      %v3225 = vmul.f32 %v3053, 1.442695
      %v3226 = vpow.pop %v3225
      %v3227 = vmul.f32 %v3054, 1.442695
      %v3228 = vpow.pop %v3227
      %v3229 = vmul.f32 %v3055, 1.442695
      %v3230 = vpow.pop %v3229
      %v3231 = vmul.f32 %v3056, 1.442695
      %v3232 = vpow.pop %v3231
      %v3233 = vmul.f32 %v3057, 1.442695
      %v3234 = vpow.pop %v3233
      %v3235 = vmul.f32 %v3058, 1.442695
      %v3236 = vpow.pop %v3235
      %v3237 = vmul.f32 %v3059, 1.442695
      %v3238 = vpow.pop %v3237
      %v3239 = vmul.f32 %v3060, 1.442695
      %v3240 = vpow.pop %v3239
      %v3241 = vmul.f32 %v3061, 1.442695
      %v3242 = vpow.pop %v3241
      %v3243 = vmul.f32 %v3062, 1.442695
      %v3244 = vpow.pop %v3243
      %v3245 = vmul.f32 %v3063, 1.442695
      %v3246 = vpow.pop %v3245
      %v3247 = vmul.f32 %v3064, 1.442695
      %v3248 = vpow.pop %v3247
      %v3249 = vmul.f32 %v3065, 1.442695
      %v3250 = vpow.pop %v3249
      %v3251 = vmul.f32 %v3066, 1.442695
      %v3252 = vpow.pop %v3251
      %v3253 = vmul.f32 %v3067, 1.442695
      %v3254 = vpow.pop %v3253
      %v3255 = vmul.f32 %v3068, 1.442695
      %v3256 = vpow.pop %v3255
      %v3257 = vmul.f32 %v3069, 1.442695
      %v3258 = vpow.pop %v3257
      %v3259 = vmul.f32 %v3070, 1.442695
      %v3260 = vpow.pop %v3259
      %v3261 = vmul.f32 %v3071, 1.442695
      %v3262 = vpow.pop %v3261
      %v3263 = vmul.f32 %v3072, 1.442695
      %v3264 = vpow.pop %v3263
      %v3265 = vmul.f32 %v3073, 1.442695
      %v3266 = vpow.pop %v3265
      %v3267 = vmul.f32 %v3074, 1.442695
      %v3268 = vpow.pop %v3267
      %v3269 = vmul.f32 %v3075, 1.442695
      %v3270 = vpow.pop %v3269
      %v3271 = vmul.f32 %v3076, 1.442695
      %v3272 = vpow.pop %v3271
      %v3273 = vmul.f32 %v3077, 1.442695
      %v3274 = vpow.pop %v3273
      %v3275 = vmul.f32 %v3078, 1.442695
      %v3276 = vpow.pop %v3275
      %v3277 = vmul.f32 %v3079, 1.442695
      %v3278 = vpow.pop %v3277
      %v3279 = vmul.f32 %v3080, 1.442695
      %v3280 = vpow.pop %v3279
      %v3281 = vmul.f32 %v3081, 1.442695
      %v3282 = vpow.pop %v3281
      %v3283 = vmul.f32 %v3082, 1.442695
      %v3284 = vpow.pop %v3283
      %v3285 = vmul.f32 %v3083, 1.442695
      %v3286 = vpow.pop %v3285
      %v3287 = vmul.f32 %v3084, 1.442695
      %v3288 = vpow.pop %v3287
      %v3289 = vmul.f32 %v3085, 1.442695
      %v3290 = vpow.pop %v3289
      %v3291 = vmul.f32 %v3086, 1.442695
      %v3292 = vpow.pop %v3291
      %v3293 = vmul.f32 %v3087, 1.442695
      %v3294 = vpow.pop %v3293
      %v3295 = vmul.f32 %v3088, 1.442695
      %v3296 = vpow.pop %v3295
      %v3297 = vmul.f32 %v3089, 1.442695
      %v3298 = vpow.pop %v3297
      %v3299 = vmul.f32 %v3090, 1.442695
      %v3300 = vpow.pop %v3299
      %v3301 = vmul.f32 %v3091, 1.442695
      %v3302 = vpow.pop %v3301
      %v3303 = vmul.f32 %v3092, 1.442695
      %v3304 = vpow.pop %v3303
      %v3305 = vmul.f32 %v3093, 1.442695
      %v3306 = vpow.pop %v3305
      %v3307 = vmul.f32 %v3094, 1.442695
      %v3308 = vpow.pop %v3307
      %v3309 = vmul.f32 %v3095, 1.442695
      %v3310 = vpow.pop %v3309
      %v3311 = vmul.f32 %v3096, 1.442695
      %v3312 = vpow.pop %v3311
      %v3313 = vmul.f32 %v3097, 1.442695
      %v3314 = vpow.pop %v3313
      %v3315 = vmul.f32 %v3098, 1.442695
      %v3316 = vpow.pop %v3315
      %v3317 = vmul.f32 %v3099, 1.442695
      %v3318 = vpow.pop %v3317
      %v3319 = vmul.f32 %v3100, 1.442695
      %v3320 = vpow.pop %v3319
      %v3321 = vmul.f32 %v3101, 1.442695
      %v3322 = vpow.pop %v3321
      %v3323 = vmul.f32 %v3102, 1.442695
      %v3324 = vpow.pop %v3323
      %v3325 = vmul.f32 %v3103, 1.442695
      %v3326 = vpow.pop %v3325
      %v3327 = vmul.f32 %v3104, 1.442695
      %v3328 = vpow.pop %v3327
      %v3329 = vadd.f32 %v3106, 1.0
      %v3330 = vadd.f32 %v3108, 1.0
      %v3331 = vadd.f32 %v3110, 1.0
      %v3332 = vadd.f32 %v3112, 1.0
      %v3333 = vadd.f32 %v3114, 1.0
      %v3334 = vadd.f32 %v3116, 1.0
      %v3335 = vadd.f32 %v3118, 1.0
      %v3336 = vadd.f32 %v3120, 1.0
      %v3337 = vadd.f32 %v3122, 1.0
      %v3338 = vadd.f32 %v3124, 1.0
      %v3339 = vadd.f32 %v3126, 1.0
      %v3340 = vadd.f32 %v3128, 1.0
      %v3341 = vadd.f32 %v3130, 1.0
      %v3342 = vadd.f32 %v3132, 1.0
      %v3343 = vadd.f32 %v3134, 1.0
      %v3344 = vadd.f32 %v3136, 1.0
      %v3345 = vadd.f32 %v3138, 1.0
      %v3346 = vadd.f32 %v3140, 1.0
      %v3347 = vadd.f32 %v3142, 1.0
      %v3348 = vadd.f32 %v3144, 1.0
      %v3349 = vadd.f32 %v3146, 1.0
      %v3350 = vadd.f32 %v3148, 1.0
      %v3351 = vadd.f32 %v3150, 1.0
      %v3352 = vadd.f32 %v3152, 1.0
      %v3353 = vadd.f32 %v3154, 1.0
      %v3354 = vadd.f32 %v3156, 1.0
      %v3355 = vadd.f32 %v3158, 1.0
      %v3356 = vadd.f32 %v3160, 1.0
      %v3357 = vadd.f32 %v3162, 1.0
      %v3358 = vadd.f32 %v3164, 1.0
      %v3359 = vadd.f32 %v3166, 1.0
      %v3360 = vadd.f32 %v3168, 1.0
      %v3361 = vadd.f32 %v3170, 1.0
      %v3362 = vadd.f32 %v3172, 1.0
      %v3363 = vadd.f32 %v3174, 1.0
      %v3364 = vadd.f32 %v3176, 1.0
      %v3365 = vadd.f32 %v3178, 1.0
      %v3366 = vadd.f32 %v3180, 1.0
      %v3367 = vadd.f32 %v3182, 1.0
      %v3368 = vadd.f32 %v3184, 1.0
      %v3369 = vadd.f32 %v3186, 1.0
      %v3370 = vadd.f32 %v3188, 1.0
      %v3371 = vadd.f32 %v3190, 1.0
      %v3372 = vadd.f32 %v3192, 1.0
      %v3373 = vadd.f32 %v3194, 1.0
      %v3374 = vadd.f32 %v3196, 1.0
      %v3375 = vadd.f32 %v3198, 1.0
      %v3376 = vadd.f32 %v3200, 1.0
      %v3377 = vadd.f32 %v3202, 1.0
      %v3378 = vadd.f32 %v3204, 1.0
      %v3379 = vadd.f32 %v3206, 1.0
      %v3380 = vadd.f32 %v3208, 1.0
      %v3381 = vadd.f32 %v3210, 1.0
      %v3382 = vadd.f32 %v3212, 1.0
      %v3383 = vadd.f32 %v3214, 1.0
      %v3384 = vadd.f32 %v3216, 1.0
      %v3385 = vadd.f32 %v3218, 1.0
      %v3386 = vadd.f32 %v3220, 1.0
      %v3387 = vadd.f32 %v3222, 1.0
      %v3388 = vadd.f32 %v3224, 1.0
      %v3389 = vadd.f32 %v3226, 1.0
      %v3390 = vadd.f32 %v3228, 1.0
      %v3391 = vadd.f32 %v3230, 1.0
      %v3392 = vadd.f32 %v3232, 1.0
      %v3393 = vadd.f32 %v3234, 1.0
      %v3394 = vadd.f32 %v3236, 1.0
      %v3395 = vadd.f32 %v3238, 1.0
      %v3396 = vadd.f32 %v3240, 1.0
      %v3397 = vadd.f32 %v3242, 1.0
      %v3398 = vadd.f32 %v3244, 1.0
      %v3399 = vadd.f32 %v3246, 1.0
      %v3400 = vadd.f32 %v3248, 1.0
      %v3401 = vadd.f32 %v3250, 1.0
      %v3402 = vadd.f32 %v3252, 1.0
      %v3403 = vadd.f32 %v3254, 1.0
      %v3404 = vadd.f32 %v3256, 1.0
      %v3405 = vadd.f32 %v3258, 1.0
      %v3406 = vadd.f32 %v3260, 1.0
      %v3407 = vadd.f32 %v3262, 1.0
      %v3408 = vadd.f32 %v3264, 1.0
      %v3409 = vadd.f32 %v3266, 1.0
      %v3410 = vadd.f32 %v3268, 1.0
      %v3411 = vadd.f32 %v3270, 1.0
      %v3412 = vadd.f32 %v3272, 1.0
      %v3413 = vadd.f32 %v3274, 1.0
      %v3414 = vadd.f32 %v3276, 1.0
      %v3415 = vadd.f32 %v3278, 1.0
      %v3416 = vadd.f32 %v3280, 1.0
      %v3417 = vadd.f32 %v3282, 1.0
      %v3418 = vadd.f32 %v3284, 1.0
      %v3419 = vadd.f32 %v3286, 1.0
      %v3420 = vadd.f32 %v3288, 1.0
      %v3421 = vadd.f32 %v3290, 1.0
      %v3422 = vadd.f32 %v3292, 1.0
      %v3423 = vadd.f32 %v3294, 1.0
      %v3424 = vadd.f32 %v3296, 1.0
      %v3425 = vadd.f32 %v3298, 1.0
      %v3426 = vadd.f32 %v3300, 1.0
      %v3427 = vadd.f32 %v3302, 1.0
      %v3428 = vadd.f32 %v3304, 1.0
      %v3429 = vadd.f32 %v3306, 1.0
      %v3430 = vadd.f32 %v3308, 1.0
      %v3431 = vadd.f32 %v3310, 1.0
      %v3432 = vadd.f32 %v3312, 1.0
      %v3433 = vadd.f32 %v3314, 1.0
      %v3434 = vadd.f32 %v3316, 1.0
      %v3435 = vadd.f32 %v3318, 1.0
      %v3436 = vadd.f32 %v3320, 1.0
      %v3437 = vadd.f32 %v3322, 1.0
      %v3438 = vadd.f32 %v3324, 1.0
      %v3439 = vadd.f32 %v3326, 1.0
      %v3440 = vadd.f32 %v3328, 1.0
      %v3441 = vrcp.pop %v3329
      %v3442 = vmul.f32 1.0, %v3441
      %v3443 = vrcp.pop %v3330
      %v3444 = vmul.f32 1.0, %v3443
      %v3445 = vrcp.pop %v3331
      %v3446 = vmul.f32 1.0, %v3445
      %v3447 = vrcp.pop %v3332
      %v3448 = vmul.f32 1.0, %v3447
      %v3449 = vrcp.pop %v3333
      %v3450 = vmul.f32 1.0, %v3449
      %v3451 = vrcp.pop %v3334
      %v3452 = vmul.f32 1.0, %v3451
      %v3453 = vrcp.pop %v3335
      %v3454 = vmul.f32 1.0, %v3453
      %v3455 = vrcp.pop %v3336
      %v3456 = vmul.f32 1.0, %v3455
      %v3457 = vrcp.pop %v3337
      %v3458 = vmul.f32 1.0, %v3457
      %v3459 = vrcp.pop %v3338
      %v3460 = vmul.f32 1.0, %v3459
      %v3461 = vrcp.pop %v3339
      %v3462 = vmul.f32 1.0, %v3461
      %v3463 = vrcp.pop %v3340
      %v3464 = vmul.f32 1.0, %v3463
      %v3465 = vrcp.pop %v3341
      %v3466 = vmul.f32 1.0, %v3465
      %v3467 = vrcp.pop %v3342
      %v3468 = vmul.f32 1.0, %v3467
      %v3469 = vrcp.pop %v3343
      %v3470 = vmul.f32 1.0, %v3469
      %v3471 = vrcp.pop %v3344
      %v3472 = vmul.f32 1.0, %v3471
      %v3473 = vrcp.pop %v3345
      %v3474 = vmul.f32 1.0, %v3473
      %v3475 = vrcp.pop %v3346
      %v3476 = vmul.f32 1.0, %v3475
      %v3477 = vrcp.pop %v3347
      %v3478 = vmul.f32 1.0, %v3477
      %v3479 = vrcp.pop %v3348
      %v3480 = vmul.f32 1.0, %v3479
      %v3481 = vrcp.pop %v3349
      %v3482 = vmul.f32 1.0, %v3481
      %v3483 = vrcp.pop %v3350
      %v3484 = vmul.f32 1.0, %v3483
      %v3485 = vrcp.pop %v3351
      %v3486 = vmul.f32 1.0, %v3485
      %v3487 = vrcp.pop %v3352
      %v3488 = vmul.f32 1.0, %v3487
      %v3489 = vrcp.pop %v3353
      %v3490 = vmul.f32 1.0, %v3489
      %v3491 = vrcp.pop %v3354
      %v3492 = vmul.f32 1.0, %v3491
      %v3493 = vrcp.pop %v3355
      %v3494 = vmul.f32 1.0, %v3493
      %v3495 = vrcp.pop %v3356
      %v3496 = vmul.f32 1.0, %v3495
      %v3497 = vrcp.pop %v3357
      %v3498 = vmul.f32 1.0, %v3497
      %v3499 = vrcp.pop %v3358
      %v3500 = vmul.f32 1.0, %v3499
      %v3501 = vrcp.pop %v3359
      %v3502 = vmul.f32 1.0, %v3501
      %v3503 = vrcp.pop %v3360
      %v3504 = vmul.f32 1.0, %v3503
      %v3505 = vrcp.pop %v3361
      %v3506 = vmul.f32 1.0, %v3505
      %v3507 = vrcp.pop %v3362
      %v3508 = vmul.f32 1.0, %v3507
      %v3509 = vrcp.pop %v3363
      %v3510 = vmul.f32 1.0, %v3509
      %v3511 = vrcp.pop %v3364
      %v3512 = vmul.f32 1.0, %v3511
      %v3513 = vrcp.pop %v3365
      %v3514 = vmul.f32 1.0, %v3513
      %v3515 = vrcp.pop %v3366
      %v3516 = vmul.f32 1.0, %v3515
      %v3517 = vrcp.pop %v3367
      %v3518 = vmul.f32 1.0, %v3517
      %v3519 = vrcp.pop %v3368
      %v3520 = vmul.f32 1.0, %v3519
      %v3521 = vrcp.pop %v3369
      %v3522 = vmul.f32 1.0, %v3521
      %v3523 = vrcp.pop %v3370
      %v3524 = vmul.f32 1.0, %v3523
      %v3525 = vrcp.pop %v3371
      %v3526 = vmul.f32 1.0, %v3525
      %v3527 = vrcp.pop %v3372
      %v3528 = vmul.f32 1.0, %v3527
      %v3529 = vrcp.pop %v3373
      %v3530 = vmul.f32 1.0, %v3529
      %v3531 = vrcp.pop %v3374
      %v3532 = vmul.f32 1.0, %v3531
      %v3533 = vrcp.pop %v3375
      %v3534 = vmul.f32 1.0, %v3533
      %v3535 = vrcp.pop %v3376
      %v3536 = vmul.f32 1.0, %v3535
      %v3537 = vrcp.pop %v3377
      %v3538 = vmul.f32 1.0, %v3537
      %v3539 = vrcp.pop %v3378
      %v3540 = vmul.f32 1.0, %v3539
      %v3541 = vrcp.pop %v3379
      %v3542 = vmul.f32 1.0, %v3541
      %v3543 = vrcp.pop %v3380
      %v3544 = vmul.f32 1.0, %v3543
      %v3545 = vrcp.pop %v3381
      %v3546 = vmul.f32 1.0, %v3545
      %v3547 = vrcp.pop %v3382
      %v3548 = vmul.f32 1.0, %v3547
      %v3549 = vrcp.pop %v3383
      %v3550 = vmul.f32 1.0, %v3549
      %v3551 = vrcp.pop %v3384
      %v3552 = vmul.f32 1.0, %v3551
      %v3553 = vrcp.pop %v3385
      %v3554 = vmul.f32 1.0, %v3553
      %v3555 = vrcp.pop %v3386
      %v3556 = vmul.f32 1.0, %v3555
      %v3557 = vrcp.pop %v3387
      %v3558 = vmul.f32 1.0, %v3557
      %v3559 = vrcp.pop %v3388
      %v3560 = vmul.f32 1.0, %v3559
      %v3561 = vrcp.pop %v3389
      %v3562 = vmul.f32 1.0, %v3561
      %v3563 = vrcp.pop %v3390
      %v3564 = vmul.f32 1.0, %v3563
      %v3565 = vrcp.pop %v3391
      %v3566 = vmul.f32 1.0, %v3565
      %v3567 = vrcp.pop %v3392
      %v3568 = vmul.f32 1.0, %v3567
      %v3569 = vrcp.pop %v3393
      %v3570 = vmul.f32 1.0, %v3569
      %v3571 = vrcp.pop %v3394
      %v3572 = vmul.f32 1.0, %v3571
      %v3573 = vrcp.pop %v3395
      %v3574 = vmul.f32 1.0, %v3573
      %v3575 = vrcp.pop %v3396
      %v3576 = vmul.f32 1.0, %v3575
      %v3577 = vrcp.pop %v3397
      %v3578 = vmul.f32 1.0, %v3577
      %v3579 = vrcp.pop %v3398
      %v3580 = vmul.f32 1.0, %v3579
      %v3581 = vrcp.pop %v3399
      %v3582 = vmul.f32 1.0, %v3581
      %v3583 = vrcp.pop %v3400
      %v3584 = vmul.f32 1.0, %v3583
      %v3585 = vrcp.pop %v3401
      %v3586 = vmul.f32 1.0, %v3585
      %v3587 = vrcp.pop %v3402
      %v3588 = vmul.f32 1.0, %v3587
      %v3589 = vrcp.pop %v3403
      %v3590 = vmul.f32 1.0, %v3589
      %v3591 = vrcp.pop %v3404
      %v3592 = vmul.f32 1.0, %v3591
      %v3593 = vrcp.pop %v3405
      %v3594 = vmul.f32 1.0, %v3593
      %v3595 = vrcp.pop %v3406
      %v3596 = vmul.f32 1.0, %v3595
      %v3597 = vrcp.pop %v3407
      %v3598 = vmul.f32 1.0, %v3597
      %v3599 = vrcp.pop %v3408
      %v3600 = vmul.f32 1.0, %v3599
      %v3601 = vrcp.pop %v3409
      %v3602 = vmul.f32 1.0, %v3601
      %v3603 = vrcp.pop %v3410
      %v3604 = vmul.f32 1.0, %v3603
      %v3605 = vrcp.pop %v3411
      %v3606 = vmul.f32 1.0, %v3605
      %v3607 = vrcp.pop %v3412
      %v3608 = vmul.f32 1.0, %v3607
      %v3609 = vrcp.pop %v3413
      %v3610 = vmul.f32 1.0, %v3609
      %v3611 = vrcp.pop %v3414
      %v3612 = vmul.f32 1.0, %v3611
      %v3613 = vrcp.pop %v3415
      %v3614 = vmul.f32 1.0, %v3613
      %v3615 = vrcp.pop %v3416
      %v3616 = vmul.f32 1.0, %v3615
      %v3617 = vrcp.pop %v3417
      %v3618 = vmul.f32 1.0, %v3617
      %v3619 = vrcp.pop %v3418
      %v3620 = vmul.f32 1.0, %v3619
      %v3621 = vrcp.pop %v3419
      %v3622 = vmul.f32 1.0, %v3621
      %v3623 = vrcp.pop %v3420
      %v3624 = vmul.f32 1.0, %v3623
      %v3625 = vrcp.pop %v3421
      %v3626 = vmul.f32 1.0, %v3625
      %v3627 = vrcp.pop %v3422
      %v3628 = vmul.f32 1.0, %v3627
      %v3629 = vrcp.pop %v3423
      %v3630 = vmul.f32 1.0, %v3629
      %v3631 = vrcp.pop %v3424
      %v3632 = vmul.f32 1.0, %v3631
      %v3633 = vrcp.pop %v3425
      %v3634 = vmul.f32 1.0, %v3633
      %v3635 = vrcp.pop %v3426
      %v3636 = vmul.f32 1.0, %v3635
      %v3637 = vrcp.pop %v3427
      %v3638 = vmul.f32 1.0, %v3637
      %v3639 = vrcp.pop %v3428
      %v3640 = vmul.f32 1.0, %v3639
      %v3641 = vrcp.pop %v3429
      %v3642 = vmul.f32 1.0, %v3641
      %v3643 = vrcp.pop %v3430
      %v3644 = vmul.f32 1.0, %v3643
      %v3645 = vrcp.pop %v3431
      %v3646 = vmul.f32 1.0, %v3645
      %v3647 = vrcp.pop %v3432
      %v3648 = vmul.f32 1.0, %v3647
      %v3649 = vrcp.pop %v3433
      %v3650 = vmul.f32 1.0, %v3649
      %v3651 = vrcp.pop %v3434
      %v3652 = vmul.f32 1.0, %v3651
      %v3653 = vrcp.pop %v3435
      %v3654 = vmul.f32 1.0, %v3653
      %v3655 = vrcp.pop %v3436
      %v3656 = vmul.f32 1.0, %v3655
      %v3657 = vrcp.pop %v3437
      %v3658 = vmul.f32 1.0, %v3657
      %v3659 = vrcp.pop %v3438
      %v3660 = vmul.f32 1.0, %v3659
      %v3661 = vrcp.pop %v3439
      %v3662 = vmul.f32 1.0, %v3661
      %v3663 = vrcp.pop %v3440
      %v3664 = vmul.f32 1.0, %v3663
      %3665 = vst [vmem:[%s447] sm:$0xff] %v3442
      %3666 = vst [vmem:[%s447 + $0x8] sm:$0xff] %v3444
      %3667 = vst [vmem:[%s447 + $0x10] sm:$0xff] %v3446
      %3668 = vst [vmem:[%s447 + $0x18] sm:$0xff] %v3448
      %3669 = vst [vmem:[%s447 + $0x20] sm:$0xff] %v3450
      %3670 = vst [vmem:[%s447 + $0x28] sm:$0xff] %v3452
      %3671 = vst.msk [vmem:[%s447 + $0x30] sm:$0xff] %vm1017, %v3454
      %3672 = vst [vmem:[%s447 + $0x38] sm:$0xff] %v3456
      %3673 = vst [vmem:[%s447 + $0x40] sm:$0xff] %v3458
      %3674 = vst [vmem:[%s447 + $0x48] sm:$0xff] %v3460
      %3675 = vst [vmem:[%s447 + $0x50] sm:$0xff] %v3462
      %3676 = vst [vmem:[%s447 + $0x58] sm:$0xff] %v3464
      %3677 = vst [vmem:[%s447 + $0x60] sm:$0xff] %v3466
      %3678 = vst.msk [vmem:[%s447 + $0x68] sm:$0xff] %vm1017, %v3468
      %3679 = vst [vmem:[%s447 + $0x70] sm:$0xff] %v3470
      %3680 = vst [vmem:[%s447 + $0x78] sm:$0xff] %v3472
      %3681 = vst [vmem:[%s447 + $0x80] sm:$0xff] %v3474
      %3682 = vst [vmem:[%s447 + $0x88] sm:$0xff] %v3476
      %3683 = vst [vmem:[%s447 + $0x90] sm:$0xff] %v3478
      %3684 = vst [vmem:[%s447 + $0x98] sm:$0xff] %v3480
      %3685 = vst.msk [vmem:[%s447 + $0xa0] sm:$0xff] %vm1017, %v3482
      %3686 = vst [vmem:[%s447 + $0xa8] sm:$0xff] %v3484
      %3687 = vst [vmem:[%s447 + $0xb0] sm:$0xff] %v3486
      %3688 = vst [vmem:[%s447 + $0xb8] sm:$0xff] %v3488
      %3689 = vst [vmem:[%s447 + $0xc0] sm:$0xff] %v3490
      %3690 = vst [vmem:[%s447 + $0xc8] sm:$0xff] %v3492
      %3691 = vst [vmem:[%s447 + $0xd0] sm:$0xff] %v3494
      %3692 = vst.msk [vmem:[%s447 + $0xd8] sm:$0xff] %vm1017, %v3496
      %3693 = vst [vmem:[%s447 + $0xe0] sm:$0xff] %v3498
      %3694 = vst [vmem:[%s447 + $0xe8] sm:$0xff] %v3500
      %3695 = vst [vmem:[%s447 + $0xf0] sm:$0xff] %v3502
      %3696 = vst [vmem:[%s447 + $0xf8] sm:$0xff] %v3504
      %3697 = vst [vmem:[%s447 + $0x100] sm:$0xff] %v3506
      %3698 = vst [vmem:[%s447 + $0x108] sm:$0xff] %v3508
      %3699 = vst.msk [vmem:[%s447 + $0x110] sm:$0xff] %vm1017, %v3510
      %3700 = vst [vmem:[%s447 + $0x118] sm:$0xff] %v3512
      %3701 = vst [vmem:[%s447 + $0x120] sm:$0xff] %v3514
      %3702 = vst [vmem:[%s447 + $0x128] sm:$0xff] %v3516
      %3703 = vst [vmem:[%s447 + $0x130] sm:$0xff] %v3518
      %3704 = vst [vmem:[%s447 + $0x138] sm:$0xff] %v3520
      %3705 = vst [vmem:[%s447 + $0x140] sm:$0xff] %v3522
      %3706 = vst.msk [vmem:[%s447 + $0x148] sm:$0xff] %vm1017, %v3524
      %3707 = vst [vmem:[%s447 + $0x150] sm:$0xff] %v3526
      %3708 = vst [vmem:[%s447 + $0x158] sm:$0xff] %v3528
      %3709 = vst [vmem:[%s447 + $0x160] sm:$0xff] %v3530
      %3710 = vst [vmem:[%s447 + $0x168] sm:$0xff] %v3532
      %3711 = vst [vmem:[%s447 + $0x170] sm:$0xff] %v3534
      %3712 = vst [vmem:[%s447 + $0x178] sm:$0xff] %v3536
      %3713 = vst.msk [vmem:[%s447 + $0x180] sm:$0xff] %vm1017, %v3538
      %3714 = vst [vmem:[%s447 + $0x188] sm:$0xff] %v3540
      %3715 = vst [vmem:[%s447 + $0x190] sm:$0xff] %v3542
      %3716 = vst [vmem:[%s447 + $0x198] sm:$0xff] %v3544
      %3717 = vst [vmem:[%s447 + $0x1a0] sm:$0xff] %v3546
      %3718 = vst [vmem:[%s447 + $0x1a8] sm:$0xff] %v3548
      %3719 = vst [vmem:[%s447 + $0x1b0] sm:$0xff] %v3550
      %3720 = vst.msk [vmem:[%s447 + $0x1b8] sm:$0xff] %vm1017, %v3552
      %3721 = vst [vmem:[%s447 + $0x1c0] sm:$0xff] %v3554
      %3722 = vst [vmem:[%s447 + $0x1c8] sm:$0xff] %v3556
      %3723 = vst [vmem:[%s447 + $0x1d0] sm:$0xff] %v3558
      %3724 = vst [vmem:[%s447 + $0x1d8] sm:$0xff] %v3560
      %3725 = vst [vmem:[%s447 + $0x1e0] sm:$0xff] %v3562
      %3726 = vst [vmem:[%s447 + $0x1e8] sm:$0xff] %v3564
      %3727 = vst.msk [vmem:[%s447 + $0x1f0] sm:$0xff] %vm1017, %v3566
      %3728 = vst [vmem:[%s447 + $0x1f8] sm:$0xff] %v3568
      %3729 = vst [vmem:[%s447 + $0x200] sm:$0xff] %v3570
      %3730 = vst [vmem:[%s447 + $0x208] sm:$0xff] %v3572
      %3731 = vst [vmem:[%s447 + $0x210] sm:$0xff] %v3574
      %3732 = vst [vmem:[%s447 + $0x218] sm:$0xff] %v3576
      %3733 = vst [vmem:[%s447 + $0x220] sm:$0xff] %v3578
      %3734 = vst.msk [vmem:[%s447 + $0x228] sm:$0xff] %vm1017, %v3580
      %3735 = vst [vmem:[%s447 + $0x230] sm:$0xff] %v3582
      %3736 = vst [vmem:[%s447 + $0x238] sm:$0xff] %v3584
      %3737 = vst [vmem:[%s447 + $0x240] sm:$0xff] %v3586
      %3738 = vst [vmem:[%s447 + $0x248] sm:$0xff] %v3588
      %3739 = vst [vmem:[%s447 + $0x250] sm:$0xff] %v3590
      %3740 = vst [vmem:[%s447 + $0x258] sm:$0xff] %v3592
      %3741 = vst.msk [vmem:[%s447 + $0x260] sm:$0xff] %vm1017, %v3594
      %3742 = vst [vmem:[%s447 + $0x268] sm:$0xff] %v3596
      %3743 = vst [vmem:[%s447 + $0x270] sm:$0xff] %v3598
      %3744 = vst [vmem:[%s447 + $0x278] sm:$0xff] %v3600
      %3745 = vst [vmem:[%s447 + $0x280] sm:$0xff] %v3602
      %3746 = vst [vmem:[%s447 + $0x288] sm:$0xff] %v3604
      %3747 = vst [vmem:[%s447 + $0x290] sm:$0xff] %v3606
      %3748 = vst.msk [vmem:[%s447 + $0x298] sm:$0xff] %vm1017, %v3608
      %3749 = vst [vmem:[%s447 + $0x2a0] sm:$0xff] %v3610
      %3750 = vst [vmem:[%s447 + $0x2a8] sm:$0xff] %v3612
      %3751 = vst [vmem:[%s447 + $0x2b0] sm:$0xff] %v3614
      %3752 = vst [vmem:[%s447 + $0x2b8] sm:$0xff] %v3616
      %3753 = vst [vmem:[%s447 + $0x2c0] sm:$0xff] %v3618
      %3754 = vst [vmem:[%s447 + $0x2c8] sm:$0xff] %v3620
      %3755 = vst.msk [vmem:[%s447 + $0x2d0] sm:$0xff] %vm1017, %v3622
      %3756 = vst [vmem:[%s447 + $0x2d8] sm:$0xff] %v3624
      %3757 = vst [vmem:[%s447 + $0x2e0] sm:$0xff] %v3626
      %3758 = vst [vmem:[%s447 + $0x2e8] sm:$0xff] %v3628
      %3759 = vst [vmem:[%s447 + $0x2f0] sm:$0xff] %v3630
      %3760 = vst [vmem:[%s447 + $0x2f8] sm:$0xff] %v3632
      %3761 = vst [vmem:[%s447 + $0x300] sm:$0xff] %v3634
      %3762 = vst.msk [vmem:[%s447 + $0x308] sm:$0xff] %vm1017, %v3636
      %3763 = vst [vmem:[%s447 + $0x310] sm:$0xff] %v3638
      %3764 = vst [vmem:[%s447 + $0x318] sm:$0xff] %v3640
      %3765 = vst [vmem:[%s447 + $0x320] sm:$0xff] %v3642
      %3766 = vst [vmem:[%s447 + $0x328] sm:$0xff] %v3644
      %3767 = vst [vmem:[%s447 + $0x330] sm:$0xff] %v3646
      %3768 = vst [vmem:[%s447 + $0x338] sm:$0xff] %v3648
      %3769 = vst.msk [vmem:[%s447 + $0x340] sm:$0xff] %vm1017, %v3650
      %3770 = vst [vmem:[%s447 + $0x348] sm:$0xff] %v3652
      %3771 = vst [vmem:[%s447 + $0x350] sm:$0xff] %v3654
      %3772 = vst [vmem:[%s447 + $0x358] sm:$0xff] %v3656
      %3773 = vst [vmem:[%s447 + $0x360] sm:$0xff] %v3658
      %3774 = vst [vmem:[%s447 + $0x368] sm:$0xff] %v3660
      %3775 = vst [vmem:[%s447 + $0x370] sm:$0xff] %v3662
      %3776 = vst.msk [vmem:[%s447 + $0x378] sm:$0xff] %vm1017, %v3664
      %s3777 = smul.u32 16, %s24
      %p3778 = scmp.lt.s32.totalorder %s3777, 31
      %s3779 = scalar_select %p3778, %s3777, 31
      %s3780 = smul.addr %s3779, 7
      %s3781 = smul.addr %s3780, 8
      %s3782 = scalar_lea.vmem %s13, %s3781
      // Predicated region
      $region73: #{autoencoder_forward.1} parent=71 // pred_check
        %p3783 = pneg %p320
      $region74: #{autoencoder_forward.1} parent=71 // pred_check_branch
        %3785 = sbr.rel (%p3783) target = $region76
      $region75: #{autoencoder_forward.1} parent=71 // pred_region
        %s3786 = smul.u32 16, %s24
      $region76: #{autoencoder_forward.1} parent=71 // pred_fallthru
        _
    $region72: #{autoencoder_forward.1} parent=5 // pred_fallthru
      _
    %p3787 = scmp.le.s32.totalorder 2, %s19
    // Predicated region
    $region77: #{autoencoder_forward.1} parent=5 // pred_check
      %p3788 = pneg %p3787
    $region78: #{autoencoder_forward.1} parent=5 // pred_check_branch
      %3790 = sbr.rel (%p3788) target = $region80
    $region79: #{autoencoder_forward.1} parent=5 // pred_region
      %s3791 = ssub.s32 %s19, 2
      // Predicated region
      $region81: #{autoencoder_forward.1} parent=79 // pred_check
        %p3792 = pneg %p326
      $region82: #{autoencoder_forward.1} parent=79 // pred_check_branch
        %3794 = sbr.rel (%p3792) target = $region84
      $region83: #{autoencoder_forward.1} parent=79 // pred_region
        %s3795 = smul.u32 16, %s25
        %p3796 = scmp.lt.s32.totalorder %s3795, 31
        %s3797 = scalar_select %p3796, %s3795, 31
        %s3798 = smul.addr %s3797, 7
        %s3799 = smul.addr %s3798, 8
        %s3800 = scalar_lea.vmem %s13, %s3799
      $region84: #{autoencoder_forward.1} parent=79 // pred_fallthru
        _
    $region80: #{autoencoder_forward.1} parent=5 // pred_fallthru
      _
  $region6: #{autoencoder_forward.1} parent=0 // loop_footer
    %s23 = sadd.s32 1, %s19
  $region7: #{autoencoder_forward.1} parent=0 // loop_footer_branch
    %18 = sbr.rel target = $region3
  $region8: #{autoencoder_forward.1} parent=0 // loop_exit
    _

</llo_original>
